<compile_context>
chip_gen: v7x
topology: tpu7x:2x2x1
jax: 0.10.0
libtpu: 0.0.40
codegen_flags: <defaults>
</compile_context>

<pallas_src>
import functools

import jax
import jax.numpy as jnp
from jax.experimental import pallas as pl
from jax.experimental.pallas import tpu as pltpu


def _round_up(x, m):
    return (x + m - 1) // m * m


# ---------------------------------------------------------------------------
# Kernel
# ---------------------------------------------------------------------------

def _make_kernel(num_layers, hidden, seq_len, t_chunk, n_tchunks, b_block,
                 mxu_dtype, masked):
    """Fused LSTM stack + linear head for one (batch tile, time chunk) step.

    Ref layout (positional):
      refs[0]                    x     [t_chunk, b_block, D]
      refs[1+3l .. 3+3l]         layer l: w_ih [*, G], w_hh [H, G], b [1, G]
      refs[1+3L] / refs[2+3L]    w_out [H, Cp] / b_out [1, Cp]
      refs[3+3L]                 out   [b_block, Cp]   (written at last chunk)
      refs[4+3L ..]              scratch: gx [rows, G], (seq [rows, H] if L>1),
                                 h_state [L, b_block, H], c_state [L, b_block, H]
    """
    H = hidden
    rows = t_chunk * b_block
    unroll = True if t_chunk <= 16 else 8

    def kernel(*refs):
        x_ref = refs[0]
        w_out_ref = refs[1 + 3 * num_layers]
        b_out_ref = refs[2 + 3 * num_layers]
        o_ref = refs[3 + 3 * num_layers]
        scratch = refs[4 + 3 * num_layers:]
        if num_layers > 1:
            gx_ref, seq_ref, h_ref, c_ref = scratch
        else:
            gx_ref, h_ref, c_ref = scratch
            seq_ref = None

        tc = pl.program_id(1)

        # New batch tile starts (time-chunk index wraps to 0): reset state.
        @pl.when(tc == 0)
        def _():
            h_ref[...] = jnp.zeros_like(h_ref)
            c_ref[...] = jnp.zeros_like(c_ref)

        final_h = None
        for layer in range(num_layers):
            w_ih_ref = refs[1 + 3 * layer]
            w_hh_ref = refs[2 + 3 * layer]
            b_ref = refs[3 + 3 * layer]

            if layer == 0:
                src = x_ref[...].reshape(rows, x_ref.shape[-1])
            else:
                src = seq_ref[...]

            # Hoisted input projection for the whole chunk: one batched MXU
            # matmul with the combined bias folded in, so the serial per-step
            # loop only does h @ W_hh.
            gx_ref[...] = (
                jnp.dot(src, w_ih_ref[...], preferred_element_type=jnp.float32)
                + b_ref[...]).astype(gx_ref.dtype)

            def step(t, carry, w_hh_ref=w_hh_ref, layer=layer):
                h, c = carry
                row = pl.multiple_of(t * b_block, b_block)
                gates = (
                    gx_ref[pl.ds(row, b_block), :].astype(jnp.float32)
                    + jnp.dot(h.astype(mxu_dtype), w_hh_ref[...],
                              preferred_element_type=jnp.float32))
                # Gates packed contiguously at k*H lane offsets (PyTorch order
                # i, f, g, o); padded gate columns are never read.
                i_g = jax.nn.sigmoid(gates[:, 0 * H:1 * H])
                f_g = jax.nn.sigmoid(gates[:, 1 * H:2 * H])
                g_g = jnp.tanh(gates[:, 2 * H:3 * H])
                o_g = jax.nn.sigmoid(gates[:, 3 * H:4 * H])
                c_new = f_g * c + i_g * g_g
                h_new = o_g * jnp.tanh(c_new)
                if masked:
                    # Only compiled when the last time chunk is ragged.
                    valid = (tc * t_chunk + t) < seq_len
                    c_new = jnp.where(valid, c_new, c)
                    h_new = jnp.where(valid, h_new, h)
                if layer + 1 < num_layers:
                    seq_ref[pl.ds(row, b_block), :] = h_new.astype(seq_ref.dtype)
                return (h_new, c_new)

            h_f, c_f = jax.lax.fori_loop(
                0, t_chunk, step, (h_ref[layer], c_ref[layer]), unroll=unroll)
            h_ref[layer] = h_f       # cross-chunk carry (once per chunk/layer)
            c_ref[layer] = c_f
            final_h = h_f

        # Linear head on the last layer's hidden at the final valid timestep
        # (== out[:, -1, :] of the PyTorch module). Lane-dense [b_block, Cp]
        # store, written only once per batch tile.
        @pl.when(tc == n_tchunks - 1)
        def _():
            o_ref[...] = (
                jnp.dot(final_h.astype(mxu_dtype), w_out_ref[...],
                        preferred_element_type=jnp.float32)
                + b_out_ref[...])

    return kernel


# ---------------------------------------------------------------------------
# Wrappers
# ---------------------------------------------------------------------------

@functools.partial(
    jax.jit,
    static_argnames=("dims", "mxu_dtype_name", "t_chunk_cap", "b_block_cap"))
def _forward_impl(sentence, weights, *, dims, mxu_dtype_name,
                  t_chunk_cap=None, b_block_cap=None):
    num_layers, H, C, D, G, Cp = dims
    mxu_dtype = jnp.dtype(mxu_dtype_name)
    itemsize = mxu_dtype.itemsize
    B, T, D_in = sentence.shape
    assert D_in == D

    # Lane-padded widths (VMEM footprint accounting only; arrays keep natural
    # widths).
    Dl = _round_up(D, 128)
    Hl = _round_up(H, 128)

    # --- Batch tiling: feed the MXU up to 128 rows per step and expose a
    # 'parallel' grid axis (v7x megacore). ---
    b_block = min(b_block_cap if b_block_cap is not None else 128,
                  _round_up(B, 8))
    b_block = _round_up(b_block, 8)
    n_btiles = (B + b_block - 1) // b_block
    Bp = n_btiles * b_block

    # --- Time chunking: bound the streaming buffers (gx/seq/x) to ~8 MiB so
    # long sequences fit v5e's 16 MiB scoped default and v7x's 64 MiB VMEM,
    # while weights stay resident across chunks. ---
    bytes_per_step = b_block * (
        G * itemsize
        + (Hl * itemsize if num_layers > 1 else 0)
        + 2 * Dl * itemsize)
    t_chunk = max(1, min(T, (8 << 20) // max(1, bytes_per_step)))
    if t_chunk_cap is not None:
        t_chunk = max(1, min(t_chunk, t_chunk_cap))
    n_tchunks = (T + t_chunk - 1) // t_chunk
    Tp = n_tchunks * t_chunk
    masked = Tp != T
    rows = t_chunk * b_block

    # Time-major input, batch/time padded to the tile grid; feature dim stays
    # at its natural width (no 10x D-padding HBM traffic). Cast to the MXU
    # operand dtype here (halves input traffic in bf16 mode).
    x = jnp.transpose(sentence, (1, 0, 2)).astype(mxu_dtype)    # [T, B, D]
    x = jnp.pad(x, ((0, Tp - T), (0, Bp - B), (0, 0)))

    in_specs = [pl.BlockSpec((t_chunk, b_block, D), lambda b, t: (t, b, 0))]
    # Weights: full-extent blocks with constant index_maps -> DMA'd once and
    # kept resident (block index never changes).
    in_specs += [pl.BlockSpec(w.shape, lambda b, t: (0, 0)) for w in weights]
    out_spec = pl.BlockSpec((b_block, Cp), lambda b, t: (b, 0))

    scratch = [pltpu.VMEM((rows, G), mxu_dtype)]            # hoisted x@W_ih+b
    if num_layers > 1:
        scratch.append(pltpu.VMEM((rows, H), mxu_dtype))    # inter-layer h seq
    scratch += [pltpu.VMEM((num_layers, b_block, H), jnp.float32),  # h carry
                pltpu.VMEM((num_layers, b_block, H), jnp.float32)]  # c carry

    weight_bytes = sum(int(w.size) * w.dtype.itemsize for w in weights)
    footprint = (2 * (rows * Dl * itemsize + b_block * Cp * 4 + weight_bytes)
                 + rows * G * itemsize
                 + (rows * Hl * itemsize if num_layers > 1 else 0)
                 + 2 * num_layers * b_block * Hl * 4
                 + (2 << 20))
    vmem_limit = int(min(64 << 20, max(32 << 20, 2 * footprint)))

    out_padded = pl.pallas_call(
        _make_kernel(num_layers, H, T, t_chunk, n_tchunks, b_block,
                     mxu_dtype, masked),
        out_shape=jax.ShapeDtypeStruct((Bp, Cp), jnp.float32),
        grid=(n_btiles, n_tchunks),
        in_specs=in_specs,
        out_specs=out_spec,
        scratch_shapes=scratch,
        compiler_params=pltpu.CompilerParams(
            dimension_semantics=("parallel", "arbitrary"),
            vmem_limit_bytes=vmem_limit),
    )(x, *weights)

    return out_padded[:B, :C]


def ecg_lstm_forward(sentence, prepared, *, t_chunk_cap=None, b_block_cap=None):
    """Forward pass matching ECGLSTM.forward. sentence: [B, T, len_of_word]."""
    return _forward_impl(sentence, prepared["weights"],
                         dims=prepared["dims"],
                         mxu_dtype_name=prepared["mxu_dtype"],
                         t_chunk_cap=t_chunk_cap, b_block_cap=b_block_cap)


def prepare_params(params, len_of_word, hidden, num_classes,
                   mxu_dtype=jnp.float32):
    """One-time parameter prep: transpose, combine biases, pad to TPU shapes.

    Gate axis is packed to G = round_up(4*H, 128) with the four PyTorch gates
    (i, f, g, o) kept contiguous at k*H offsets; hidden/cell keep their
    natural width H. Matmul operands may be stored in bf16 (v6e/v7x MXU fast
    path); biases stay f32 and all gate math stays f32.
    """
    H = hidden
    G = _round_up(4 * H, 128)
    Cp = _round_up(num_classes, 128)
    mxu_dtype = jnp.dtype(mxu_dtype)

    def pack_gate_weight(w):
        w_t = jnp.asarray(w, jnp.float32).T                 # [in_dim, 4H]
        out = jnp.zeros((w_t.shape[0], G), jnp.float32).at[:, :4 * H].set(w_t)
        return out.astype(mxu_dtype)

    def pack_gate_bias(b_ih, b_hh):
        b = jnp.asarray(b_ih, jnp.float32) + jnp.asarray(b_hh, jnp.float32)
        return jnp.zeros((1, G), jnp.float32).at[0, :4 * H].set(b)

    weights = []
    for (w_ih, w_hh, b_ih, b_hh) in params["lstm"]:
        weights += [pack_gate_weight(w_ih), pack_gate_weight(w_hh),
                    pack_gate_bias(b_ih, b_hh)]

    w_out, b_out = params["linear"]
    w_out_p = (jnp.zeros((H, Cp), jnp.float32)
               .at[:, :num_classes].set(jnp.asarray(w_out, jnp.float32).T)
               .astype(mxu_dtype))
    b_out_p = (jnp.zeros((1, Cp), jnp.float32)
               .at[0, :num_classes].set(jnp.asarray(b_out, jnp.float32)))
    weights += [w_out_p, b_out_p]

    return {
        "weights": tuple(weights),
        "dims": (len(params["lstm"]), H, num_classes, len_of_word, G, Cp),
        "mxu_dtype": mxu_dtype.name,
    }


# ---------------------------------------------------------------------------
# Pure-JAX reference (same math) for correctness checks
# ---------------------------------------------------------------------------

def ecg_lstm_ref(sentence, params):
    x = jnp.transpose(sentence, (1, 0, 2)).astype(jnp.float32)   # [T, B, D]
    B = x.shape[1]
    for (w_ih, w_hh, b_ih, b_hh) in params["lstm"]:
        H = w_hh.shape[1]

        def step(carry, xt):
            h, c = carry
            gates = xt @ w_ih.T + b_ih + h @ w_hh.T + b_hh
            i, f, g, o = jnp.split(gates, 4, axis=-1)
            i = jax.nn.sigmoid(i)
            f = jax.nn.sigmoid(f)
            g = jnp.tanh(g)
            o = jax.nn.sigmoid(o)
            c = f * c + i * g
            h = o * jnp.tanh(c)
            return (h, c), h

        init = (jnp.zeros((B, H), jnp.float32), jnp.zeros((B, H), jnp.float32))
        _, x = jax.lax.scan(step, init, x)
    last = x[-1]
    w_out, b_out = params["linear"]
    return last @ w_out.T + b_out


# ---------------------------------------------------------------------------
# Deterministic parameter init (PyTorch default: U(-1/sqrt(H), 1/sqrt(H)))
# ---------------------------------------------------------------------------

def init_params(key, len_of_word, hidden, num_classes, num_layers):
    bound = 1.0 / jnp.sqrt(hidden)
    params = {"lstm": [], "linear": None}
    for layer in range(num_layers):
        d_in = len_of_word if layer == 0 else hidden
        key, k1, k2, k3, k4 = jax.random.split(key, 5)
        w_ih = jax.random.uniform(k1, (4 * hidden, d_in), jnp.float32, -bound, bound)
        w_hh = jax.random.uniform(k2, (4 * hidden, hidden), jnp.float32, -bound, bound)
        b_ih = jax.random.uniform(k3, (4 * hidden,), jnp.float32, -bound, bound)
        b_hh = jax.random.uniform(k4, (4 * hidden,), jnp.float32, -bound, bound)
        params["lstm"].append((w_ih, w_hh, b_ih, b_hh))
    key, k1, k2 = jax.random.split(key, 3)
    lb = 1.0 / jnp.sqrt(hidden)
    w_out = jax.random.uniform(k1, (num_classes, hidden), jnp.float32, -lb, lb)
    b_out = jax.random.uniform(k2, (num_classes,), jnp.float32, -lb, lb)
    params["linear"] = (w_out, b_out)
    return params


# ---------------------------------------------------------------------------

if __name__ == "__main__":
    # ECGLSTM(length_of_each_word=13, number_of_hidden_neurons=32,
    #         num_of_classes=5, num_of_layers=2)
    LEN_OF_WORD = 13
    HIDDEN = 32
    NUM_CLASSES = 5
    NUM_LAYERS = 2
    BATCH = 2
    SEQ = 8

    key = jax.random.PRNGKey(0)
    key, pkey, xkey = jax.random.split(key, 3)
    params = init_params(pkey, LEN_OF_WORD, HIDDEN, NUM_CLASSES, NUM_LAYERS)
    prepared_f32 = prepare_params(params, LEN_OF_WORD, HIDDEN, NUM_CLASSES)

    sentence = jax.random.normal(xkey, (BATCH, SEQ, LEN_OF_WORD), jnp.float32)
    y_ref = jax.block_until_ready(ecg_lstm_ref(sentence, params))

    # 1) Default path: single time chunk, single batch tile, f32 MXU operands.
    y1 = jax.block_until_ready(ecg_lstm_forward(sentence, prepared_f32))
    assert y1.shape == (BATCH, NUM_CLASSES)
    assert jnp.allclose(y1, y_ref, atol=1e-5, rtol=1e-5), (y1, y_ref)

    # 2) Exercise the streaming design at small shapes: ragged time chunks
    #    (T=8 in chunks of 3 -> masked last chunk) and two batch tiles.
    key, x2key = jax.random.split(key)
    sentence_big = jax.random.normal(x2key, (10, SEQ, LEN_OF_WORD), jnp.float32)
    y2 = jax.block_until_ready(
        ecg_lstm_forward(sentence_big, prepared_f32,
                         t_chunk_cap=3, b_block_cap=8))
    y2_ref = jax.block_until_ready(ecg_lstm_ref(sentence_big, params))
    assert y2.shape == (10, NUM_CLASSES)
    assert jnp.allclose(y2, y2_ref, atol=1e-5, rtol=1e-5), (y2, y2_ref)

    # 3) bf16 MXU-operand fast path (v6e/v7x); gate math stays f32, so only a
    #    modest tolerance loosening vs the f32 reference is needed.
    prepared_bf16 = prepare_params(params, LEN_OF_WORD, HIDDEN, NUM_CLASSES,
                                   mxu_dtype=jnp.bfloat16)
    y3 = jax.block_until_ready(ecg_lstm_forward(sentence, prepared_bf16))
    assert jnp.allclose(y3, y_ref, atol=5e-2, rtol=5e-2), (y3, y_ref)

    print("KERNEL_OK")
</pallas_src>

<mosaic_0001>
module attributes {stable_mosaic.version = 11 : i64} {
  func.func @kernel(%arg0: i32, %arg1: i32, %arg2: memref<8x8x13xf32, #tpu.memory_space<vmem>>, %arg3: memref<13x128xf32, #tpu.memory_space<vmem>>, %arg4: memref<32x128xf32, #tpu.memory_space<vmem>>, %arg5: memref<1x128xf32, #tpu.memory_space<vmem>>, %arg6: memref<32x128xf32, #tpu.memory_space<vmem>>, %arg7: memref<32x128xf32, #tpu.memory_space<vmem>>, %arg8: memref<1x128xf32, #tpu.memory_space<vmem>>, %arg9: memref<32x128xf32, #tpu.memory_space<vmem>>, %arg10: memref<1x128xf32, #tpu.memory_space<vmem>>, %arg11: memref<8x128xf32, #tpu.memory_space<vmem>>, %arg12: memref<64x128xf32, #tpu.memory_space<vmem>>, %arg13: memref<64x32xf32, #tpu.memory_space<vmem>>, %arg14: memref<2x8x32xf32, #tpu.memory_space<vmem>>, %arg15: memref<2x8x32xf32, #tpu.memory_space<vmem>>) attributes {dimension_semantics = [#tpu.dimension_semantics<parallel>, #tpu.dimension_semantics<arbitrary>], iteration_bounds = array<i64: 1, 1>, scalar_prefetch = 0 : i64, scratch_operands = 4 : i64, tpu.core_type = #tpu.core_type<tc>, window_params = [{transform_indices = @transform_0, window_bounds = array<i64: 8, 8, 13>}, {pipeline_mode = #tpu.pipeline_mode<synchronous>, transform_indices = @transform_1, window_bounds = array<i64: 13, 128>}, {pipeline_mode = #tpu.pipeline_mode<synchronous>, transform_indices = @transform_2, window_bounds = array<i64: 32, 128>}, {pipeline_mode = #tpu.pipeline_mode<synchronous>, transform_indices = @transform_3, window_bounds = array<i64: 1, 128>}, {pipeline_mode = #tpu.pipeline_mode<synchronous>, transform_indices = @transform_4, window_bounds = array<i64: 32, 128>}, {pipeline_mode = #tpu.pipeline_mode<synchronous>, transform_indices = @transform_5, window_bounds = array<i64: 32, 128>}, {pipeline_mode = #tpu.pipeline_mode<synchronous>, transform_indices = @transform_6, window_bounds = array<i64: 1, 128>}, {pipeline_mode = #tpu.pipeline_mode<synchronous>, transform_indices = @transform_7, window_bounds = array<i64: 32, 128>}, {pipeline_mode = #tpu.pipeline_mode<synchronous>, transform_indices = @transform_8, window_bounds = array<i64: 1, 128>}, {transform_indices = @transform_9, window_bounds = array<i64: 8, 128>}]} {
    %c0_i32 = arith.constant 0 : i32
    %0 = arith.cmpi eq, %arg1, %c0_i32 : i32
    %1 = arith.extui %0 : i1 to i32
    %c0_i32_0 = arith.constant 0 : i32
    %2 = arith.cmpi ne, %1, %c0_i32_0 : i32
    scf.if %2 {
      %cst_189 = arith.constant 0.000000e+00 : f32
      %569 = vector.broadcast %cst_189 : f32 to vector<2x8x32xf32>
      %c0_190 = arith.constant 0 : index
      %c0_191 = arith.constant 0 : index
      %c0_192 = arith.constant 0 : index
      %570 = vector.load %arg14[%c0_190, %c0_191, %c0_192] : memref<2x8x32xf32, #tpu.memory_space<vmem>>, vector<2x8x32xf32>
      tpu.vector_store %arg14[%c0_190, %c0_191, %c0_192], %569 {strides = array<i32>} : memref<2x8x32xf32, #tpu.memory_space<vmem>>, vector<2x8x32xf32>,
      %cst_193 = arith.constant 0.000000e+00 : f32
      %571 = vector.broadcast %cst_193 : f32 to vector<2x8x32xf32>
      %c0_194 = arith.constant 0 : index
      %c0_195 = arith.constant 0 : index
      %c0_196 = arith.constant 0 : index
      %572 = vector.load %arg15[%c0_194, %c0_195, %c0_196] : memref<2x8x32xf32, #tpu.memory_space<vmem>>, vector<2x8x32xf32>
      tpu.vector_store %arg15[%c0_194, %c0_195, %c0_196], %571 {strides = array<i32>} : memref<2x8x32xf32, #tpu.memory_space<vmem>>, vector<2x8x32xf32>,
    } else {
    }
    %c0 = arith.constant 0 : index
    %c0_1 = arith.constant 0 : index
    %c0_2 = arith.constant 0 : index
    %3 = vector.load %arg2[%c0, %c0_1, %c0_2] : memref<8x8x13xf32, #tpu.memory_space<vmem>>, vector<8x8x13xf32>
    %4 = vector.shape_cast %3 : vector<8x8x13xf32> to vector<64x13xf32>
    %c0_3 = arith.constant 0 : index
    %c0_4 = arith.constant 0 : index
    %5 = vector.load %arg3[%c0_3, %c0_4] : memref<13x128xf32, #tpu.memory_space<vmem>>, vector<13x128xf32>
    %cst = arith.constant dense<0.000000e+00> : vector<64x128xf32>
    %6 = tpu.matmul %4, %5, %cst {dimension_numbers = #tpu.dot_dimension_numbers<[1], [0], [0], [1], [0, 0, 1, 1], [], []>} : vector<64x13xf32>, vector<13x128xf32>, vector<64x128xf32> -> vector<64x128xf32>
    %c0_5 = arith.constant 0 : index
    %c0_6 = arith.constant 0 : index
    %7 = vector.load %arg5[%c0_5, %c0_6] : memref<1x128xf32, #tpu.memory_space<vmem>>, vector<1x128xf32>
    %8 = vector.broadcast %7 : vector<1x128xf32> to vector<64x128xf32>
    %9 = arith.addf %6, %8 : vector<64x128xf32>
    %c0_7 = arith.constant 0 : index
    %c0_8 = arith.constant 0 : index
    %10 = vector.load %arg12[%c0_7, %c0_8] : memref<64x128xf32, #tpu.memory_space<vmem>>, vector<64x128xf32>
    tpu.vector_store %arg12[%c0_7, %c0_8], %9 {strides = array<i32>} : memref<64x128xf32, #tpu.memory_space<vmem>>, vector<64x128xf32>,
    %c0_9 = arith.constant 0 : index
    %c0_10 = arith.constant 0 : index
    %c0_11 = arith.constant 0 : index
    %11 = vector.load %arg14[%c0_9, %c0_10, %c0_11] : memref<2x8x32xf32, #tpu.memory_space<vmem>>, vector<1x8x32xf32>
    %12 = vector.shape_cast %11 : vector<1x8x32xf32> to vector<8x32xf32>
    %c0_12 = arith.constant 0 : index
    %c0_13 = arith.constant 0 : index
    %c0_14 = arith.constant 0 : index
    %13 = vector.load %arg15[%c0_12, %c0_13, %c0_14] : memref<2x8x32xf32, #tpu.memory_space<vmem>>, vector<1x8x32xf32>
    %14 = vector.shape_cast %13 : vector<1x8x32xf32> to vector<8x32xf32>
    %c0_i32_15 = arith.constant 0 : i32
    %c8_i32 = arith.constant 8 : i32
    %15 = arith.muli %c0_i32_15, %c8_i32 : i32
    %16 = tpu.assume_multiple %15, 8 : i32
    %17 = arith.index_cast %16 : i32 to index
    %c0_16 = arith.constant 0 : index
    %18 = vector.load %arg12[%17, %c0_16] : memref<64x128xf32, #tpu.memory_space<vmem>>, vector<8x128xf32>
    %c0_17 = arith.constant 0 : index
    %c0_18 = arith.constant 0 : index
    %19 = vector.load %arg4[%c0_17, %c0_18] : memref<32x128xf32, #tpu.memory_space<vmem>>, vector<32x128xf32>
    %cst_19 = arith.constant dense<0.000000e+00> : vector<8x128xf32>
    %20 = tpu.matmul %12, %19, %cst_19 {dimension_numbers = #tpu.dot_dimension_numbers<[1], [0], [0], [1], [0, 0, 1, 1], [], []>} : vector<8x32xf32>, vector<32x128xf32>, vector<8x128xf32> -> vector<8x128xf32>
    %21 = arith.addf %18, %20 : vector<8x128xf32>
    %22 = vector.extract_strided_slice %21 {offsets = [0, 0], sizes = [8, 32], strides = [1, 1]} : vector<8x128xf32> to vector<8x32xf32>
    %23 = arith.negf %22 : vector<8x32xf32>
    %24 = math.exp %23 : vector<8x32xf32>
    %cst_20 = arith.constant 1.000000e+00 : f32
    %25 = vector.broadcast %cst_20 : f32 to vector<8x32xf32>
    %26 = arith.addf %25, %24 : vector<8x32xf32>
    %27 = arith.divf %25, %26 : vector<8x32xf32>
    %28 = vector.extract_strided_slice %21 {offsets = [0, 32], sizes = [8, 32], strides = [1, 1]} : vector<8x128xf32> to vector<8x32xf32>
    %29 = arith.negf %28 : vector<8x32xf32>
    %30 = math.exp %29 : vector<8x32xf32>
    %cst_21 = arith.constant 1.000000e+00 : f32
    %31 = vector.broadcast %cst_21 : f32 to vector<8x32xf32>
    %32 = arith.addf %31, %30 : vector<8x32xf32>
    %33 = arith.divf %31, %32 : vector<8x32xf32>
    %34 = vector.extract_strided_slice %21 {offsets = [0, 64], sizes = [8, 32], strides = [1, 1]} : vector<8x128xf32> to vector<8x32xf32>
    %35 = math.tanh %34 : vector<8x32xf32>
    %36 = vector.extract_strided_slice %21 {offsets = [0, 96], sizes = [8, 32], strides = [1, 1]} : vector<8x128xf32> to vector<8x32xf32>
    %37 = arith.negf %36 : vector<8x32xf32>
    %38 = math.exp %37 : vector<8x32xf32>
    %cst_22 = arith.constant 1.000000e+00 : f32
    %39 = vector.broadcast %cst_22 : f32 to vector<8x32xf32>
    %40 = arith.addf %39, %38 : vector<8x32xf32>
    %41 = arith.divf %39, %40 : vector<8x32xf32>
    %42 = arith.mulf %33, %14 : vector<8x32xf32>
    %43 = arith.mulf %27, %35 : vector<8x32xf32>
    %44 = arith.addf %42, %43 : vector<8x32xf32>
    %45 = math.tanh %44 : vector<8x32xf32>
    %46 = arith.mulf %41, %45 : vector<8x32xf32>
    %47 = arith.index_cast %16 : i32 to index
    %c0_23 = arith.constant 0 : index
    %48 = vector.load %arg13[%47, %c0_23] : memref<64x32xf32, #tpu.memory_space<vmem>>, vector<8x32xf32>
    tpu.vector_store %arg13[%47, %c0_23], %46 {strides = array<i32>} : memref<64x32xf32, #tpu.memory_space<vmem>>, vector<8x32xf32>,
    %c1_i32 = arith.constant 1 : i32
    %c8_i32_24 = arith.constant 8 : i32
    %49 = arith.muli %c1_i32, %c8_i32_24 : i32
    %50 = tpu.assume_multiple %49, 8 : i32
    %51 = arith.index_cast %50 : i32 to index
    %c0_25 = arith.constant 0 : index
    %52 = vector.load %arg12[%51, %c0_25] : memref<64x128xf32, #tpu.memory_space<vmem>>, vector<8x128xf32>
    %c0_26 = arith.constant 0 : index
    %c0_27 = arith.constant 0 : index
    %53 = vector.load %arg4[%c0_26, %c0_27] : memref<32x128xf32, #tpu.memory_space<vmem>>, vector<32x128xf32>
    %cst_28 = arith.constant dense<0.000000e+00> : vector<8x128xf32>
    %54 = tpu.matmul %46, %53, %cst_28 {dimension_numbers = #tpu.dot_dimension_numbers<[1], [0], [0], [1], [0, 0, 1, 1], [], []>} : vector<8x32xf32>, vector<32x128xf32>, vector<8x128xf32> -> vector<8x128xf32>
    %55 = arith.addf %52, %54 : vector<8x128xf32>
    %56 = vector.extract_strided_slice %55 {offsets = [0, 0], sizes = [8, 32], strides = [1, 1]} : vector<8x128xf32> to vector<8x32xf32>
    %57 = arith.negf %56 : vector<8x32xf32>
    %58 = math.exp %57 : vector<8x32xf32>
    %cst_29 = arith.constant 1.000000e+00 : f32
    %59 = vector.broadcast %cst_29 : f32 to vector<8x32xf32>
    %60 = arith.addf %59, %58 : vector<8x32xf32>
    %61 = arith.divf %59, %60 : vector<8x32xf32>
    %62 = vector.extract_strided_slice %55 {offsets = [0, 32], sizes = [8, 32], strides = [1, 1]} : vector<8x128xf32> to vector<8x32xf32>
    %63 = arith.negf %62 : vector<8x32xf32>
    %64 = math.exp %63 : vector<8x32xf32>
    %cst_30 = arith.constant 1.000000e+00 : f32
    %65 = vector.broadcast %cst_30 : f32 to vector<8x32xf32>
    %66 = arith.addf %65, %64 : vector<8x32xf32>
    %67 = arith.divf %65, %66 : vector<8x32xf32>
    %68 = vector.extract_strided_slice %55 {offsets = [0, 64], sizes = [8, 32], strides = [1, 1]} : vector<8x128xf32> to vector<8x32xf32>
    %69 = math.tanh %68 : vector<8x32xf32>
    %70 = vector.extract_strided_slice %55 {offsets = [0, 96], sizes = [8, 32], strides = [1, 1]} : vector<8x128xf32> to vector<8x32xf32>
    %71 = arith.negf %70 : vector<8x32xf32>
    %72 = math.exp %71 : vector<8x32xf32>
    %cst_31 = arith.constant 1.000000e+00 : f32
    %73 = vector.broadcast %cst_31 : f32 to vector<8x32xf32>
    %74 = arith.addf %73, %72 : vector<8x32xf32>
    %75 = arith.divf %73, %74 : vector<8x32xf32>
    %76 = arith.mulf %67, %44 : vector<8x32xf32>
    %77 = arith.mulf %61, %69 : vector<8x32xf32>
    %78 = arith.addf %76, %77 : vector<8x32xf32>
    %79 = math.tanh %78 : vector<8x32xf32>
    %80 = arith.mulf %75, %79 : vector<8x32xf32>
    %81 = arith.index_cast %50 : i32 to index
    %c0_32 = arith.constant 0 : index
    %82 = vector.load %arg13[%81, %c0_32] : memref<64x32xf32, #tpu.memory_space<vmem>>, vector<8x32xf32>
    tpu.vector_store %arg13[%81, %c0_32], %80 {strides = array<i32>} : memref<64x32xf32, #tpu.memory_space<vmem>>, vector<8x32xf32>,
    %c2_i32 = arith.constant 2 : i32
    %c8_i32_33 = arith.constant 8 : i32
    %83 = arith.muli %c2_i32, %c8_i32_33 : i32
    %84 = tpu.assume_multiple %83, 8 : i32
    %85 = arith.index_cast %84 : i32 to index
    %c0_34 = arith.constant 0 : index
    %86 = vector.load %arg12[%85, %c0_34] : memref<64x128xf32, #tpu.memory_space<vmem>>, vector<8x128xf32>
    %c0_35 = arith.constant 0 : index
    %c0_36 = arith.constant 0 : index
    %87 = vector.load %arg4[%c0_35, %c0_36] : memref<32x128xf32, #tpu.memory_space<vmem>>, vector<32x128xf32>
    %cst_37 = arith.constant dense<0.000000e+00> : vector<8x128xf32>
    %88 = tpu.matmul %80, %87, %cst_37 {dimension_numbers = #tpu.dot_dimension_numbers<[1], [0], [0], [1], [0, 0, 1, 1], [], []>} : vector<8x32xf32>, vector<32x128xf32>, vector<8x128xf32> -> vector<8x128xf32>
    %89 = arith.addf %86, %88 : vector<8x128xf32>
    %90 = vector.extract_strided_slice %89 {offsets = [0, 0], sizes = [8, 32], strides = [1, 1]} : vector<8x128xf32> to vector<8x32xf32>
    %91 = arith.negf %90 : vector<8x32xf32>
    %92 = math.exp %91 : vector<8x32xf32>
    %cst_38 = arith.constant 1.000000e+00 : f32
    %93 = vector.broadcast %cst_38 : f32 to vector<8x32xf32>
    %94 = arith.addf %93, %92 : vector<8x32xf32>
    %95 = arith.divf %93, %94 : vector<8x32xf32>
    %96 = vector.extract_strided_slice %89 {offsets = [0, 32], sizes = [8, 32], strides = [1, 1]} : vector<8x128xf32> to vector<8x32xf32>
    %97 = arith.negf %96 : vector<8x32xf32>
    %98 = math.exp %97 : vector<8x32xf32>
    %cst_39 = arith.constant 1.000000e+00 : f32
    %99 = vector.broadcast %cst_39 : f32 to vector<8x32xf32>
    %100 = arith.addf %99, %98 : vector<8x32xf32>
    %101 = arith.divf %99, %100 : vector<8x32xf32>
    %102 = vector.extract_strided_slice %89 {offsets = [0, 64], sizes = [8, 32], strides = [1, 1]} : vector<8x128xf32> to vector<8x32xf32>
    %103 = math.tanh %102 : vector<8x32xf32>
    %104 = vector.extract_strided_slice %89 {offsets = [0, 96], sizes = [8, 32], strides = [1, 1]} : vector<8x128xf32> to vector<8x32xf32>
    %105 = arith.negf %104 : vector<8x32xf32>
    %106 = math.exp %105 : vector<8x32xf32>
    %cst_40 = arith.constant 1.000000e+00 : f32
    %107 = vector.broadcast %cst_40 : f32 to vector<8x32xf32>
    %108 = arith.addf %107, %106 : vector<8x32xf32>
    %109 = arith.divf %107, %108 : vector<8x32xf32>
    %110 = arith.mulf %101, %78 : vector<8x32xf32>
    %111 = arith.mulf %95, %103 : vector<8x32xf32>
    %112 = arith.addf %110, %111 : vector<8x32xf32>
    %113 = math.tanh %112 : vector<8x32xf32>
    %114 = arith.mulf %109, %113 : vector<8x32xf32>
    %115 = arith.index_cast %84 : i32 to index
    %c0_41 = arith.constant 0 : index
    %116 = vector.load %arg13[%115, %c0_41] : memref<64x32xf32, #tpu.memory_space<vmem>>, vector<8x32xf32>
    tpu.vector_store %arg13[%115, %c0_41], %114 {strides = array<i32>} : memref<64x32xf32, #tpu.memory_space<vmem>>, vector<8x32xf32>,
    %c3_i32 = arith.constant 3 : i32
    %c8_i32_42 = arith.constant 8 : i32
    %117 = arith.muli %c3_i32, %c8_i32_42 : i32
    %118 = tpu.assume_multiple %117, 8 : i32
    %119 = arith.index_cast %118 : i32 to index
    %c0_43 = arith.constant 0 : index
    %120 = vector.load %arg12[%119, %c0_43] : memref<64x128xf32, #tpu.memory_space<vmem>>, vector<8x128xf32>
    %c0_44 = arith.constant 0 : index
    %c0_45 = arith.constant 0 : index
    %121 = vector.load %arg4[%c0_44, %c0_45] : memref<32x128xf32, #tpu.memory_space<vmem>>, vector<32x128xf32>
    %cst_46 = arith.constant dense<0.000000e+00> : vector<8x128xf32>
    %122 = tpu.matmul %114, %121, %cst_46 {dimension_numbers = #tpu.dot_dimension_numbers<[1], [0], [0], [1], [0, 0, 1, 1], [], []>} : vector<8x32xf32>, vector<32x128xf32>, vector<8x128xf32> -> vector<8x128xf32>
    %123 = arith.addf %120, %122 : vector<8x128xf32>
    %124 = vector.extract_strided_slice %123 {offsets = [0, 0], sizes = [8, 32], strides = [1, 1]} : vector<8x128xf32> to vector<8x32xf32>
    %125 = arith.negf %124 : vector<8x32xf32>
    %126 = math.exp %125 : vector<8x32xf32>
    %cst_47 = arith.constant 1.000000e+00 : f32
    %127 = vector.broadcast %cst_47 : f32 to vector<8x32xf32>
    %128 = arith.addf %127, %126 : vector<8x32xf32>
    %129 = arith.divf %127, %128 : vector<8x32xf32>
    %130 = vector.extract_strided_slice %123 {offsets = [0, 32], sizes = [8, 32], strides = [1, 1]} : vector<8x128xf32> to vector<8x32xf32>
    %131 = arith.negf %130 : vector<8x32xf32>
    %132 = math.exp %131 : vector<8x32xf32>
    %cst_48 = arith.constant 1.000000e+00 : f32
    %133 = vector.broadcast %cst_48 : f32 to vector<8x32xf32>
    %134 = arith.addf %133, %132 : vector<8x32xf32>
    %135 = arith.divf %133, %134 : vector<8x32xf32>
    %136 = vector.extract_strided_slice %123 {offsets = [0, 64], sizes = [8, 32], strides = [1, 1]} : vector<8x128xf32> to vector<8x32xf32>
    %137 = math.tanh %136 : vector<8x32xf32>
    %138 = vector.extract_strided_slice %123 {offsets = [0, 96], sizes = [8, 32], strides = [1, 1]} : vector<8x128xf32> to vector<8x32xf32>
    %139 = arith.negf %138 : vector<8x32xf32>
    %140 = math.exp %139 : vector<8x32xf32>
    %cst_49 = arith.constant 1.000000e+00 : f32
    %141 = vector.broadcast %cst_49 : f32 to vector<8x32xf32>
    %142 = arith.addf %141, %140 : vector<8x32xf32>
    %143 = arith.divf %141, %142 : vector<8x32xf32>
    %144 = arith.mulf %135, %112 : vector<8x32xf32>
    %145 = arith.mulf %129, %137 : vector<8x32xf32>
    %146 = arith.addf %144, %145 : vector<8x32xf32>
    %147 = math.tanh %146 : vector<8x32xf32>
    %148 = arith.mulf %143, %147 : vector<8x32xf32>
    %149 = arith.index_cast %118 : i32 to index
    %c0_50 = arith.constant 0 : index
    %150 = vector.load %arg13[%149, %c0_50] : memref<64x32xf32, #tpu.memory_space<vmem>>, vector<8x32xf32>
    tpu.vector_store %arg13[%149, %c0_50], %148 {strides = array<i32>} : memref<64x32xf32, #tpu.memory_space<vmem>>, vector<8x32xf32>,
    %c4_i32 = arith.constant 4 : i32
    %c8_i32_51 = arith.constant 8 : i32
    %151 = arith.muli %c4_i32, %c8_i32_51 : i32
    %152 = tpu.assume_multiple %151, 8 : i32
    %153 = arith.index_cast %152 : i32 to index
    %c0_52 = arith.constant 0 : index
    %154 = vector.load %arg12[%153, %c0_52] : memref<64x128xf32, #tpu.memory_space<vmem>>, vector<8x128xf32>
    %c0_53 = arith.constant 0 : index
    %c0_54 = arith.constant 0 : index
    %155 = vector.load %arg4[%c0_53, %c0_54] : memref<32x128xf32, #tpu.memory_space<vmem>>, vector<32x128xf32>
    %cst_55 = arith.constant dense<0.000000e+00> : vector<8x128xf32>
    %156 = tpu.matmul %148, %155, %cst_55 {dimension_numbers = #tpu.dot_dimension_numbers<[1], [0], [0], [1], [0, 0, 1, 1], [], []>} : vector<8x32xf32>, vector<32x128xf32>, vector<8x128xf32> -> vector<8x128xf32>
    %157 = arith.addf %154, %156 : vector<8x128xf32>
    %158 = vector.extract_strided_slice %157 {offsets = [0, 0], sizes = [8, 32], strides = [1, 1]} : vector<8x128xf32> to vector<8x32xf32>
    %159 = arith.negf %158 : vector<8x32xf32>
    %160 = math.exp %159 : vector<8x32xf32>
    %cst_56 = arith.constant 1.000000e+00 : f32
    %161 = vector.broadcast %cst_56 : f32 to vector<8x32xf32>
    %162 = arith.addf %161, %160 : vector<8x32xf32>
    %163 = arith.divf %161, %162 : vector<8x32xf32>
    %164 = vector.extract_strided_slice %157 {offsets = [0, 32], sizes = [8, 32], strides = [1, 1]} : vector<8x128xf32> to vector<8x32xf32>
    %165 = arith.negf %164 : vector<8x32xf32>
    %166 = math.exp %165 : vector<8x32xf32>
    %cst_57 = arith.constant 1.000000e+00 : f32
    %167 = vector.broadcast %cst_57 : f32 to vector<8x32xf32>
    %168 = arith.addf %167, %166 : vector<8x32xf32>
    %169 = arith.divf %167, %168 : vector<8x32xf32>
    %170 = vector.extract_strided_slice %157 {offsets = [0, 64], sizes = [8, 32], strides = [1, 1]} : vector<8x128xf32> to vector<8x32xf32>
    %171 = math.tanh %170 : vector<8x32xf32>
    %172 = vector.extract_strided_slice %157 {offsets = [0, 96], sizes = [8, 32], strides = [1, 1]} : vector<8x128xf32> to vector<8x32xf32>
    %173 = arith.negf %172 : vector<8x32xf32>
    %174 = math.exp %173 : vector<8x32xf32>
    %cst_58 = arith.constant 1.000000e+00 : f32
    %175 = vector.broadcast %cst_58 : f32 to vector<8x32xf32>
    %176 = arith.addf %175, %174 : vector<8x32xf32>
    %177 = arith.divf %175, %176 : vector<8x32xf32>
    %178 = arith.mulf %169, %146 : vector<8x32xf32>
    %179 = arith.mulf %163, %171 : vector<8x32xf32>
    %180 = arith.addf %178, %179 : vector<8x32xf32>
    %181 = math.tanh %180 : vector<8x32xf32>
    %182 = arith.mulf %177, %181 : vector<8x32xf32>
    %183 = arith.index_cast %152 : i32 to index
    %c0_59 = arith.constant 0 : index
    %184 = vector.load %arg13[%183, %c0_59] : memref<64x32xf32, #tpu.memory_space<vmem>>, vector<8x32xf32>
    tpu.vector_store %arg13[%183, %c0_59], %182 {strides = array<i32>} : memref<64x32xf32, #tpu.memory_space<vmem>>, vector<8x32xf32>,
    %c5_i32 = arith.constant 5 : i32
    %c8_i32_60 = arith.constant 8 : i32
    %185 = arith.muli %c5_i32, %c8_i32_60 : i32
    %186 = tpu.assume_multiple %185, 8 : i32
    %187 = arith.index_cast %186 : i32 to index
    %c0_61 = arith.constant 0 : index
    %188 = vector.load %arg12[%187, %c0_61] : memref<64x128xf32, #tpu.memory_space<vmem>>, vector<8x128xf32>
    %c0_62 = arith.constant 0 : index
    %c0_63 = arith.constant 0 : index
    %189 = vector.load %arg4[%c0_62, %c0_63] : memref<32x128xf32, #tpu.memory_space<vmem>>, vector<32x128xf32>
    %cst_64 = arith.constant dense<0.000000e+00> : vector<8x128xf32>
    %190 = tpu.matmul %182, %189, %cst_64 {dimension_numbers = #tpu.dot_dimension_numbers<[1], [0], [0], [1], [0, 0, 1, 1], [], []>} : vector<8x32xf32>, vector<32x128xf32>, vector<8x128xf32> -> vector<8x128xf32>
    %191 = arith.addf %188, %190 : vector<8x128xf32>
    %192 = vector.extract_strided_slice %191 {offsets = [0, 0], sizes = [8, 32], strides = [1, 1]} : vector<8x128xf32> to vector<8x32xf32>
    %193 = arith.negf %192 : vector<8x32xf32>
    %194 = math.exp %193 : vector<8x32xf32>
    %cst_65 = arith.constant 1.000000e+00 : f32
    %195 = vector.broadcast %cst_65 : f32 to vector<8x32xf32>
    %196 = arith.addf %195, %194 : vector<8x32xf32>
    %197 = arith.divf %195, %196 : vector<8x32xf32>
    %198 = vector.extract_strided_slice %191 {offsets = [0, 32], sizes = [8, 32], strides = [1, 1]} : vector<8x128xf32> to vector<8x32xf32>
    %199 = arith.negf %198 : vector<8x32xf32>
    %200 = math.exp %199 : vector<8x32xf32>
    %cst_66 = arith.constant 1.000000e+00 : f32
    %201 = vector.broadcast %cst_66 : f32 to vector<8x32xf32>
    %202 = arith.addf %201, %200 : vector<8x32xf32>
    %203 = arith.divf %201, %202 : vector<8x32xf32>
    %204 = vector.extract_strided_slice %191 {offsets = [0, 64], sizes = [8, 32], strides = [1, 1]} : vector<8x128xf32> to vector<8x32xf32>
    %205 = math.tanh %204 : vector<8x32xf32>
    %206 = vector.extract_strided_slice %191 {offsets = [0, 96], sizes = [8, 32], strides = [1, 1]} : vector<8x128xf32> to vector<8x32xf32>
    %207 = arith.negf %206 : vector<8x32xf32>
    %208 = math.exp %207 : vector<8x32xf32>
    %cst_67 = arith.constant 1.000000e+00 : f32
    %209 = vector.broadcast %cst_67 : f32 to vector<8x32xf32>
    %210 = arith.addf %209, %208 : vector<8x32xf32>
    %211 = arith.divf %209, %210 : vector<8x32xf32>
    %212 = arith.mulf %203, %180 : vector<8x32xf32>
    %213 = arith.mulf %197, %205 : vector<8x32xf32>
    %214 = arith.addf %212, %213 : vector<8x32xf32>
    %215 = math.tanh %214 : vector<8x32xf32>
    %216 = arith.mulf %211, %215 : vector<8x32xf32>
    %217 = arith.index_cast %186 : i32 to index
    %c0_68 = arith.constant 0 : index
    %218 = vector.load %arg13[%217, %c0_68] : memref<64x32xf32, #tpu.memory_space<vmem>>, vector<8x32xf32>
    tpu.vector_store %arg13[%217, %c0_68], %216 {strides = array<i32>} : memref<64x32xf32, #tpu.memory_space<vmem>>, vector<8x32xf32>,
    %c6_i32 = arith.constant 6 : i32
    %c8_i32_69 = arith.constant 8 : i32
    %219 = arith.muli %c6_i32, %c8_i32_69 : i32
    %220 = tpu.assume_multiple %219, 8 : i32
    %221 = arith.index_cast %220 : i32 to index
    %c0_70 = arith.constant 0 : index
    %222 = vector.load %arg12[%221, %c0_70] : memref<64x128xf32, #tpu.memory_space<vmem>>, vector<8x128xf32>
    %c0_71 = arith.constant 0 : index
    %c0_72 = arith.constant 0 : index
    %223 = vector.load %arg4[%c0_71, %c0_72] : memref<32x128xf32, #tpu.memory_space<vmem>>, vector<32x128xf32>
    %cst_73 = arith.constant dense<0.000000e+00> : vector<8x128xf32>
    %224 = tpu.matmul %216, %223, %cst_73 {dimension_numbers = #tpu.dot_dimension_numbers<[1], [0], [0], [1], [0, 0, 1, 1], [], []>} : vector<8x32xf32>, vector<32x128xf32>, vector<8x128xf32> -> vector<8x128xf32>
    %225 = arith.addf %222, %224 : vector<8x128xf32>
    %226 = vector.extract_strided_slice %225 {offsets = [0, 0], sizes = [8, 32], strides = [1, 1]} : vector<8x128xf32> to vector<8x32xf32>
    %227 = arith.negf %226 : vector<8x32xf32>
    %228 = math.exp %227 : vector<8x32xf32>
    %cst_74 = arith.constant 1.000000e+00 : f32
    %229 = vector.broadcast %cst_74 : f32 to vector<8x32xf32>
    %230 = arith.addf %229, %228 : vector<8x32xf32>
    %231 = arith.divf %229, %230 : vector<8x32xf32>
    %232 = vector.extract_strided_slice %225 {offsets = [0, 32], sizes = [8, 32], strides = [1, 1]} : vector<8x128xf32> to vector<8x32xf32>
    %233 = arith.negf %232 : vector<8x32xf32>
    %234 = math.exp %233 : vector<8x32xf32>
    %cst_75 = arith.constant 1.000000e+00 : f32
    %235 = vector.broadcast %cst_75 : f32 to vector<8x32xf32>
    %236 = arith.addf %235, %234 : vector<8x32xf32>
    %237 = arith.divf %235, %236 : vector<8x32xf32>
    %238 = vector.extract_strided_slice %225 {offsets = [0, 64], sizes = [8, 32], strides = [1, 1]} : vector<8x128xf32> to vector<8x32xf32>
    %239 = math.tanh %238 : vector<8x32xf32>
    %240 = vector.extract_strided_slice %225 {offsets = [0, 96], sizes = [8, 32], strides = [1, 1]} : vector<8x128xf32> to vector<8x32xf32>
    %241 = arith.negf %240 : vector<8x32xf32>
    %242 = math.exp %241 : vector<8x32xf32>
    %cst_76 = arith.constant 1.000000e+00 : f32
    %243 = vector.broadcast %cst_76 : f32 to vector<8x32xf32>
    %244 = arith.addf %243, %242 : vector<8x32xf32>
    %245 = arith.divf %243, %244 : vector<8x32xf32>
    %246 = arith.mulf %237, %214 : vector<8x32xf32>
    %247 = arith.mulf %231, %239 : vector<8x32xf32>
    %248 = arith.addf %246, %247 : vector<8x32xf32>
    %249 = math.tanh %248 : vector<8x32xf32>
    %250 = arith.mulf %245, %249 : vector<8x32xf32>
    %251 = arith.index_cast %220 : i32 to index
    %c0_77 = arith.constant 0 : index
    %252 = vector.load %arg13[%251, %c0_77] : memref<64x32xf32, #tpu.memory_space<vmem>>, vector<8x32xf32>
    tpu.vector_store %arg13[%251, %c0_77], %250 {strides = array<i32>} : memref<64x32xf32, #tpu.memory_space<vmem>>, vector<8x32xf32>,
    %c7_i32 = arith.constant 7 : i32
    %c8_i32_78 = arith.constant 8 : i32
    %253 = arith.muli %c7_i32, %c8_i32_78 : i32
    %254 = tpu.assume_multiple %253, 8 : i32
    %255 = arith.index_cast %254 : i32 to index
    %c0_79 = arith.constant 0 : index
    %256 = vector.load %arg12[%255, %c0_79] : memref<64x128xf32, #tpu.memory_space<vmem>>, vector<8x128xf32>
    %c0_80 = arith.constant 0 : index
    %c0_81 = arith.constant 0 : index
    %257 = vector.load %arg4[%c0_80, %c0_81] : memref<32x128xf32, #tpu.memory_space<vmem>>, vector<32x128xf32>
    %cst_82 = arith.constant dense<0.000000e+00> : vector<8x128xf32>
    %258 = tpu.matmul %250, %257, %cst_82 {dimension_numbers = #tpu.dot_dimension_numbers<[1], [0], [0], [1], [0, 0, 1, 1], [], []>} : vector<8x32xf32>, vector<32x128xf32>, vector<8x128xf32> -> vector<8x128xf32>
    %259 = arith.addf %256, %258 : vector<8x128xf32>
    %260 = vector.extract_strided_slice %259 {offsets = [0, 0], sizes = [8, 32], strides = [1, 1]} : vector<8x128xf32> to vector<8x32xf32>
    %261 = arith.negf %260 : vector<8x32xf32>
    %262 = math.exp %261 : vector<8x32xf32>
    %cst_83 = arith.constant 1.000000e+00 : f32
    %263 = vector.broadcast %cst_83 : f32 to vector<8x32xf32>
    %264 = arith.addf %263, %262 : vector<8x32xf32>
    %265 = arith.divf %263, %264 : vector<8x32xf32>
    %266 = vector.extract_strided_slice %259 {offsets = [0, 32], sizes = [8, 32], strides = [1, 1]} : vector<8x128xf32> to vector<8x32xf32>
    %267 = arith.negf %266 : vector<8x32xf32>
    %268 = math.exp %267 : vector<8x32xf32>
    %cst_84 = arith.constant 1.000000e+00 : f32
    %269 = vector.broadcast %cst_84 : f32 to vector<8x32xf32>
    %270 = arith.addf %269, %268 : vector<8x32xf32>
    %271 = arith.divf %269, %270 : vector<8x32xf32>
    %272 = vector.extract_strided_slice %259 {offsets = [0, 64], sizes = [8, 32], strides = [1, 1]} : vector<8x128xf32> to vector<8x32xf32>
    %273 = math.tanh %272 : vector<8x32xf32>
    %274 = vector.extract_strided_slice %259 {offsets = [0, 96], sizes = [8, 32], strides = [1, 1]} : vector<8x128xf32> to vector<8x32xf32>
    %275 = arith.negf %274 : vector<8x32xf32>
    %276 = math.exp %275 : vector<8x32xf32>
    %cst_85 = arith.constant 1.000000e+00 : f32
    %277 = vector.broadcast %cst_85 : f32 to vector<8x32xf32>
    %278 = arith.addf %277, %276 : vector<8x32xf32>
    %279 = arith.divf %277, %278 : vector<8x32xf32>
    %280 = arith.mulf %271, %248 : vector<8x32xf32>
    %281 = arith.mulf %265, %273 : vector<8x32xf32>
    %282 = arith.addf %280, %281 : vector<8x32xf32>
    %283 = math.tanh %282 : vector<8x32xf32>
    %284 = arith.mulf %279, %283 : vector<8x32xf32>
    %285 = arith.index_cast %254 : i32 to index
    %c0_86 = arith.constant 0 : index
    %286 = vector.load %arg13[%285, %c0_86] : memref<64x32xf32, #tpu.memory_space<vmem>>, vector<8x32xf32>
    tpu.vector_store %arg13[%285, %c0_86], %284 {strides = array<i32>} : memref<64x32xf32, #tpu.memory_space<vmem>>, vector<8x32xf32>,
    %c8_i32_87 = arith.constant 8 : i32
    %c0_88 = arith.constant 0 : index
    %c0_89 = arith.constant 0 : index
    %c0_90 = arith.constant 0 : index
    %287 = vector.load %arg14[%c0_88, %c0_89, %c0_90] : memref<2x8x32xf32, #tpu.memory_space<vmem>>, vector<1x8x32xf32>
    %288 = vector.shape_cast %287 : vector<1x8x32xf32> to vector<8x32xf32>
    %289 = vector.shape_cast %284 : vector<8x32xf32> to vector<1x8x32xf32>
    tpu.vector_store %arg14[%c0_88, %c0_89, %c0_90], %289 {strides = array<i32>} : memref<2x8x32xf32, #tpu.memory_space<vmem>>, vector<1x8x32xf32>,
    %c0_91 = arith.constant 0 : index
    %c0_92 = arith.constant 0 : index
    %c0_93 = arith.constant 0 : index
    %290 = vector.load %arg15[%c0_91, %c0_92, %c0_93] : memref<2x8x32xf32, #tpu.memory_space<vmem>>, vector<1x8x32xf32>
    %291 = vector.shape_cast %290 : vector<1x8x32xf32> to vector<8x32xf32>
    %292 = vector.shape_cast %282 : vector<8x32xf32> to vector<1x8x32xf32>
    tpu.vector_store %arg15[%c0_91, %c0_92, %c0_93], %292 {strides = array<i32>} : memref<2x8x32xf32, #tpu.memory_space<vmem>>, vector<1x8x32xf32>,
    %c0_94 = arith.constant 0 : index
    %c0_95 = arith.constant 0 : index
    %293 = vector.load %arg13[%c0_94, %c0_95] : memref<64x32xf32, #tpu.memory_space<vmem>>, vector<64x32xf32>
    %c0_96 = arith.constant 0 : index
    %c0_97 = arith.constant 0 : index
    %294 = vector.load %arg6[%c0_96, %c0_97] : memref<32x128xf32, #tpu.memory_space<vmem>>, vector<32x128xf32>
    %cst_98 = arith.constant dense<0.000000e+00> : vector<64x128xf32>
    %295 = tpu.matmul %293, %294, %cst_98 {dimension_numbers = #tpu.dot_dimension_numbers<[1], [0], [0], [1], [0, 0, 1, 1], [], []>} : vector<64x32xf32>, vector<32x128xf32>, vector<64x128xf32> -> vector<64x128xf32>
    %c0_99 = arith.constant 0 : index
    %c0_100 = arith.constant 0 : index
    %296 = vector.load %arg8[%c0_99, %c0_100] : memref<1x128xf32, #tpu.memory_space<vmem>>, vector<1x128xf32>
    %297 = vector.broadcast %296 : vector<1x128xf32> to vector<64x128xf32>
    %298 = arith.addf %295, %297 : vector<64x128xf32>
    %c0_101 = arith.constant 0 : index
    %c0_102 = arith.constant 0 : index
    %299 = vector.load %arg12[%c0_101, %c0_102] : memref<64x128xf32, #tpu.memory_space<vmem>>, vector<64x128xf32>
    tpu.vector_store %arg12[%c0_101, %c0_102], %298 {strides = array<i32>} : memref<64x128xf32, #tpu.memory_space<vmem>>, vector<64x128xf32>,
    %c1 = arith.constant 1 : index
    %c0_103 = arith.constant 0 : index
    %c0_104 = arith.constant 0 : index
    %300 = vector.load %arg14[%c1, %c0_103, %c0_104] : memref<2x8x32xf32, #tpu.memory_space<vmem>>, vector<1x8x32xf32>
    %301 = vector.shape_cast %300 : vector<1x8x32xf32> to vector<8x32xf32>
    %c1_105 = arith.constant 1 : index
    %c0_106 = arith.constant 0 : index
    %c0_107 = arith.constant 0 : index
    %302 = vector.load %arg15[%c1_105, %c0_106, %c0_107] : memref<2x8x32xf32, #tpu.memory_space<vmem>>, vector<1x8x32xf32>
    %303 = vector.shape_cast %302 : vector<1x8x32xf32> to vector<8x32xf32>
    %c0_i32_108 = arith.constant 0 : i32
    %c8_i32_109 = arith.constant 8 : i32
    %304 = arith.muli %c0_i32_108, %c8_i32_109 : i32
    %305 = tpu.assume_multiple %304, 8 : i32
    %306 = arith.index_cast %305 : i32 to index
    %c0_110 = arith.constant 0 : index
    %307 = vector.load %arg12[%306, %c0_110] : memref<64x128xf32, #tpu.memory_space<vmem>>, vector<8x128xf32>
    %c0_111 = arith.constant 0 : index
    %c0_112 = arith.constant 0 : index
    %308 = vector.load %arg7[%c0_111, %c0_112] : memref<32x128xf32, #tpu.memory_space<vmem>>, vector<32x128xf32>
    %cst_113 = arith.constant dense<0.000000e+00> : vector<8x128xf32>
    %309 = tpu.matmul %301, %308, %cst_113 {dimension_numbers = #tpu.dot_dimension_numbers<[1], [0], [0], [1], [0, 0, 1, 1], [], []>} : vector<8x32xf32>, vector<32x128xf32>, vector<8x128xf32> -> vector<8x128xf32>
    %310 = arith.addf %307, %309 : vector<8x128xf32>
    %311 = vector.extract_strided_slice %310 {offsets = [0, 0], sizes = [8, 32], strides = [1, 1]} : vector<8x128xf32> to vector<8x32xf32>
    %312 = arith.negf %311 : vector<8x32xf32>
    %313 = math.exp %312 : vector<8x32xf32>
    %cst_114 = arith.constant 1.000000e+00 : f32
    %314 = vector.broadcast %cst_114 : f32 to vector<8x32xf32>
    %315 = arith.addf %314, %313 : vector<8x32xf32>
    %316 = arith.divf %314, %315 : vector<8x32xf32>
    %317 = vector.extract_strided_slice %310 {offsets = [0, 32], sizes = [8, 32], strides = [1, 1]} : vector<8x128xf32> to vector<8x32xf32>
    %318 = arith.negf %317 : vector<8x32xf32>
    %319 = math.exp %318 : vector<8x32xf32>
    %cst_115 = arith.constant 1.000000e+00 : f32
    %320 = vector.broadcast %cst_115 : f32 to vector<8x32xf32>
    %321 = arith.addf %320, %319 : vector<8x32xf32>
    %322 = arith.divf %320, %321 : vector<8x32xf32>
    %323 = vector.extract_strided_slice %310 {offsets = [0, 64], sizes = [8, 32], strides = [1, 1]} : vector<8x128xf32> to vector<8x32xf32>
    %324 = math.tanh %323 : vector<8x32xf32>
    %325 = vector.extract_strided_slice %310 {offsets = [0, 96], sizes = [8, 32], strides = [1, 1]} : vector<8x128xf32> to vector<8x32xf32>
    %326 = arith.negf %325 : vector<8x32xf32>
    %327 = math.exp %326 : vector<8x32xf32>
    %cst_116 = arith.constant 1.000000e+00 : f32
    %328 = vector.broadcast %cst_116 : f32 to vector<8x32xf32>
    %329 = arith.addf %328, %327 : vector<8x32xf32>
    %330 = arith.divf %328, %329 : vector<8x32xf32>
    %331 = arith.mulf %322, %303 : vector<8x32xf32>
    %332 = arith.mulf %316, %324 : vector<8x32xf32>
    %333 = arith.addf %331, %332 : vector<8x32xf32>
    %334 = math.tanh %333 : vector<8x32xf32>
    %335 = arith.mulf %330, %334 : vector<8x32xf32>
    %c1_i32_117 = arith.constant 1 : i32
    %c8_i32_118 = arith.constant 8 : i32
    %336 = arith.muli %c1_i32_117, %c8_i32_118 : i32
    %337 = tpu.assume_multiple %336, 8 : i32
    %338 = arith.index_cast %337 : i32 to index
    %c0_119 = arith.constant 0 : index
    %339 = vector.load %arg12[%338, %c0_119] : memref<64x128xf32, #tpu.memory_space<vmem>>, vector<8x128xf32>
    %c0_120 = arith.constant 0 : index
    %c0_121 = arith.constant 0 : index
    %340 = vector.load %arg7[%c0_120, %c0_121] : memref<32x128xf32, #tpu.memory_space<vmem>>, vector<32x128xf32>
    %cst_122 = arith.constant dense<0.000000e+00> : vector<8x128xf32>
    %341 = tpu.matmul %335, %340, %cst_122 {dimension_numbers = #tpu.dot_dimension_numbers<[1], [0], [0], [1], [0, 0, 1, 1], [], []>} : vector<8x32xf32>, vector<32x128xf32>, vector<8x128xf32> -> vector<8x128xf32>
    %342 = arith.addf %339, %341 : vector<8x128xf32>
    %343 = vector.extract_strided_slice %342 {offsets = [0, 0], sizes = [8, 32], strides = [1, 1]} : vector<8x128xf32> to vector<8x32xf32>
    %344 = arith.negf %343 : vector<8x32xf32>
    %345 = math.exp %344 : vector<8x32xf32>
    %cst_123 = arith.constant 1.000000e+00 : f32
    %346 = vector.broadcast %cst_123 : f32 to vector<8x32xf32>
    %347 = arith.addf %346, %345 : vector<8x32xf32>
    %348 = arith.divf %346, %347 : vector<8x32xf32>
    %349 = vector.extract_strided_slice %342 {offsets = [0, 32], sizes = [8, 32], strides = [1, 1]} : vector<8x128xf32> to vector<8x32xf32>
    %350 = arith.negf %349 : vector<8x32xf32>
    %351 = math.exp %350 : vector<8x32xf32>
    %cst_124 = arith.constant 1.000000e+00 : f32
    %352 = vector.broadcast %cst_124 : f32 to vector<8x32xf32>
    %353 = arith.addf %352, %351 : vector<8x32xf32>
    %354 = arith.divf %352, %353 : vector<8x32xf32>
    %355 = vector.extract_strided_slice %342 {offsets = [0, 64], sizes = [8, 32], strides = [1, 1]} : vector<8x128xf32> to vector<8x32xf32>
    %356 = math.tanh %355 : vector<8x32xf32>
    %357 = vector.extract_strided_slice %342 {offsets = [0, 96], sizes = [8, 32], strides = [1, 1]} : vector<8x128xf32> to vector<8x32xf32>
    %358 = arith.negf %357 : vector<8x32xf32>
    %359 = math.exp %358 : vector<8x32xf32>
    %cst_125 = arith.constant 1.000000e+00 : f32
    %360 = vector.broadcast %cst_125 : f32 to vector<8x32xf32>
    %361 = arith.addf %360, %359 : vector<8x32xf32>
    %362 = arith.divf %360, %361 : vector<8x32xf32>
    %363 = arith.mulf %354, %333 : vector<8x32xf32>
    %364 = arith.mulf %348, %356 : vector<8x32xf32>
    %365 = arith.addf %363, %364 : vector<8x32xf32>
    %366 = math.tanh %365 : vector<8x32xf32>
    %367 = arith.mulf %362, %366 : vector<8x32xf32>
    %c2_i32_126 = arith.constant 2 : i32
    %c8_i32_127 = arith.constant 8 : i32
    %368 = arith.muli %c2_i32_126, %c8_i32_127 : i32
    %369 = tpu.assume_multiple %368, 8 : i32
    %370 = arith.index_cast %369 : i32 to index
    %c0_128 = arith.constant 0 : index
    %371 = vector.load %arg12[%370, %c0_128] : memref<64x128xf32, #tpu.memory_space<vmem>>, vector<8x128xf32>
    %c0_129 = arith.constant 0 : index
    %c0_130 = arith.constant 0 : index
    %372 = vector.load %arg7[%c0_129, %c0_130] : memref<32x128xf32, #tpu.memory_space<vmem>>, vector<32x128xf32>
    %cst_131 = arith.constant dense<0.000000e+00> : vector<8x128xf32>
    %373 = tpu.matmul %367, %372, %cst_131 {dimension_numbers = #tpu.dot_dimension_numbers<[1], [0], [0], [1], [0, 0, 1, 1], [], []>} : vector<8x32xf32>, vector<32x128xf32>, vector<8x128xf32> -> vector<8x128xf32>
    %374 = arith.addf %371, %373 : vector<8x128xf32>
    %375 = vector.extract_strided_slice %374 {offsets = [0, 0], sizes = [8, 32], strides = [1, 1]} : vector<8x128xf32> to vector<8x32xf32>
    %376 = arith.negf %375 : vector<8x32xf32>
    %377 = math.exp %376 : vector<8x32xf32>
    %cst_132 = arith.constant 1.000000e+00 : f32
    %378 = vector.broadcast %cst_132 : f32 to vector<8x32xf32>
    %379 = arith.addf %378, %377 : vector<8x32xf32>
    %380 = arith.divf %378, %379 : vector<8x32xf32>
    %381 = vector.extract_strided_slice %374 {offsets = [0, 32], sizes = [8, 32], strides = [1, 1]} : vector<8x128xf32> to vector<8x32xf32>
    %382 = arith.negf %381 : vector<8x32xf32>
    %383 = math.exp %382 : vector<8x32xf32>
    %cst_133 = arith.constant 1.000000e+00 : f32
    %384 = vector.broadcast %cst_133 : f32 to vector<8x32xf32>
    %385 = arith.addf %384, %383 : vector<8x32xf32>
    %386 = arith.divf %384, %385 : vector<8x32xf32>
    %387 = vector.extract_strided_slice %374 {offsets = [0, 64], sizes = [8, 32], strides = [1, 1]} : vector<8x128xf32> to vector<8x32xf32>
    %388 = math.tanh %387 : vector<8x32xf32>
    %389 = vector.extract_strided_slice %374 {offsets = [0, 96], sizes = [8, 32], strides = [1, 1]} : vector<8x128xf32> to vector<8x32xf32>
    %390 = arith.negf %389 : vector<8x32xf32>
    %391 = math.exp %390 : vector<8x32xf32>
    %cst_134 = arith.constant 1.000000e+00 : f32
    %392 = vector.broadcast %cst_134 : f32 to vector<8x32xf32>
    %393 = arith.addf %392, %391 : vector<8x32xf32>
    %394 = arith.divf %392, %393 : vector<8x32xf32>
    %395 = arith.mulf %386, %365 : vector<8x32xf32>
    %396 = arith.mulf %380, %388 : vector<8x32xf32>
    %397 = arith.addf %395, %396 : vector<8x32xf32>
    %398 = math.tanh %397 : vector<8x32xf32>
    %399 = arith.mulf %394, %398 : vector<8x32xf32>
    %c3_i32_135 = arith.constant 3 : i32
    %c8_i32_136 = arith.constant 8 : i32
    %400 = arith.muli %c3_i32_135, %c8_i32_136 : i32
    %401 = tpu.assume_multiple %400, 8 : i32
    %402 = arith.index_cast %401 : i32 to index
    %c0_137 = arith.constant 0 : index
    %403 = vector.load %arg12[%402, %c0_137] : memref<64x128xf32, #tpu.memory_space<vmem>>, vector<8x128xf32>
    %c0_138 = arith.constant 0 : index
    %c0_139 = arith.constant 0 : index
    %404 = vector.load %arg7[%c0_138, %c0_139] : memref<32x128xf32, #tpu.memory_space<vmem>>, vector<32x128xf32>
    %cst_140 = arith.constant dense<0.000000e+00> : vector<8x128xf32>
    %405 = tpu.matmul %399, %404, %cst_140 {dimension_numbers = #tpu.dot_dimension_numbers<[1], [0], [0], [1], [0, 0, 1, 1], [], []>} : vector<8x32xf32>, vector<32x128xf32>, vector<8x128xf32> -> vector<8x128xf32>
    %406 = arith.addf %403, %405 : vector<8x128xf32>
    %407 = vector.extract_strided_slice %406 {offsets = [0, 0], sizes = [8, 32], strides = [1, 1]} : vector<8x128xf32> to vector<8x32xf32>
    %408 = arith.negf %407 : vector<8x32xf32>
    %409 = math.exp %408 : vector<8x32xf32>
    %cst_141 = arith.constant 1.000000e+00 : f32
    %410 = vector.broadcast %cst_141 : f32 to vector<8x32xf32>
    %411 = arith.addf %410, %409 : vector<8x32xf32>
    %412 = arith.divf %410, %411 : vector<8x32xf32>
    %413 = vector.extract_strided_slice %406 {offsets = [0, 32], sizes = [8, 32], strides = [1, 1]} : vector<8x128xf32> to vector<8x32xf32>
    %414 = arith.negf %413 : vector<8x32xf32>
    %415 = math.exp %414 : vector<8x32xf32>
    %cst_142 = arith.constant 1.000000e+00 : f32
    %416 = vector.broadcast %cst_142 : f32 to vector<8x32xf32>
    %417 = arith.addf %416, %415 : vector<8x32xf32>
    %418 = arith.divf %416, %417 : vector<8x32xf32>
    %419 = vector.extract_strided_slice %406 {offsets = [0, 64], sizes = [8, 32], strides = [1, 1]} : vector<8x128xf32> to vector<8x32xf32>
    %420 = math.tanh %419 : vector<8x32xf32>
    %421 = vector.extract_strided_slice %406 {offsets = [0, 96], sizes = [8, 32], strides = [1, 1]} : vector<8x128xf32> to vector<8x32xf32>
    %422 = arith.negf %421 : vector<8x32xf32>
    %423 = math.exp %422 : vector<8x32xf32>
    %cst_143 = arith.constant 1.000000e+00 : f32
    %424 = vector.broadcast %cst_143 : f32 to vector<8x32xf32>
    %425 = arith.addf %424, %423 : vector<8x32xf32>
    %426 = arith.divf %424, %425 : vector<8x32xf32>
    %427 = arith.mulf %418, %397 : vector<8x32xf32>
    %428 = arith.mulf %412, %420 : vector<8x32xf32>
    %429 = arith.addf %427, %428 : vector<8x32xf32>
    %430 = math.tanh %429 : vector<8x32xf32>
    %431 = arith.mulf %426, %430 : vector<8x32xf32>
    %c4_i32_144 = arith.constant 4 : i32
    %c8_i32_145 = arith.constant 8 : i32
    %432 = arith.muli %c4_i32_144, %c8_i32_145 : i32
    %433 = tpu.assume_multiple %432, 8 : i32
    %434 = arith.index_cast %433 : i32 to index
    %c0_146 = arith.constant 0 : index
    %435 = vector.load %arg12[%434, %c0_146] : memref<64x128xf32, #tpu.memory_space<vmem>>, vector<8x128xf32>
    %c0_147 = arith.constant 0 : index
    %c0_148 = arith.constant 0 : index
    %436 = vector.load %arg7[%c0_147, %c0_148] : memref<32x128xf32, #tpu.memory_space<vmem>>, vector<32x128xf32>
    %cst_149 = arith.constant dense<0.000000e+00> : vector<8x128xf32>
    %437 = tpu.matmul %431, %436, %cst_149 {dimension_numbers = #tpu.dot_dimension_numbers<[1], [0], [0], [1], [0, 0, 1, 1], [], []>} : vector<8x32xf32>, vector<32x128xf32>, vector<8x128xf32> -> vector<8x128xf32>
    %438 = arith.addf %435, %437 : vector<8x128xf32>
    %439 = vector.extract_strided_slice %438 {offsets = [0, 0], sizes = [8, 32], strides = [1, 1]} : vector<8x128xf32> to vector<8x32xf32>
    %440 = arith.negf %439 : vector<8x32xf32>
    %441 = math.exp %440 : vector<8x32xf32>
    %cst_150 = arith.constant 1.000000e+00 : f32
    %442 = vector.broadcast %cst_150 : f32 to vector<8x32xf32>
    %443 = arith.addf %442, %441 : vector<8x32xf32>
    %444 = arith.divf %442, %443 : vector<8x32xf32>
    %445 = vector.extract_strided_slice %438 {offsets = [0, 32], sizes = [8, 32], strides = [1, 1]} : vector<8x128xf32> to vector<8x32xf32>
    %446 = arith.negf %445 : vector<8x32xf32>
    %447 = math.exp %446 : vector<8x32xf32>
    %cst_151 = arith.constant 1.000000e+00 : f32
    %448 = vector.broadcast %cst_151 : f32 to vector<8x32xf32>
    %449 = arith.addf %448, %447 : vector<8x32xf32>
    %450 = arith.divf %448, %449 : vector<8x32xf32>
    %451 = vector.extract_strided_slice %438 {offsets = [0, 64], sizes = [8, 32], strides = [1, 1]} : vector<8x128xf32> to vector<8x32xf32>
    %452 = math.tanh %451 : vector<8x32xf32>
    %453 = vector.extract_strided_slice %438 {offsets = [0, 96], sizes = [8, 32], strides = [1, 1]} : vector<8x128xf32> to vector<8x32xf32>
    %454 = arith.negf %453 : vector<8x32xf32>
    %455 = math.exp %454 : vector<8x32xf32>
    %cst_152 = arith.constant 1.000000e+00 : f32
    %456 = vector.broadcast %cst_152 : f32 to vector<8x32xf32>
    %457 = arith.addf %456, %455 : vector<8x32xf32>
    %458 = arith.divf %456, %457 : vector<8x32xf32>
    %459 = arith.mulf %450, %429 : vector<8x32xf32>
    %460 = arith.mulf %444, %452 : vector<8x32xf32>
    %461 = arith.addf %459, %460 : vector<8x32xf32>
    %462 = math.tanh %461 : vector<8x32xf32>
    %463 = arith.mulf %458, %462 : vector<8x32xf32>
    %c5_i32_153 = arith.constant 5 : i32
    %c8_i32_154 = arith.constant 8 : i32
    %464 = arith.muli %c5_i32_153, %c8_i32_154 : i32
    %465 = tpu.assume_multiple %464, 8 : i32
    %466 = arith.index_cast %465 : i32 to index
    %c0_155 = arith.constant 0 : index
    %467 = vector.load %arg12[%466, %c0_155] : memref<64x128xf32, #tpu.memory_space<vmem>>, vector<8x128xf32>
    %c0_156 = arith.constant 0 : index
    %c0_157 = arith.constant 0 : index
    %468 = vector.load %arg7[%c0_156, %c0_157] : memref<32x128xf32, #tpu.memory_space<vmem>>, vector<32x128xf32>
    %cst_158 = arith.constant dense<0.000000e+00> : vector<8x128xf32>
    %469 = tpu.matmul %463, %468, %cst_158 {dimension_numbers = #tpu.dot_dimension_numbers<[1], [0], [0], [1], [0, 0, 1, 1], [], []>} : vector<8x32xf32>, vector<32x128xf32>, vector<8x128xf32> -> vector<8x128xf32>
    %470 = arith.addf %467, %469 : vector<8x128xf32>
    %471 = vector.extract_strided_slice %470 {offsets = [0, 0], sizes = [8, 32], strides = [1, 1]} : vector<8x128xf32> to vector<8x32xf32>
    %472 = arith.negf %471 : vector<8x32xf32>
    %473 = math.exp %472 : vector<8x32xf32>
    %cst_159 = arith.constant 1.000000e+00 : f32
    %474 = vector.broadcast %cst_159 : f32 to vector<8x32xf32>
    %475 = arith.addf %474, %473 : vector<8x32xf32>
    %476 = arith.divf %474, %475 : vector<8x32xf32>
    %477 = vector.extract_strided_slice %470 {offsets = [0, 32], sizes = [8, 32], strides = [1, 1]} : vector<8x128xf32> to vector<8x32xf32>
    %478 = arith.negf %477 : vector<8x32xf32>
    %479 = math.exp %478 : vector<8x32xf32>
    %cst_160 = arith.constant 1.000000e+00 : f32
    %480 = vector.broadcast %cst_160 : f32 to vector<8x32xf32>
    %481 = arith.addf %480, %479 : vector<8x32xf32>
    %482 = arith.divf %480, %481 : vector<8x32xf32>
    %483 = vector.extract_strided_slice %470 {offsets = [0, 64], sizes = [8, 32], strides = [1, 1]} : vector<8x128xf32> to vector<8x32xf32>
    %484 = math.tanh %483 : vector<8x32xf32>
    %485 = vector.extract_strided_slice %470 {offsets = [0, 96], sizes = [8, 32], strides = [1, 1]} : vector<8x128xf32> to vector<8x32xf32>
    %486 = arith.negf %485 : vector<8x32xf32>
    %487 = math.exp %486 : vector<8x32xf32>
    %cst_161 = arith.constant 1.000000e+00 : f32
    %488 = vector.broadcast %cst_161 : f32 to vector<8x32xf32>
    %489 = arith.addf %488, %487 : vector<8x32xf32>
    %490 = arith.divf %488, %489 : vector<8x32xf32>
    %491 = arith.mulf %482, %461 : vector<8x32xf32>
    %492 = arith.mulf %476, %484 : vector<8x32xf32>
    %493 = arith.addf %491, %492 : vector<8x32xf32>
    %494 = math.tanh %493 : vector<8x32xf32>
    %495 = arith.mulf %490, %494 : vector<8x32xf32>
    %c6_i32_162 = arith.constant 6 : i32
    %c8_i32_163 = arith.constant 8 : i32
    %496 = arith.muli %c6_i32_162, %c8_i32_163 : i32
    %497 = tpu.assume_multiple %496, 8 : i32
    %498 = arith.index_cast %497 : i32 to index
    %c0_164 = arith.constant 0 : index
    %499 = vector.load %arg12[%498, %c0_164] : memref<64x128xf32, #tpu.memory_space<vmem>>, vector<8x128xf32>
    %c0_165 = arith.constant 0 : index
    %c0_166 = arith.constant 0 : index
    %500 = vector.load %arg7[%c0_165, %c0_166] : memref<32x128xf32, #tpu.memory_space<vmem>>, vector<32x128xf32>
    %cst_167 = arith.constant dense<0.000000e+00> : vector<8x128xf32>
    %501 = tpu.matmul %495, %500, %cst_167 {dimension_numbers = #tpu.dot_dimension_numbers<[1], [0], [0], [1], [0, 0, 1, 1], [], []>} : vector<8x32xf32>, vector<32x128xf32>, vector<8x128xf32> -> vector<8x128xf32>
    %502 = arith.addf %499, %501 : vector<8x128xf32>
    %503 = vector.extract_strided_slice %502 {offsets = [0, 0], sizes = [8, 32], strides = [1, 1]} : vector<8x128xf32> to vector<8x32xf32>
    %504 = arith.negf %503 : vector<8x32xf32>
    %505 = math.exp %504 : vector<8x32xf32>
    %cst_168 = arith.constant 1.000000e+00 : f32
    %506 = vector.broadcast %cst_168 : f32 to vector<8x32xf32>
    %507 = arith.addf %506, %505 : vector<8x32xf32>
    %508 = arith.divf %506, %507 : vector<8x32xf32>
    %509 = vector.extract_strided_slice %502 {offsets = [0, 32], sizes = [8, 32], strides = [1, 1]} : vector<8x128xf32> to vector<8x32xf32>
    %510 = arith.negf %509 : vector<8x32xf32>
    %511 = math.exp %510 : vector<8x32xf32>
    %cst_169 = arith.constant 1.000000e+00 : f32
    %512 = vector.broadcast %cst_169 : f32 to vector<8x32xf32>
    %513 = arith.addf %512, %511 : vector<8x32xf32>
    %514 = arith.divf %512, %513 : vector<8x32xf32>
    %515 = vector.extract_strided_slice %502 {offsets = [0, 64], sizes = [8, 32], strides = [1, 1]} : vector<8x128xf32> to vector<8x32xf32>
    %516 = math.tanh %515 : vector<8x32xf32>
    %517 = vector.extract_strided_slice %502 {offsets = [0, 96], sizes = [8, 32], strides = [1, 1]} : vector<8x128xf32> to vector<8x32xf32>
    %518 = arith.negf %517 : vector<8x32xf32>
    %519 = math.exp %518 : vector<8x32xf32>
    %cst_170 = arith.constant 1.000000e+00 : f32
    %520 = vector.broadcast %cst_170 : f32 to vector<8x32xf32>
    %521 = arith.addf %520, %519 : vector<8x32xf32>
    %522 = arith.divf %520, %521 : vector<8x32xf32>
    %523 = arith.mulf %514, %493 : vector<8x32xf32>
    %524 = arith.mulf %508, %516 : vector<8x32xf32>
    %525 = arith.addf %523, %524 : vector<8x32xf32>
    %526 = math.tanh %525 : vector<8x32xf32>
    %527 = arith.mulf %522, %526 : vector<8x32xf32>
    %c7_i32_171 = arith.constant 7 : i32
    %c8_i32_172 = arith.constant 8 : i32
    %528 = arith.muli %c7_i32_171, %c8_i32_172 : i32
    %529 = tpu.assume_multiple %528, 8 : i32
    %530 = arith.index_cast %529 : i32 to index
    %c0_173 = arith.constant 0 : index
    %531 = vector.load %arg12[%530, %c0_173] : memref<64x128xf32, #tpu.memory_space<vmem>>, vector<8x128xf32>
    %c0_174 = arith.constant 0 : index
    %c0_175 = arith.constant 0 : index
    %532 = vector.load %arg7[%c0_174, %c0_175] : memref<32x128xf32, #tpu.memory_space<vmem>>, vector<32x128xf32>
    %cst_176 = arith.constant dense<0.000000e+00> : vector<8x128xf32>
    %533 = tpu.matmul %527, %532, %cst_176 {dimension_numbers = #tpu.dot_dimension_numbers<[1], [0], [0], [1], [0, 0, 1, 1], [], []>} : vector<8x32xf32>, vector<32x128xf32>, vector<8x128xf32> -> vector<8x128xf32>
    %534 = arith.addf %531, %533 : vector<8x128xf32>
    %535 = vector.extract_strided_slice %534 {offsets = [0, 0], sizes = [8, 32], strides = [1, 1]} : vector<8x128xf32> to vector<8x32xf32>
    %536 = arith.negf %535 : vector<8x32xf32>
    %537 = math.exp %536 : vector<8x32xf32>
    %cst_177 = arith.constant 1.000000e+00 : f32
    %538 = vector.broadcast %cst_177 : f32 to vector<8x32xf32>
    %539 = arith.addf %538, %537 : vector<8x32xf32>
    %540 = arith.divf %538, %539 : vector<8x32xf32>
    %541 = vector.extract_strided_slice %534 {offsets = [0, 32], sizes = [8, 32], strides = [1, 1]} : vector<8x128xf32> to vector<8x32xf32>
    %542 = arith.negf %541 : vector<8x32xf32>
    %543 = math.exp %542 : vector<8x32xf32>
    %cst_178 = arith.constant 1.000000e+00 : f32
    %544 = vector.broadcast %cst_178 : f32 to vector<8x32xf32>
    %545 = arith.addf %544, %543 : vector<8x32xf32>
    %546 = arith.divf %544, %545 : vector<8x32xf32>
    %547 = vector.extract_strided_slice %534 {offsets = [0, 64], sizes = [8, 32], strides = [1, 1]} : vector<8x128xf32> to vector<8x32xf32>
    %548 = math.tanh %547 : vector<8x32xf32>
    %549 = vector.extract_strided_slice %534 {offsets = [0, 96], sizes = [8, 32], strides = [1, 1]} : vector<8x128xf32> to vector<8x32xf32>
    %550 = arith.negf %549 : vector<8x32xf32>
    %551 = math.exp %550 : vector<8x32xf32>
    %cst_179 = arith.constant 1.000000e+00 : f32
    %552 = vector.broadcast %cst_179 : f32 to vector<8x32xf32>
    %553 = arith.addf %552, %551 : vector<8x32xf32>
    %554 = arith.divf %552, %553 : vector<8x32xf32>
    %555 = arith.mulf %546, %525 : vector<8x32xf32>
    %556 = arith.mulf %540, %548 : vector<8x32xf32>
    %557 = arith.addf %555, %556 : vector<8x32xf32>
    %558 = math.tanh %557 : vector<8x32xf32>
    %559 = arith.mulf %554, %558 : vector<8x32xf32>
    %c8_i32_180 = arith.constant 8 : i32
    %c1_181 = arith.constant 1 : index
    %c0_182 = arith.constant 0 : index
    %c0_183 = arith.constant 0 : index
    %560 = vector.load %arg14[%c1_181, %c0_182, %c0_183] : memref<2x8x32xf32, #tpu.memory_space<vmem>>, vector<1x8x32xf32>
    %561 = vector.shape_cast %560 : vector<1x8x32xf32> to vector<8x32xf32>
    %562 = vector.shape_cast %559 : vector<8x32xf32> to vector<1x8x32xf32>
    tpu.vector_store %arg14[%c1_181, %c0_182, %c0_183], %562 {strides = array<i32>} : memref<2x8x32xf32, #tpu.memory_space<vmem>>, vector<1x8x32xf32>,
    %c1_184 = arith.constant 1 : index
    %c0_185 = arith.constant 0 : index
    %c0_186 = arith.constant 0 : index
    %563 = vector.load %arg15[%c1_184, %c0_185, %c0_186] : memref<2x8x32xf32, #tpu.memory_space<vmem>>, vector<1x8x32xf32>
    %564 = vector.shape_cast %563 : vector<1x8x32xf32> to vector<8x32xf32>
    %565 = vector.shape_cast %557 : vector<8x32xf32> to vector<1x8x32xf32>
    tpu.vector_store %arg15[%c1_184, %c0_185, %c0_186], %565 {strides = array<i32>} : memref<2x8x32xf32, #tpu.memory_space<vmem>>, vector<1x8x32xf32>,
    %c0_i32_187 = arith.constant 0 : i32
    %566 = arith.cmpi eq, %arg1, %c0_i32_187 : i32
    %567 = arith.extui %566 : i1 to i32
    %c0_i32_188 = arith.constant 0 : i32
    %568 = arith.cmpi ne, %567, %c0_i32_188 : i32
    scf.if %568 {
      %c0_189 = arith.constant 0 : index
      %c0_190 = arith.constant 0 : index
      %569 = vector.load %arg9[%c0_189, %c0_190] : memref<32x128xf32, #tpu.memory_space<vmem>>, vector<32x128xf32>
      %cst_191 = arith.constant dense<0.000000e+00> : vector<8x128xf32>
      %570 = tpu.matmul %559, %569, %cst_191 {dimension_numbers = #tpu.dot_dimension_numbers<[1], [0], [0], [1], [0, 0, 1, 1], [], []>} : vector<8x32xf32>, vector<32x128xf32>, vector<8x128xf32> -> vector<8x128xf32>
      %c0_192 = arith.constant 0 : index
      %c0_193 = arith.constant 0 : index
      %571 = vector.load %arg10[%c0_192, %c0_193] : memref<1x128xf32, #tpu.memory_space<vmem>>, vector<1x128xf32>
      %572 = vector.broadcast %571 : vector<1x128xf32> to vector<8x128xf32>
      %573 = arith.addf %570, %572 : vector<8x128xf32>
      %c0_194 = arith.constant 0 : index
      %c0_195 = arith.constant 0 : index
      %574 = vector.load %arg11[%c0_194, %c0_195] : memref<8x128xf32, #tpu.memory_space<vmem>>, vector<8x128xf32>
      tpu.vector_store %arg11[%c0_194, %c0_195], %573 {strides = array<i32>} : memref<8x128xf32, #tpu.memory_space<vmem>>, vector<8x128xf32>,
    } else {
    }
    return
  }
  func.func @transform_0(%arg0: i32, %arg1: i32) -> (i32, i32, i32) {
    %c0_i32 = arith.constant 0 : i32
    %c0_i32_0 = arith.constant 0 : i32
    return %arg1, %arg0, %c0_i32 : i32, i32, i32
  }
  func.func @transform_1(%arg0: i32, %arg1: i32) -> (i32, i32) {
    %c0_i32 = arith.constant 0 : i32
    %c0_i32_0 = arith.constant 0 : i32
    %c0_i32_1 = arith.constant 0 : i32
    return %c0_i32, %c0_i32_0 : i32, i32
  }
  func.func @transform_2(%arg0: i32, %arg1: i32) -> (i32, i32) {
    %c0_i32 = arith.constant 0 : i32
    %c0_i32_0 = arith.constant 0 : i32
    %c0_i32_1 = arith.constant 0 : i32
    return %c0_i32, %c0_i32_0 : i32, i32
  }
  func.func @transform_3(%arg0: i32, %arg1: i32) -> (i32, i32) {
    %c0_i32 = arith.constant 0 : i32
    %c0_i32_0 = arith.constant 0 : i32
    %c0_i32_1 = arith.constant 0 : i32
    return %c0_i32, %c0_i32_0 : i32, i32
  }
  func.func @transform_4(%arg0: i32, %arg1: i32) -> (i32, i32) {
    %c0_i32 = arith.constant 0 : i32
    %c0_i32_0 = arith.constant 0 : i32
    %c0_i32_1 = arith.constant 0 : i32
    return %c0_i32, %c0_i32_0 : i32, i32
  }
  func.func @transform_5(%arg0: i32, %arg1: i32) -> (i32, i32) {
    %c0_i32 = arith.constant 0 : i32
    %c0_i32_0 = arith.constant 0 : i32
    %c0_i32_1 = arith.constant 0 : i32
    return %c0_i32, %c0_i32_0 : i32, i32
  }
  func.func @transform_6(%arg0: i32, %arg1: i32) -> (i32, i32) {
    %c0_i32 = arith.constant 0 : i32
    %c0_i32_0 = arith.constant 0 : i32
    %c0_i32_1 = arith.constant 0 : i32
    return %c0_i32, %c0_i32_0 : i32, i32
  }
  func.func @transform_7(%arg0: i32, %arg1: i32) -> (i32, i32) {
    %c0_i32 = arith.constant 0 : i32
    %c0_i32_0 = arith.constant 0 : i32
    %c0_i32_1 = arith.constant 0 : i32
    return %c0_i32, %c0_i32_0 : i32, i32
  }
  func.func @transform_8(%arg0: i32, %arg1: i32) -> (i32, i32) {
    %c0_i32 = arith.constant 0 : i32
    %c0_i32_0 = arith.constant 0 : i32
    %c0_i32_1 = arith.constant 0 : i32
    return %c0_i32, %c0_i32_0 : i32, i32
  }
  func.func @transform_9(%arg0: i32, %arg1: i32) -> (i32, i32) {
    %c0_i32 = arith.constant 0 : i32
    %c0_i32_0 = arith.constant 0 : i32
    return %arg0, %c0_i32 : i32, i32
  }
}

</mosaic_0001>

<llo_original>
// kernel: _forward_impl.1
$region0: #{_forward_impl.1}
  #allocation0 [shape = 'u32[]', space=smem, size = 0x4, offset = 0x4, fixed_abs, tag = 'smem constant byte address 0x4 - core index']
  #allocation1 [shape = 'u32[144,128]{1,0:T(1,128)}', space=vmem, size = 0x12000, scoped, tag = 'internal scratch']
  #allocation2 [shape = 'f32[64,128]{1,0:T(8,128)}', space=vmem, size = 0x8000, scoped, tag = 'scratch operand']
  #allocation3 [shape = 'f32[64,32]{1,0:T(8,128)}', space=vmem, size = 0x8000, scoped, tag = 'scratch operand']
  #allocation4 [shape = 'f32[2,8,32]{2,1,0:T(8,128)}', space=vmem, size = 0x2000, scoped, tag = 'scratch operand']
  #allocation5 [shape = 'f32[2,8,32]{2,1,0:T(8,128)}', space=vmem, size = 0x2000, scoped, tag = 'scratch operand']
  %s0 = inlined_call_operand.vmem [shape: f32[8,8,13], index: 0, kind: input, shape index: {}]
  %s1 = inlined_call_operand.hbm [shape: f32[13,128], index: 1, kind: input, shape index: {}]
  %s2 = inlined_call_operand.vmem [shape: f32[32,128], index: 2, kind: input, shape index: {}]
  %s3 = inlined_call_operand.hbm [shape: f32[1,128], index: 3, kind: input, shape index: {}]
  %s4 = inlined_call_operand.vmem [shape: f32[32,128], index: 4, kind: input, shape index: {}]
  %s5 = inlined_call_operand.vmem [shape: f32[32,128], index: 5, kind: input, shape index: {}]
  %s6 = inlined_call_operand.vmem [shape: f32[1,128], index: 6, kind: input, shape index: {}]
  %s7 = inlined_call_operand.vmem [shape: f32[32,128], index: 7, kind: input, shape index: {}]
  %s8 = inlined_call_operand.vmem [shape: f32[1,128], index: 8, kind: input, shape index: {}]
  %s9 = inlined_call_operand.vmem [shape: f32[8,128], index: 9, kind: output, shape index: {}]
  %s10 = sld [smem:[#allocation0]]
  $region62: #{_forward_impl.1} parent=0
    _
  %s12 = ssub.s32 1, %s10
  %s13 = scalar_select 0, %s12, %s10
  $region1: #{_forward_impl.1} parent=0
    #allocation6 [shape = 'u8[8192]{0}', space=vmem, size = 0x2000, scoped, tag = 'input window, operand 1, single buffered']
    #allocation7 [shape = 's32[1]{0}', space=sflag, size = 0x4, scoped, tag = 'scoped memory for _forward_impl.1']
    #allocation8 [shape = 'u8[512]{0}', space=vmem, size = 0x400, scoped, tag = 'input window, operand 3, single buffered']
    #allocation9 [shape = 's32[1]{0}', space=sflag, size = 0x4, scoped, tag = 'scoped memory for _forward_impl.1']
    %14 = vsyncpa [#allocation7], 0
    %15 = vsyncpa [#allocation9], 0
    // Predicated region
    $region2: #{_forward_impl.1} parent=1 // pred_check
      _
    $region3: #{_forward_impl.1} parent=1 // pred_check_branch
      %17 = sbr.rel (0) target = $region5
    $region4: #{_forward_impl.1} parent=1 // pred_region
      _
    $region5: #{_forward_impl.1} parent=1 // pred_fallthru
      _
    // Predicated region
    $region6: #{_forward_impl.1} parent=1 // pred_check
      _
    $region7: #{_forward_impl.1} parent=1 // pred_check_branch
      %19 = sbr.rel (0) target = $region9
    $region8: #{_forward_impl.1} parent=1 // pred_region
      %s21 = ssub.s32 256, 256
      %22 = vsyncadd [#allocation7], %s21
      %s23 = sshll.u32 [#allocation6], 4
      %s24 = int_to_ptr.vmem [resolvable:$true] %s23
      %29 = dma.hbm_to_vmem [thread:$0]  %s1, 256, %s24, [#allocation7], 128, 128, 8
    $region9: #{_forward_impl.1} parent=1 // pred_fallthru
      _
    // Predicated region
    $region10: #{_forward_impl.1} parent=1 // pred_check
      _
    $region11: #{_forward_impl.1} parent=1 // pred_check_branch
      %31 = sbr.rel (0) target = $region13
    $region12: #{_forward_impl.1} parent=1 // pred_region
      _
    $region13: #{_forward_impl.1} parent=1 // pred_fallthru
      _
    // Predicated region
    $region14: #{_forward_impl.1} parent=1 // pred_check
      _
    $region15: #{_forward_impl.1} parent=1 // pred_check_branch
      %33 = sbr.rel (0) target = $region17
    $region16: #{_forward_impl.1} parent=1 // pred_region
      %s35 = ssub.s32 16, 16
      %36 = vsyncadd [#allocation9], %s35
      %s38 = sshll.u32 [#allocation8], 4
      %s39 = int_to_ptr.vmem [resolvable:$true] %s38
      %41 = dma.hbm_to_vmem [thread:$0]  %s3, 16, %s39, [#allocation9]
    $region17: #{_forward_impl.1} parent=1 // pred_fallthru
      _
    // Predicated region
    $region18: #{_forward_impl.1} parent=1 // pred_check
      _
    $region19: #{_forward_impl.1} parent=1 // pred_check_branch
      %43 = sbr.rel (0) target = $region21
    $region20: #{_forward_impl.1} parent=1 // pred_region
      _
    $region21: #{_forward_impl.1} parent=1 // pred_fallthru
      _
    // Predicated region
    $region22: #{_forward_impl.1} parent=1 // pred_check
      _
    $region23: #{_forward_impl.1} parent=1 // pred_check_branch
      %45 = sbr.rel (0) target = $region25
    $region24: #{_forward_impl.1} parent=1 // pred_region
      _
    $region25: #{_forward_impl.1} parent=1 // pred_fallthru
      _
    // Predicated region
    $region26: #{_forward_impl.1} parent=1 // pred_check
      _
    $region27: #{_forward_impl.1} parent=1 // pred_check_branch
      %47 = sbr.rel (0) target = $region29
    $region28: #{_forward_impl.1} parent=1 // pred_region
      _
    $region29: #{_forward_impl.1} parent=1 // pred_fallthru
      _
    // Predicated region
    $region30: #{_forward_impl.1} parent=1 // pred_check
      _
    $region31: #{_forward_impl.1} parent=1 // pred_check_branch
      %49 = sbr.rel (0) target = $region33
    $region32: #{_forward_impl.1} parent=1 // pred_region
      _
    $region33: #{_forward_impl.1} parent=1 // pred_fallthru
      _
    // Predicated region
    $region34: #{_forward_impl.1} parent=1 // pred_check
      _
    $region35: #{_forward_impl.1} parent=1 // pred_check_branch
      %51 = sbr.rel (0) target = $region37
    $region36: #{_forward_impl.1} parent=1 // pred_region
      _
    $region37: #{_forward_impl.1} parent=1 // pred_fallthru
      _
    // Predicated region
    $region38: #{_forward_impl.1} parent=1 // pred_check
      _
    $region39: #{_forward_impl.1} parent=1 // pred_check_branch
      %53 = sbr.rel (0) target = $region41
    $region40: #{_forward_impl.1} parent=1 // pred_region
      %54 = dma.done [#allocation7], 256
    $region41: #{_forward_impl.1} parent=1 // pred_fallthru
      _
    // Predicated region
    $region42: #{_forward_impl.1} parent=1 // pred_check
      _
    $region43: #{_forward_impl.1} parent=1 // pred_check_branch
      %56 = sbr.rel (0) target = $region45
    $region44: #{_forward_impl.1} parent=1 // pred_region
      %57 = dma.done [#allocation9], 16
    $region45: #{_forward_impl.1} parent=1 // pred_fallthru
      _
    %p58 = scmp.eq.s32.totalorder 0, 0
    // Predicated region
    $region46: #{_forward_impl.1} parent=1 // pred_check
      %p59 = pneg %p58
    $region47: #{_forward_impl.1} parent=1 // pred_check_branch
      %61 = sbr.rel (%p59) target = $region49
    $region48: #{_forward_impl.1} parent=1 // pred_region
      %vm62 = vcmask 261120
      %63 = vst.msk [vmem:[#allocation4] sm:$0xff] %vm62, 0.0
      %64 = vst.msk [vmem:[#allocation4 + $0x8] sm:$0xff] %vm62, 0.0
      %65 = vst.msk [vmem:[#allocation5] sm:$0xff] %vm62, 0.0
      %66 = vst.msk [vmem:[#allocation5 + $0x8] sm:$0xff] %vm62, 0.0
    $region49: #{_forward_impl.1} parent=1 // pred_fallthru
      _
    %v67 = vld [vmem:[%s0] sm:$0xff]
    %v68 = vld [vmem:[%s0 + $0x8] sm:$0xff]
    %v69 = vld [vmem:[%s0 + $0x10] sm:$0xff]
    %v70 = vld [vmem:[%s0 + $0x18] sm:$0xff]
    %v71 = vld [vmem:[%s0 + $0x20] sm:$0xff]
    %v72 = vld [vmem:[%s0 + $0x28] sm:$0xff]
    %v73 = vld [vmem:[%s0 + $0x30] sm:$0xff]
    %v74 = vld [vmem:[%s0 + $0x38] sm:$0xff]
    %v75 = vld [vmem:[#allocation6] sm:$0xff]
    %v76 = vld [vmem:[#allocation6 + $0x8] sm:$0x1f]
    %v77 = vld [vmem:[#allocation8] sm:$0x1]
    %v79 = vlaneseq
    %v80 = vshrl.u32 %v79, 7
    %v81 = vsub.s32 0, %v80
    %v82 = vrot.slane %v77, %v81
    %vm84 = vcmask 105472
    %v86 = vsel %vm84, %v67, 0
    %v89 = vsel %vm84, %v68, 0
    %v92 = vsel %vm84, %v69, 0
    %v95 = vsel %vm84, %v70, 0
    %v98 = vsel %vm84, %v71, 0
    %v101 = vsel %vm84, %v72, 0
    %v104 = vsel %vm84, %v73, 0
    %v107 = vsel %vm84, %v74, 0
    %vm109 = vcmask 1044480
    %v111 = vsel %vm109, %v76, 0
    %113 = vmatprep.subr.mxu0 0.0
    %114 = vmatpush1.msra.mxu0 %v75
    %115 = vmatprep.subr.mxu0 0.0
    %116 = vmatpush1.msra.mxu0 %v111
    %117 = vmatprep.subr.mxu0 0.0
    %118 = vmatpush1.msra.mxu0 0.0
    %119 = vmatprep.subr.mxu0 0.0
    %120 = vmatpush1.msra.mxu0 0.0
    %121 = vmatprep.subr.mxu0 0.0
    %122 = vmatpush1.msra.mxu0 0.0
    %123 = vmatprep.subr.mxu0 0.0
    %124 = vmatpush1.msra.mxu0 0.0
    %125 = vmatprep.subr.mxu0 0.0
    %126 = vmatpush1.msra.mxu0 0.0
    %127 = vmatprep.subr.mxu0 0.0
    %128 = vmatpush1.msra.mxu0 0.0
    %129 = vmatprep.subr.mxu0 0.0
    %130 = vmatpush1.msra.mxu0 0.0
    %131 = vmatprep.subr.mxu0 0.0
    %132 = vmatpush1.msra.mxu0 0.0
    %133 = vmatprep.subr.mxu0 0.0
    %134 = vmatpush1.msra.mxu0 0.0
    %135 = vmatprep.subr.mxu0 0.0
    %136 = vmatpush1.msra.mxu0 0.0
    %137 = vmatprep.subr.mxu0 0.0
    %138 = vmatpush1.msra.mxu0 0.0
    %139 = vmatprep.subr.mxu0 0.0
    %140 = vmatpush1.msra.mxu0 0.0
    %141 = vmatprep.subr.mxu0 0.0
    %142 = vmatpush1.msra.mxu0 0.0
    %143 = vmatprep.subr.mxu0 0.0
    %144 = vmatpush1.msra.mxu0 0.0
    %145 = vmatprep.subr.mxu0 0.0
    %146 = vmatpush1.msra.mxu0 0.0
    %147 = vmatprep.subr.mxu0 0.0
    %148 = vmatpush1.msra.mxu0 0.0
    %149 = vmatprep.subr.mxu0 0.0
    %150 = vmatpush1.msra.mxu0 0.0
    %151 = vmatprep.subr.mxu0 0.0
    %152 = vmatpush1.msra.mxu0 0.0
    %153 = vmatprep.subr.mxu0 0.0
    %154 = vmatpush1.msra.mxu0 0.0
    %155 = vmatprep.subr.mxu0 0.0
    %156 = vmatpush1.msra.mxu0 0.0
    %157 = vmatprep.subr.mxu0 0.0
    %158 = vmatpush1.msra.mxu0 0.0
    %159 = vmatprep.subr.mxu0 0.0
    %160 = vmatpush1.msra.mxu0 0.0
    %161 = vmatprep.subr.mxu0 0.0
    %162 = vmatpush1.msra.mxu0 0.0
    %163 = vmatprep.subr.mxu0 0.0
    %164 = vmatpush1.msra.mxu0 0.0
    %165 = vmatprep.subr.mxu0 0.0
    %166 = vmatpush1.msra.mxu0 0.0
    %167 = vmatprep.subr.mxu0 0.0
    %168 = vmatpush1.msra.mxu0 0.0
    %169 = vmatprep.subr.mxu0 0.0
    %170 = vmatpush1.msra.mxu0 0.0
    %171 = vmatprep.subr.mxu0 0.0
    %172 = vmatpush1.msra.mxu0 0.0
    %173 = vmatprep.subr.mxu0 0.0
    %174 = vmatpush1.msra.mxu0 0.0
    %175 = vmatprep.subr.mxu0 0.0
    %176 = vmatpush1.msra.mxu0 0.0
    %177 = vmatprep.mubr.f32.mxu0 0.0
    %178 = vmatmul.mubr.f32.gmra.mrb[0].mxu0 %v86
    %v179 = vpop.f32.mrb[0].mxu0
    %v180 = vadd.f32 %v82, %v179
    %v181 = vpop.f32.mrb[0].mxu0
    %182 = vmatprep.mubr.f32.mxu0 0.0
    %183 = vmatmul.mubr.f32.gmra.mrb[0].mxu0 %v89
    %v184 = vpop.f32.mrb[0].mxu0
    %v185 = vadd.f32 %v82, %v184
    %v186 = vpop.f32.mrb[0].mxu0
    %187 = vmatprep.mubr.f32.mxu0 0.0
    %188 = vmatmul.mubr.f32.gmra.mrb[0].mxu0 %v92
    %v189 = vpop.f32.mrb[0].mxu0
    %v190 = vadd.f32 %v82, %v189
    %v191 = vpop.f32.mrb[0].mxu0
    %192 = vmatprep.mubr.f32.mxu0 0.0
    %193 = vmatmul.mubr.f32.gmra.mrb[0].mxu0 %v95
    %v194 = vpop.f32.mrb[0].mxu0
    %v195 = vadd.f32 %v82, %v194
    %v196 = vpop.f32.mrb[0].mxu0
    %197 = vmatprep.mubr.f32.mxu0 0.0
    %198 = vmatmul.mubr.f32.gmra.mrb[0].mxu0 %v98
    %v199 = vpop.f32.mrb[0].mxu0
    %v200 = vadd.f32 %v82, %v199
    %v201 = vpop.f32.mrb[0].mxu0
    %202 = vmatprep.mubr.f32.mxu0 0.0
    %203 = vmatmul.mubr.f32.gmra.mrb[0].mxu0 %v101
    %v204 = vpop.f32.mrb[0].mxu0
    %v205 = vadd.f32 %v82, %v204
    %v206 = vpop.f32.mrb[0].mxu0
    %207 = vmatprep.mubr.f32.mxu0 0.0
    %208 = vmatmul.mubr.f32.gmra.mrb[0].mxu0 %v104
    %v209 = vpop.f32.mrb[0].mxu0
    %v210 = vadd.f32 %v82, %v209
    %v211 = vpop.f32.mrb[0].mxu0
    %212 = vmatprep.mubr.f32.mxu0 0.0
    %213 = vmatmul.mubr.f32.gmra.mrb[0].mxu0 %v107
    %v214 = vpop.f32.mrb[0].mxu0
    %v215 = vadd.f32 %v82, %v214
    %v216 = vpop.f32.mrb[0].mxu0
    %217 = vdwg.mxu0
    %218 = vst [vmem:[#allocation2] sm:$0xff] %v180
    %219 = vst [vmem:[#allocation2 + $0x8] sm:$0xff] %v185
    %220 = vst [vmem:[#allocation2 + $0x10] sm:$0xff] %v190
    %221 = vst [vmem:[#allocation2 + $0x18] sm:$0xff] %v195
    %222 = vst [vmem:[#allocation2 + $0x20] sm:$0xff] %v200
    %223 = vst [vmem:[#allocation2 + $0x28] sm:$0xff] %v205
    %224 = vst [vmem:[#allocation2 + $0x30] sm:$0xff] %v210
    %225 = vst [vmem:[#allocation2 + $0x38] sm:$0xff] %v215
    %v226 = vld [vmem:[#allocation4] sm:$0xff]
    %v227 = vld [vmem:[#allocation5] sm:$0xff]
    %v228 = vld [vmem:[#allocation2] sm:$0xff]
    %v229 = vld [vmem:[%s2] sm:$0xff]
    %v230 = vld [vmem:[%s2 + $0x8] sm:$0xff]
    %v231 = vld [vmem:[%s2 + $0x10] sm:$0xff]
    %v232 = vld [vmem:[%s2 + $0x18] sm:$0xff]
    %vm233 = vcmask 261120
    %v235 = vsel %vm233, %v226, 0
    %237 = vmatprep.subr.mxu0 0.0
    %238 = vmatpush1.msra.mxu0 %v229
    %239 = vmatprep.subr.mxu0 0.0
    %240 = vmatpush1.msra.mxu0 %v230
    %241 = vmatprep.subr.mxu0 0.0
    %242 = vmatpush1.msra.mxu0 %v231
    %243 = vmatprep.subr.mxu0 0.0
    %244 = vmatpush1.msra.mxu0 %v232
    %245 = vmatprep.subr.mxu0 0.0
    %246 = vmatpush1.msra.mxu0 0.0
    %247 = vmatprep.subr.mxu0 0.0
    %248 = vmatpush1.msra.mxu0 0.0
    %249 = vmatprep.subr.mxu0 0.0
    %250 = vmatpush1.msra.mxu0 0.0
    %251 = vmatprep.subr.mxu0 0.0
    %252 = vmatpush1.msra.mxu0 0.0
    %253 = vmatprep.subr.mxu0 0.0
    %254 = vmatpush1.msra.mxu0 0.0
    %255 = vmatprep.subr.mxu0 0.0
    %256 = vmatpush1.msra.mxu0 0.0
    %257 = vmatprep.subr.mxu0 0.0
    %258 = vmatpush1.msra.mxu0 0.0
    %259 = vmatprep.subr.mxu0 0.0
    %260 = vmatpush1.msra.mxu0 0.0
    %261 = vmatprep.subr.mxu0 0.0
    %262 = vmatpush1.msra.mxu0 0.0
    %263 = vmatprep.subr.mxu0 0.0
    %264 = vmatpush1.msra.mxu0 0.0
    %265 = vmatprep.subr.mxu0 0.0
    %266 = vmatpush1.msra.mxu0 0.0
    %267 = vmatprep.subr.mxu0 0.0
    %268 = vmatpush1.msra.mxu0 0.0
    %269 = vmatprep.subr.mxu0 0.0
    %270 = vmatpush1.msra.mxu0 0.0
    %271 = vmatprep.subr.mxu0 0.0
    %272 = vmatpush1.msra.mxu0 0.0
    %273 = vmatprep.subr.mxu0 0.0
    %274 = vmatpush1.msra.mxu0 0.0
    %275 = vmatprep.subr.mxu0 0.0
    %276 = vmatpush1.msra.mxu0 0.0
    %277 = vmatprep.subr.mxu0 0.0
    %278 = vmatpush1.msra.mxu0 0.0
    %279 = vmatprep.subr.mxu0 0.0
    %280 = vmatpush1.msra.mxu0 0.0
    %281 = vmatprep.subr.mxu0 0.0
    %282 = vmatpush1.msra.mxu0 0.0
    %283 = vmatprep.subr.mxu0 0.0
    %284 = vmatpush1.msra.mxu0 0.0
    %285 = vmatprep.subr.mxu0 0.0
    %286 = vmatpush1.msra.mxu0 0.0
    %287 = vmatprep.subr.mxu0 0.0
    %288 = vmatpush1.msra.mxu0 0.0
    %289 = vmatprep.subr.mxu0 0.0
    %290 = vmatpush1.msra.mxu0 0.0
    %291 = vmatprep.subr.mxu0 0.0
    %292 = vmatpush1.msra.mxu0 0.0
    %293 = vmatprep.subr.mxu0 0.0
    %294 = vmatpush1.msra.mxu0 0.0
    %295 = vmatprep.subr.mxu0 0.0
    %296 = vmatpush1.msra.mxu0 0.0
    %297 = vmatprep.subr.mxu0 0.0
    %298 = vmatpush1.msra.mxu0 0.0
    %299 = vmatprep.subr.mxu0 0.0
    %300 = vmatpush1.msra.mxu0 0.0
    %301 = vmatprep.mubr.f32.mxu0 0.0
    %302 = vmatmul.mubr.f32.gmra.mrb[0].mxu0 %v235
    %v303 = vpop.f32.mrb[0].mxu0
    %v304 = vadd.f32 0.0, %v303
    %v305 = vpop.f32.mrb[0].mxu0
    %306 = vdwg.mxu0
    %v307 = vadd.f32 %v228, %v304
    %v308 = vxor.u32 %v307, 2147483648
    %v309 = vmul.f32 %v308, 1.442695
    %v310 = vpow.pop %v309
    %v311 = vadd.f32 %v310, 1.0
    %v312 = vrcp.pop %v311
    %v313 = vmul.f32 1.0, %v312
    %v314 = vtanh.pop %v307
    %316 = vrot.lane.b32.xlu0 %v227, 32
    %v317 = vpop.permute.xlu0 %316
    %v319 = vmul.f32 %v313, %v317
    %321 = vrot.lane.b32.xlu0 %v314, 64
    %v322 = vpop.permute.xlu0 %321
    %v324 = vmul.f32 %v313, %v322
    %326 = vrot.lane.b32.xlu0 %v324, 32
    %v327 = vpop.permute.xlu0 %326
    %v329 = vadd.f32 %v319, %v327
    %v330 = vtanh.pop %v329
    %332 = vrot.lane.b32.xlu0 %v330, 64
    %v333 = vpop.permute.xlu0 %332
    %v335 = vmul.f32 %v313, %v333
    %337 = vrot.lane.b32.xlu0 %v335, 32
    %v338 = vpop.permute.xlu0 %337
    %340 = vst.msk [vmem:[#allocation3] sm:$0xff] %vm233, %v338
    %s341 = scalar_lea.vmem [#allocation2], 8
    %v342 = vld [vmem:[%s341] sm:$0xff]
    %v343 = vld [vmem:[%s2] sm:$0xff]
    %v344 = vld [vmem:[%s2 + $0x8] sm:$0xff]
    %v345 = vld [vmem:[%s2 + $0x10] sm:$0xff]
    %v346 = vld [vmem:[%s2 + $0x18] sm:$0xff]
    %v347 = vsel %vm233, %v338, 0
    %349 = vmatprep.subr.mxu0 0.0
    %350 = vmatpush1.msra.mxu0 %v343
    %351 = vmatprep.subr.mxu0 0.0
    %352 = vmatpush1.msra.mxu0 %v344
    %353 = vmatprep.subr.mxu0 0.0
    %354 = vmatpush1.msra.mxu0 %v345
    %355 = vmatprep.subr.mxu0 0.0
    %356 = vmatpush1.msra.mxu0 %v346
    %357 = vmatprep.subr.mxu0 0.0
    %358 = vmatpush1.msra.mxu0 0.0
    %359 = vmatprep.subr.mxu0 0.0
    %360 = vmatpush1.msra.mxu0 0.0
    %361 = vmatprep.subr.mxu0 0.0
    %362 = vmatpush1.msra.mxu0 0.0
    %363 = vmatprep.subr.mxu0 0.0
    %364 = vmatpush1.msra.mxu0 0.0
    %365 = vmatprep.subr.mxu0 0.0
    %366 = vmatpush1.msra.mxu0 0.0
    %367 = vmatprep.subr.mxu0 0.0
    %368 = vmatpush1.msra.mxu0 0.0
    %369 = vmatprep.subr.mxu0 0.0
    %370 = vmatpush1.msra.mxu0 0.0
    %371 = vmatprep.subr.mxu0 0.0
    %372 = vmatpush1.msra.mxu0 0.0
    %373 = vmatprep.subr.mxu0 0.0
    %374 = vmatpush1.msra.mxu0 0.0
    %375 = vmatprep.subr.mxu0 0.0
    %376 = vmatpush1.msra.mxu0 0.0
    %377 = vmatprep.subr.mxu0 0.0
    %378 = vmatpush1.msra.mxu0 0.0
    %379 = vmatprep.subr.mxu0 0.0
    %380 = vmatpush1.msra.mxu0 0.0
    %381 = vmatprep.subr.mxu0 0.0
    %382 = vmatpush1.msra.mxu0 0.0
    %383 = vmatprep.subr.mxu0 0.0
    %384 = vmatpush1.msra.mxu0 0.0
    %385 = vmatprep.subr.mxu0 0.0
    %386 = vmatpush1.msra.mxu0 0.0
    %387 = vmatprep.subr.mxu0 0.0
    %388 = vmatpush1.msra.mxu0 0.0
    %389 = vmatprep.subr.mxu0 0.0
    %390 = vmatpush1.msra.mxu0 0.0
    %391 = vmatprep.subr.mxu0 0.0
    %392 = vmatpush1.msra.mxu0 0.0
    %393 = vmatprep.subr.mxu0 0.0
    %394 = vmatpush1.msra.mxu0 0.0
    %395 = vmatprep.subr.mxu0 0.0
    %396 = vmatpush1.msra.mxu0 0.0
    %397 = vmatprep.subr.mxu0 0.0
    %398 = vmatpush1.msra.mxu0 0.0
    %399 = vmatprep.subr.mxu0 0.0
    %400 = vmatpush1.msra.mxu0 0.0
    %401 = vmatprep.subr.mxu0 0.0
    %402 = vmatpush1.msra.mxu0 0.0
    %403 = vmatprep.subr.mxu0 0.0
    %404 = vmatpush1.msra.mxu0 0.0
    %405 = vmatprep.subr.mxu0 0.0
    %406 = vmatpush1.msra.mxu0 0.0
    %407 = vmatprep.subr.mxu0 0.0
    %408 = vmatpush1.msra.mxu0 0.0
    %409 = vmatprep.subr.mxu0 0.0
    %410 = vmatpush1.msra.mxu0 0.0
    %411 = vmatprep.subr.mxu0 0.0
    %412 = vmatpush1.msra.mxu0 0.0
    %413 = vmatprep.mubr.f32.mxu0 0.0
    %414 = vmatmul.mubr.f32.gmra.mrb[0].mxu0 %v347
    %v415 = vpop.f32.mrb[0].mxu0
    %v416 = vadd.f32 0.0, %v415
    %v417 = vpop.f32.mrb[0].mxu0
    %418 = vdwg.mxu0
    %v419 = vadd.f32 %v342, %v416
    %v420 = vxor.u32 %v419, 2147483648
    %v421 = vmul.f32 %v420, 1.442695
    %v422 = vpow.pop %v421
    %v423 = vadd.f32 %v422, 1.0
    %v424 = vrcp.pop %v423
    %v425 = vmul.f32 1.0, %v424
    %v426 = vtanh.pop %v419
    %v427 = vmul.f32 %v425, %v329
    %429 = vrot.lane.b32.xlu0 %v426, 64
    %v430 = vpop.permute.xlu0 %429
    %v432 = vmul.f32 %v425, %v430
    %434 = vrot.lane.b32.xlu0 %v432, 32
    %v435 = vpop.permute.xlu0 %434
    %v437 = vadd.f32 %v427, %v435
    %v438 = vtanh.pop %v437
    %440 = vrot.lane.b32.xlu0 %v438, 64
    %v441 = vpop.permute.xlu0 %440
    %v443 = vmul.f32 %v425, %v441
    %445 = vrot.lane.b32.xlu0 %v443, 32
    %v446 = vpop.permute.xlu0 %445
    %s448 = scalar_lea.vmem [#allocation3], 8
    %449 = vst.msk [vmem:[%s448] sm:$0xff] %vm233, %v446
    %s450 = scalar_lea.vmem [#allocation2], 16
    %v451 = vld [vmem:[%s450] sm:$0xff]
    %v452 = vld [vmem:[%s2] sm:$0xff]
    %v453 = vld [vmem:[%s2 + $0x8] sm:$0xff]
    %v454 = vld [vmem:[%s2 + $0x10] sm:$0xff]
    %v455 = vld [vmem:[%s2 + $0x18] sm:$0xff]
    %v456 = vsel %vm233, %v446, 0
    %458 = vmatprep.subr.mxu0 0.0
    %459 = vmatpush1.msra.mxu0 %v452
    %460 = vmatprep.subr.mxu0 0.0
    %461 = vmatpush1.msra.mxu0 %v453
    %462 = vmatprep.subr.mxu0 0.0
    %463 = vmatpush1.msra.mxu0 %v454
    %464 = vmatprep.subr.mxu0 0.0
    %465 = vmatpush1.msra.mxu0 %v455
    %466 = vmatprep.subr.mxu0 0.0
    %467 = vmatpush1.msra.mxu0 0.0
    %468 = vmatprep.subr.mxu0 0.0
    %469 = vmatpush1.msra.mxu0 0.0
    %470 = vmatprep.subr.mxu0 0.0
    %471 = vmatpush1.msra.mxu0 0.0
    %472 = vmatprep.subr.mxu0 0.0
    %473 = vmatpush1.msra.mxu0 0.0
    %474 = vmatprep.subr.mxu0 0.0
    %475 = vmatpush1.msra.mxu0 0.0
    %476 = vmatprep.subr.mxu0 0.0
    %477 = vmatpush1.msra.mxu0 0.0
    %478 = vmatprep.subr.mxu0 0.0
    %479 = vmatpush1.msra.mxu0 0.0
    %480 = vmatprep.subr.mxu0 0.0
    %481 = vmatpush1.msra.mxu0 0.0
    %482 = vmatprep.subr.mxu0 0.0
    %483 = vmatpush1.msra.mxu0 0.0
    %484 = vmatprep.subr.mxu0 0.0
    %485 = vmatpush1.msra.mxu0 0.0
    %486 = vmatprep.subr.mxu0 0.0
    %487 = vmatpush1.msra.mxu0 0.0
    %488 = vmatprep.subr.mxu0 0.0
    %489 = vmatpush1.msra.mxu0 0.0
    %490 = vmatprep.subr.mxu0 0.0
    %491 = vmatpush1.msra.mxu0 0.0
    %492 = vmatprep.subr.mxu0 0.0
    %493 = vmatpush1.msra.mxu0 0.0
    %494 = vmatprep.subr.mxu0 0.0
    %495 = vmatpush1.msra.mxu0 0.0
    %496 = vmatprep.subr.mxu0 0.0
    %497 = vmatpush1.msra.mxu0 0.0
    %498 = vmatprep.subr.mxu0 0.0
    %499 = vmatpush1.msra.mxu0 0.0
    %500 = vmatprep.subr.mxu0 0.0
    %501 = vmatpush1.msra.mxu0 0.0
    %502 = vmatprep.subr.mxu0 0.0
    %503 = vmatpush1.msra.mxu0 0.0
    %504 = vmatprep.subr.mxu0 0.0
    %505 = vmatpush1.msra.mxu0 0.0
    %506 = vmatprep.subr.mxu0 0.0
    %507 = vmatpush1.msra.mxu0 0.0
    %508 = vmatprep.subr.mxu0 0.0
    %509 = vmatpush1.msra.mxu0 0.0
    %510 = vmatprep.subr.mxu0 0.0
    %511 = vmatpush1.msra.mxu0 0.0
    %512 = vmatprep.subr.mxu0 0.0
    %513 = vmatpush1.msra.mxu0 0.0
    %514 = vmatprep.subr.mxu0 0.0
    %515 = vmatpush1.msra.mxu0 0.0
    %516 = vmatprep.subr.mxu0 0.0
    %517 = vmatpush1.msra.mxu0 0.0
    %518 = vmatprep.subr.mxu0 0.0
    %519 = vmatpush1.msra.mxu0 0.0
    %520 = vmatprep.subr.mxu0 0.0
    %521 = vmatpush1.msra.mxu0 0.0
    %522 = vmatprep.mubr.f32.mxu0 0.0
    %523 = vmatmul.mubr.f32.gmra.mrb[0].mxu0 %v456
    %v524 = vpop.f32.mrb[0].mxu0
    %v525 = vadd.f32 0.0, %v524
    %v526 = vpop.f32.mrb[0].mxu0
    %527 = vdwg.mxu0
    %v528 = vadd.f32 %v451, %v525
    %v529 = vxor.u32 %v528, 2147483648
    %v530 = vmul.f32 %v529, 1.442695
    %v531 = vpow.pop %v530
    %v532 = vadd.f32 %v531, 1.0
    %v533 = vrcp.pop %v532
    %v534 = vmul.f32 1.0, %v533
    %v535 = vtanh.pop %v528
    %v536 = vmul.f32 %v534, %v437
    %538 = vrot.lane.b32.xlu0 %v535, 64
    %v539 = vpop.permute.xlu0 %538
    %v541 = vmul.f32 %v534, %v539
    %543 = vrot.lane.b32.xlu0 %v541, 32
    %v544 = vpop.permute.xlu0 %543
    %v546 = vadd.f32 %v536, %v544
    %v547 = vtanh.pop %v546
    %549 = vrot.lane.b32.xlu0 %v547, 64
    %v550 = vpop.permute.xlu0 %549
    %v552 = vmul.f32 %v534, %v550
    %554 = vrot.lane.b32.xlu0 %v552, 32
    %v555 = vpop.permute.xlu0 %554
    %s557 = scalar_lea.vmem [#allocation3], 16
    %558 = vst.msk [vmem:[%s557] sm:$0xff] %vm233, %v555
    %s559 = scalar_lea.vmem [#allocation2], 24
    %v560 = vld [vmem:[%s559] sm:$0xff]
    %v561 = vld [vmem:[%s2] sm:$0xff]
    %v562 = vld [vmem:[%s2 + $0x8] sm:$0xff]
    %v563 = vld [vmem:[%s2 + $0x10] sm:$0xff]
    %v564 = vld [vmem:[%s2 + $0x18] sm:$0xff]
    %v565 = vsel %vm233, %v555, 0
    %567 = vmatprep.subr.mxu0 0.0
    %568 = vmatpush1.msra.mxu0 %v561
    %569 = vmatprep.subr.mxu0 0.0
    %570 = vmatpush1.msra.mxu0 %v562
    %571 = vmatprep.subr.mxu0 0.0
    %572 = vmatpush1.msra.mxu0 %v563
    %573 = vmatprep.subr.mxu0 0.0
    %574 = vmatpush1.msra.mxu0 %v564
    %575 = vmatprep.subr.mxu0 0.0
    %576 = vmatpush1.msra.mxu0 0.0
    %577 = vmatprep.subr.mxu0 0.0
    %578 = vmatpush1.msra.mxu0 0.0
    %579 = vmatprep.subr.mxu0 0.0
    %580 = vmatpush1.msra.mxu0 0.0
    %581 = vmatprep.subr.mxu0 0.0
    %582 = vmatpush1.msra.mxu0 0.0
    %583 = vmatprep.subr.mxu0 0.0
    %584 = vmatpush1.msra.mxu0 0.0
    %585 = vmatprep.subr.mxu0 0.0
    %586 = vmatpush1.msra.mxu0 0.0
    %587 = vmatprep.subr.mxu0 0.0
    %588 = vmatpush1.msra.mxu0 0.0
    %589 = vmatprep.subr.mxu0 0.0
    %590 = vmatpush1.msra.mxu0 0.0
    %591 = vmatprep.subr.mxu0 0.0
    %592 = vmatpush1.msra.mxu0 0.0
    %593 = vmatprep.subr.mxu0 0.0
    %594 = vmatpush1.msra.mxu0 0.0
    %595 = vmatprep.subr.mxu0 0.0
    %596 = vmatpush1.msra.mxu0 0.0
    %597 = vmatprep.subr.mxu0 0.0
    %598 = vmatpush1.msra.mxu0 0.0
    %599 = vmatprep.subr.mxu0 0.0
    %600 = vmatpush1.msra.mxu0 0.0
    %601 = vmatprep.subr.mxu0 0.0
    %602 = vmatpush1.msra.mxu0 0.0
    %603 = vmatprep.subr.mxu0 0.0
    %604 = vmatpush1.msra.mxu0 0.0
    %605 = vmatprep.subr.mxu0 0.0
    %606 = vmatpush1.msra.mxu0 0.0
    %607 = vmatprep.subr.mxu0 0.0
    %608 = vmatpush1.msra.mxu0 0.0
    %609 = vmatprep.subr.mxu0 0.0
    %610 = vmatpush1.msra.mxu0 0.0
    %611 = vmatprep.subr.mxu0 0.0
    %612 = vmatpush1.msra.mxu0 0.0
    %613 = vmatprep.subr.mxu0 0.0
    %614 = vmatpush1.msra.mxu0 0.0
    %615 = vmatprep.subr.mxu0 0.0
    %616 = vmatpush1.msra.mxu0 0.0
    %617 = vmatprep.subr.mxu0 0.0
    %618 = vmatpush1.msra.mxu0 0.0
    %619 = vmatprep.subr.mxu0 0.0
    %620 = vmatpush1.msra.mxu0 0.0
    %621 = vmatprep.subr.mxu0 0.0
    %622 = vmatpush1.msra.mxu0 0.0
    %623 = vmatprep.subr.mxu0 0.0
    %624 = vmatpush1.msra.mxu0 0.0
    %625 = vmatprep.subr.mxu0 0.0
    %626 = vmatpush1.msra.mxu0 0.0
    %627 = vmatprep.subr.mxu0 0.0
    %628 = vmatpush1.msra.mxu0 0.0
    %629 = vmatprep.subr.mxu0 0.0
    %630 = vmatpush1.msra.mxu0 0.0
    %631 = vmatprep.mubr.f32.mxu0 0.0
    %632 = vmatmul.mubr.f32.gmra.mrb[0].mxu0 %v565
    %v633 = vpop.f32.mrb[0].mxu0
    %v634 = vadd.f32 0.0, %v633
    %v635 = vpop.f32.mrb[0].mxu0
    %636 = vdwg.mxu0
    %v637 = vadd.f32 %v560, %v634
    %v638 = vxor.u32 %v637, 2147483648
    %v639 = vmul.f32 %v638, 1.442695
    %v640 = vpow.pop %v639
    %v641 = vadd.f32 %v640, 1.0
    %v642 = vrcp.pop %v641
    %v643 = vmul.f32 1.0, %v642
    %v644 = vtanh.pop %v637
    %v645 = vmul.f32 %v643, %v546
    %647 = vrot.lane.b32.xlu0 %v644, 64
    %v648 = vpop.permute.xlu0 %647
    %v650 = vmul.f32 %v643, %v648
    %652 = vrot.lane.b32.xlu0 %v650, 32
    %v653 = vpop.permute.xlu0 %652
    %v655 = vadd.f32 %v645, %v653
    %v656 = vtanh.pop %v655
    %658 = vrot.lane.b32.xlu0 %v656, 64
    %v659 = vpop.permute.xlu0 %658
    %v661 = vmul.f32 %v643, %v659
    %663 = vrot.lane.b32.xlu0 %v661, 32
    %v664 = vpop.permute.xlu0 %663
    %s666 = scalar_lea.vmem [#allocation3], 24
    %667 = vst.msk [vmem:[%s666] sm:$0xff] %vm233, %v664
    %s668 = scalar_lea.vmem [#allocation2], 32
    %v669 = vld [vmem:[%s668] sm:$0xff]
    %v670 = vld [vmem:[%s2] sm:$0xff]
    %v671 = vld [vmem:[%s2 + $0x8] sm:$0xff]
    %v672 = vld [vmem:[%s2 + $0x10] sm:$0xff]
    %v673 = vld [vmem:[%s2 + $0x18] sm:$0xff]
    %v674 = vsel %vm233, %v664, 0
    %676 = vmatprep.subr.mxu0 0.0
    %677 = vmatpush1.msra.mxu0 %v670
    %678 = vmatprep.subr.mxu0 0.0
    %679 = vmatpush1.msra.mxu0 %v671
    %680 = vmatprep.subr.mxu0 0.0
    %681 = vmatpush1.msra.mxu0 %v672
    %682 = vmatprep.subr.mxu0 0.0
    %683 = vmatpush1.msra.mxu0 %v673
    %684 = vmatprep.subr.mxu0 0.0
    %685 = vmatpush1.msra.mxu0 0.0
    %686 = vmatprep.subr.mxu0 0.0
    %687 = vmatpush1.msra.mxu0 0.0
    %688 = vmatprep.subr.mxu0 0.0
    %689 = vmatpush1.msra.mxu0 0.0
    %690 = vmatprep.subr.mxu0 0.0
    %691 = vmatpush1.msra.mxu0 0.0
    %692 = vmatprep.subr.mxu0 0.0
    %693 = vmatpush1.msra.mxu0 0.0
    %694 = vmatprep.subr.mxu0 0.0
    %695 = vmatpush1.msra.mxu0 0.0
    %696 = vmatprep.subr.mxu0 0.0
    %697 = vmatpush1.msra.mxu0 0.0
    %698 = vmatprep.subr.mxu0 0.0
    %699 = vmatpush1.msra.mxu0 0.0
    %700 = vmatprep.subr.mxu0 0.0
    %701 = vmatpush1.msra.mxu0 0.0
    %702 = vmatprep.subr.mxu0 0.0
    %703 = vmatpush1.msra.mxu0 0.0
    %704 = vmatprep.subr.mxu0 0.0
    %705 = vmatpush1.msra.mxu0 0.0
    %706 = vmatprep.subr.mxu0 0.0
    %707 = vmatpush1.msra.mxu0 0.0
    %708 = vmatprep.subr.mxu0 0.0
    %709 = vmatpush1.msra.mxu0 0.0
    %710 = vmatprep.subr.mxu0 0.0
    %711 = vmatpush1.msra.mxu0 0.0
    %712 = vmatprep.subr.mxu0 0.0
    %713 = vmatpush1.msra.mxu0 0.0
    %714 = vmatprep.subr.mxu0 0.0
    %715 = vmatpush1.msra.mxu0 0.0
    %716 = vmatprep.subr.mxu0 0.0
    %717 = vmatpush1.msra.mxu0 0.0
    %718 = vmatprep.subr.mxu0 0.0
    %719 = vmatpush1.msra.mxu0 0.0
    %720 = vmatprep.subr.mxu0 0.0
    %721 = vmatpush1.msra.mxu0 0.0
    %722 = vmatprep.subr.mxu0 0.0
    %723 = vmatpush1.msra.mxu0 0.0
    %724 = vmatprep.subr.mxu0 0.0
    %725 = vmatpush1.msra.mxu0 0.0
    %726 = vmatprep.subr.mxu0 0.0
    %727 = vmatpush1.msra.mxu0 0.0
    %728 = vmatprep.subr.mxu0 0.0
    %729 = vmatpush1.msra.mxu0 0.0
    %730 = vmatprep.subr.mxu0 0.0
    %731 = vmatpush1.msra.mxu0 0.0
    %732 = vmatprep.subr.mxu0 0.0
    %733 = vmatpush1.msra.mxu0 0.0
    %734 = vmatprep.subr.mxu0 0.0
    %735 = vmatpush1.msra.mxu0 0.0
    %736 = vmatprep.subr.mxu0 0.0
    %737 = vmatpush1.msra.mxu0 0.0
    %738 = vmatprep.subr.mxu0 0.0
    %739 = vmatpush1.msra.mxu0 0.0
    %740 = vmatprep.mubr.f32.mxu0 0.0
    %741 = vmatmul.mubr.f32.gmra.mrb[0].mxu0 %v674
    %v742 = vpop.f32.mrb[0].mxu0
    %v743 = vadd.f32 0.0, %v742
    %v744 = vpop.f32.mrb[0].mxu0
    %745 = vdwg.mxu0
    %v746 = vadd.f32 %v669, %v743
    %v747 = vxor.u32 %v746, 2147483648
    %v748 = vmul.f32 %v747, 1.442695
    %v749 = vpow.pop %v748
    %v750 = vadd.f32 %v749, 1.0
    %v751 = vrcp.pop %v750
    %v752 = vmul.f32 1.0, %v751
    %v753 = vtanh.pop %v746
    %v754 = vmul.f32 %v752, %v655
    %756 = vrot.lane.b32.xlu0 %v753, 64
    %v757 = vpop.permute.xlu0 %756
    %v759 = vmul.f32 %v752, %v757
    %761 = vrot.lane.b32.xlu0 %v759, 32
    %v762 = vpop.permute.xlu0 %761
    %v764 = vadd.f32 %v754, %v762
    %v765 = vtanh.pop %v764
    %767 = vrot.lane.b32.xlu0 %v765, 64
    %v768 = vpop.permute.xlu0 %767
    %v770 = vmul.f32 %v752, %v768
    %772 = vrot.lane.b32.xlu0 %v770, 32
    %v773 = vpop.permute.xlu0 %772
    %s775 = scalar_lea.vmem [#allocation3], 32
    %776 = vst.msk [vmem:[%s775] sm:$0xff] %vm233, %v773
    %s777 = scalar_lea.vmem [#allocation2], 40
    %v778 = vld [vmem:[%s777] sm:$0xff]
    %v779 = vld [vmem:[%s2] sm:$0xff]
    %v780 = vld [vmem:[%s2 + $0x8] sm:$0xff]
    %v781 = vld [vmem:[%s2 + $0x10] sm:$0xff]
    %v782 = vld [vmem:[%s2 + $0x18] sm:$0xff]
    %v783 = vsel %vm233, %v773, 0
    %785 = vmatprep.subr.mxu0 0.0
    %786 = vmatpush1.msra.mxu0 %v779
    %787 = vmatprep.subr.mxu0 0.0
    %788 = vmatpush1.msra.mxu0 %v780
    %789 = vmatprep.subr.mxu0 0.0
    %790 = vmatpush1.msra.mxu0 %v781
    %791 = vmatprep.subr.mxu0 0.0
    %792 = vmatpush1.msra.mxu0 %v782
    %793 = vmatprep.subr.mxu0 0.0
    %794 = vmatpush1.msra.mxu0 0.0
    %795 = vmatprep.subr.mxu0 0.0
    %796 = vmatpush1.msra.mxu0 0.0
    %797 = vmatprep.subr.mxu0 0.0
    %798 = vmatpush1.msra.mxu0 0.0
    %799 = vmatprep.subr.mxu0 0.0
    %800 = vmatpush1.msra.mxu0 0.0
    %801 = vmatprep.subr.mxu0 0.0
    %802 = vmatpush1.msra.mxu0 0.0
    %803 = vmatprep.subr.mxu0 0.0
    %804 = vmatpush1.msra.mxu0 0.0
    %805 = vmatprep.subr.mxu0 0.0
    %806 = vmatpush1.msra.mxu0 0.0
    %807 = vmatprep.subr.mxu0 0.0
    %808 = vmatpush1.msra.mxu0 0.0
    %809 = vmatprep.subr.mxu0 0.0
    %810 = vmatpush1.msra.mxu0 0.0
    %811 = vmatprep.subr.mxu0 0.0
    %812 = vmatpush1.msra.mxu0 0.0
    %813 = vmatprep.subr.mxu0 0.0
    %814 = vmatpush1.msra.mxu0 0.0
    %815 = vmatprep.subr.mxu0 0.0
    %816 = vmatpush1.msra.mxu0 0.0
    %817 = vmatprep.subr.mxu0 0.0
    %818 = vmatpush1.msra.mxu0 0.0
    %819 = vmatprep.subr.mxu0 0.0
    %820 = vmatpush1.msra.mxu0 0.0
    %821 = vmatprep.subr.mxu0 0.0
    %822 = vmatpush1.msra.mxu0 0.0
    %823 = vmatprep.subr.mxu0 0.0
    %824 = vmatpush1.msra.mxu0 0.0
    %825 = vmatprep.subr.mxu0 0.0
    %826 = vmatpush1.msra.mxu0 0.0
    %827 = vmatprep.subr.mxu0 0.0
    %828 = vmatpush1.msra.mxu0 0.0
    %829 = vmatprep.subr.mxu0 0.0
    %830 = vmatpush1.msra.mxu0 0.0
    %831 = vmatprep.subr.mxu0 0.0
    %832 = vmatpush1.msra.mxu0 0.0
    %833 = vmatprep.subr.mxu0 0.0
    %834 = vmatpush1.msra.mxu0 0.0
    %835 = vmatprep.subr.mxu0 0.0
    %836 = vmatpush1.msra.mxu0 0.0
    %837 = vmatprep.subr.mxu0 0.0
    %838 = vmatpush1.msra.mxu0 0.0
    %839 = vmatprep.subr.mxu0 0.0
    %840 = vmatpush1.msra.mxu0 0.0
    %841 = vmatprep.subr.mxu0 0.0
    %842 = vmatpush1.msra.mxu0 0.0
    %843 = vmatprep.subr.mxu0 0.0
    %844 = vmatpush1.msra.mxu0 0.0
    %845 = vmatprep.subr.mxu0 0.0
    %846 = vmatpush1.msra.mxu0 0.0
    %847 = vmatprep.subr.mxu0 0.0
    %848 = vmatpush1.msra.mxu0 0.0
    %849 = vmatprep.mubr.f32.mxu0 0.0
    %850 = vmatmul.mubr.f32.gmra.mrb[0].mxu0 %v783
    %v851 = vpop.f32.mrb[0].mxu0
    %v852 = vadd.f32 0.0, %v851
    %v853 = vpop.f32.mrb[0].mxu0
    %854 = vdwg.mxu0
    %v855 = vadd.f32 %v778, %v852
    %v856 = vxor.u32 %v855, 2147483648
    %v857 = vmul.f32 %v856, 1.442695
    %v858 = vpow.pop %v857
    %v859 = vadd.f32 %v858, 1.0
    %v860 = vrcp.pop %v859
    %v861 = vmul.f32 1.0, %v860
    %v862 = vtanh.pop %v855
    %v863 = vmul.f32 %v861, %v764
    %865 = vrot.lane.b32.xlu0 %v862, 64
    %v866 = vpop.permute.xlu0 %865
    %v868 = vmul.f32 %v861, %v866
    %870 = vrot.lane.b32.xlu0 %v868, 32
    %v871 = vpop.permute.xlu0 %870
    %v873 = vadd.f32 %v863, %v871
    %v874 = vtanh.pop %v873
    %876 = vrot.lane.b32.xlu0 %v874, 64
    %v877 = vpop.permute.xlu0 %876
    %v879 = vmul.f32 %v861, %v877
    %881 = vrot.lane.b32.xlu0 %v879, 32
    %v882 = vpop.permute.xlu0 %881
    %s884 = scalar_lea.vmem [#allocation3], 40
    %885 = vst.msk [vmem:[%s884] sm:$0xff] %vm233, %v882
    %s886 = scalar_lea.vmem [#allocation2], 48
    %v887 = vld [vmem:[%s886] sm:$0xff]
    %v888 = vld [vmem:[%s2] sm:$0xff]
    %v889 = vld [vmem:[%s2 + $0x8] sm:$0xff]
    %v890 = vld [vmem:[%s2 + $0x10] sm:$0xff]
    %v891 = vld [vmem:[%s2 + $0x18] sm:$0xff]
    %v892 = vsel %vm233, %v882, 0
    %894 = vmatprep.subr.mxu0 0.0
    %895 = vmatpush1.msra.mxu0 %v888
    %896 = vmatprep.subr.mxu0 0.0
    %897 = vmatpush1.msra.mxu0 %v889
    %898 = vmatprep.subr.mxu0 0.0
    %899 = vmatpush1.msra.mxu0 %v890
    %900 = vmatprep.subr.mxu0 0.0
    %901 = vmatpush1.msra.mxu0 %v891
    %902 = vmatprep.subr.mxu0 0.0
    %903 = vmatpush1.msra.mxu0 0.0
    %904 = vmatprep.subr.mxu0 0.0
    %905 = vmatpush1.msra.mxu0 0.0
    %906 = vmatprep.subr.mxu0 0.0
    %907 = vmatpush1.msra.mxu0 0.0
    %908 = vmatprep.subr.mxu0 0.0
    %909 = vmatpush1.msra.mxu0 0.0
    %910 = vmatprep.subr.mxu0 0.0
    %911 = vmatpush1.msra.mxu0 0.0
    %912 = vmatprep.subr.mxu0 0.0
    %913 = vmatpush1.msra.mxu0 0.0
    %914 = vmatprep.subr.mxu0 0.0
    %915 = vmatpush1.msra.mxu0 0.0
    %916 = vmatprep.subr.mxu0 0.0
    %917 = vmatpush1.msra.mxu0 0.0
    %918 = vmatprep.subr.mxu0 0.0
    %919 = vmatpush1.msra.mxu0 0.0
    %920 = vmatprep.subr.mxu0 0.0
    %921 = vmatpush1.msra.mxu0 0.0
    %922 = vmatprep.subr.mxu0 0.0
    %923 = vmatpush1.msra.mxu0 0.0
    %924 = vmatprep.subr.mxu0 0.0
    %925 = vmatpush1.msra.mxu0 0.0
    %926 = vmatprep.subr.mxu0 0.0
    %927 = vmatpush1.msra.mxu0 0.0
    %928 = vmatprep.subr.mxu0 0.0
    %929 = vmatpush1.msra.mxu0 0.0
    %930 = vmatprep.subr.mxu0 0.0
    %931 = vmatpush1.msra.mxu0 0.0
    %932 = vmatprep.subr.mxu0 0.0
    %933 = vmatpush1.msra.mxu0 0.0
    %934 = vmatprep.subr.mxu0 0.0
    %935 = vmatpush1.msra.mxu0 0.0
    %936 = vmatprep.subr.mxu0 0.0
    %937 = vmatpush1.msra.mxu0 0.0
    %938 = vmatprep.subr.mxu0 0.0
    %939 = vmatpush1.msra.mxu0 0.0
    %940 = vmatprep.subr.mxu0 0.0
    %941 = vmatpush1.msra.mxu0 0.0
    %942 = vmatprep.subr.mxu0 0.0
    %943 = vmatpush1.msra.mxu0 0.0
    %944 = vmatprep.subr.mxu0 0.0
    %945 = vmatpush1.msra.mxu0 0.0
    %946 = vmatprep.subr.mxu0 0.0
    %947 = vmatpush1.msra.mxu0 0.0
    %948 = vmatprep.subr.mxu0 0.0
    %949 = vmatpush1.msra.mxu0 0.0
    %950 = vmatprep.subr.mxu0 0.0
    %951 = vmatpush1.msra.mxu0 0.0
    %952 = vmatprep.subr.mxu0 0.0
    %953 = vmatpush1.msra.mxu0 0.0
    %954 = vmatprep.subr.mxu0 0.0
    %955 = vmatpush1.msra.mxu0 0.0
    %956 = vmatprep.subr.mxu0 0.0
    %957 = vmatpush1.msra.mxu0 0.0
    %958 = vmatprep.mubr.f32.mxu0 0.0
    %959 = vmatmul.mubr.f32.gmra.mrb[0].mxu0 %v892
    %v960 = vpop.f32.mrb[0].mxu0
    %v961 = vadd.f32 0.0, %v960
    %v962 = vpop.f32.mrb[0].mxu0
    %963 = vdwg.mxu0
    %v964 = vadd.f32 %v887, %v961
    %v965 = vxor.u32 %v964, 2147483648
    %v966 = vmul.f32 %v965, 1.442695
    %v967 = vpow.pop %v966
    %v968 = vadd.f32 %v967, 1.0
    %v969 = vrcp.pop %v968
    %v970 = vmul.f32 1.0, %v969
    %v971 = vtanh.pop %v964
    %v972 = vmul.f32 %v970, %v873
    %974 = vrot.lane.b32.xlu0 %v971, 64
    %v975 = vpop.permute.xlu0 %974
    %v977 = vmul.f32 %v970, %v975
    %979 = vrot.lane.b32.xlu0 %v977, 32
    %v980 = vpop.permute.xlu0 %979
    %v982 = vadd.f32 %v972, %v980
    %v983 = vtanh.pop %v982
    %985 = vrot.lane.b32.xlu0 %v983, 64
    %v986 = vpop.permute.xlu0 %985
    %v988 = vmul.f32 %v970, %v986
    %990 = vrot.lane.b32.xlu0 %v988, 32
    %v991 = vpop.permute.xlu0 %990
    %s993 = scalar_lea.vmem [#allocation3], 48
    %994 = vst.msk [vmem:[%s993] sm:$0xff] %vm233, %v991
    %s995 = scalar_lea.vmem [#allocation2], 56
    %v996 = vld [vmem:[%s995] sm:$0xff]
    %v997 = vld [vmem:[%s2] sm:$0xff]
    %v998 = vld [vmem:[%s2 + $0x8] sm:$0xff]
    %v999 = vld [vmem:[%s2 + $0x10] sm:$0xff]
    %v1000 = vld [vmem:[%s2 + $0x18] sm:$0xff]
    %v1001 = vsel %vm233, %v991, 0
    %1003 = vmatprep.subr.mxu0 0.0
    %1004 = vmatpush1.msra.mxu0 %v997
    %1005 = vmatprep.subr.mxu0 0.0
    %1006 = vmatpush1.msra.mxu0 %v998
    %1007 = vmatprep.subr.mxu0 0.0
    %1008 = vmatpush1.msra.mxu0 %v999
    %1009 = vmatprep.subr.mxu0 0.0
    %1010 = vmatpush1.msra.mxu0 %v1000
    %1011 = vmatprep.subr.mxu0 0.0
    %1012 = vmatpush1.msra.mxu0 0.0
    %1013 = vmatprep.subr.mxu0 0.0
    %1014 = vmatpush1.msra.mxu0 0.0
    %1015 = vmatprep.subr.mxu0 0.0
    %1016 = vmatpush1.msra.mxu0 0.0
    %1017 = vmatprep.subr.mxu0 0.0
    %1018 = vmatpush1.msra.mxu0 0.0
    %1019 = vmatprep.subr.mxu0 0.0
    %1020 = vmatpush1.msra.mxu0 0.0
    %1021 = vmatprep.subr.mxu0 0.0
    %1022 = vmatpush1.msra.mxu0 0.0
    %1023 = vmatprep.subr.mxu0 0.0
    %1024 = vmatpush1.msra.mxu0 0.0
    %1025 = vmatprep.subr.mxu0 0.0
    %1026 = vmatpush1.msra.mxu0 0.0
    %1027 = vmatprep.subr.mxu0 0.0
    %1028 = vmatpush1.msra.mxu0 0.0
    %1029 = vmatprep.subr.mxu0 0.0
    %1030 = vmatpush1.msra.mxu0 0.0
    %1031 = vmatprep.subr.mxu0 0.0
    %1032 = vmatpush1.msra.mxu0 0.0
    %1033 = vmatprep.subr.mxu0 0.0
    %1034 = vmatpush1.msra.mxu0 0.0
    %1035 = vmatprep.subr.mxu0 0.0
    %1036 = vmatpush1.msra.mxu0 0.0
    %1037 = vmatprep.subr.mxu0 0.0
    %1038 = vmatpush1.msra.mxu0 0.0
    %1039 = vmatprep.subr.mxu0 0.0
    %1040 = vmatpush1.msra.mxu0 0.0
    %1041 = vmatprep.subr.mxu0 0.0
    %1042 = vmatpush1.msra.mxu0 0.0
    %1043 = vmatprep.subr.mxu0 0.0
    %1044 = vmatpush1.msra.mxu0 0.0
    %1045 = vmatprep.subr.mxu0 0.0
    %1046 = vmatpush1.msra.mxu0 0.0
    %1047 = vmatprep.subr.mxu0 0.0
    %1048 = vmatpush1.msra.mxu0 0.0
    %1049 = vmatprep.subr.mxu0 0.0
    %1050 = vmatpush1.msra.mxu0 0.0
    %1051 = vmatprep.subr.mxu0 0.0
    %1052 = vmatpush1.msra.mxu0 0.0
    %1053 = vmatprep.subr.mxu0 0.0
    %1054 = vmatpush1.msra.mxu0 0.0
    %1055 = vmatprep.subr.mxu0 0.0
    %1056 = vmatpush1.msra.mxu0 0.0
    %1057 = vmatprep.subr.mxu0 0.0
    %1058 = vmatpush1.msra.mxu0 0.0
    %1059 = vmatprep.subr.mxu0 0.0
    %1060 = vmatpush1.msra.mxu0 0.0
    %1061 = vmatprep.subr.mxu0 0.0
    %1062 = vmatpush1.msra.mxu0 0.0
    %1063 = vmatprep.subr.mxu0 0.0
    %1064 = vmatpush1.msra.mxu0 0.0
    %1065 = vmatprep.subr.mxu0 0.0
    %1066 = vmatpush1.msra.mxu0 0.0
    %1067 = vmatprep.mubr.f32.mxu0 0.0
    %1068 = vmatmul.mubr.f32.gmra.mrb[0].mxu0 %v1001
    %v1069 = vpop.f32.mrb[0].mxu0
    %v1070 = vadd.f32 0.0, %v1069
    %v1071 = vpop.f32.mrb[0].mxu0
    %1072 = vdwg.mxu0
    %v1073 = vadd.f32 %v996, %v1070
    %v1074 = vxor.u32 %v1073, 2147483648
    %v1075 = vmul.f32 %v1074, 1.442695
    %v1076 = vpow.pop %v1075
    %v1077 = vadd.f32 %v1076, 1.0
    %v1078 = vrcp.pop %v1077
    %v1079 = vmul.f32 1.0, %v1078
    %v1080 = vtanh.pop %v1073
    %v1081 = vmul.f32 %v1079, %v982
    %1083 = vrot.lane.b32.xlu0 %v1080, 64
    %v1084 = vpop.permute.xlu0 %1083
    %v1086 = vmul.f32 %v1079, %v1084
    %1088 = vrot.lane.b32.xlu0 %v1086, 32
    %v1089 = vpop.permute.xlu0 %1088
    %v1091 = vadd.f32 %v1081, %v1089
    %v1092 = vtanh.pop %v1091
    %1094 = vrot.lane.b32.xlu0 %v1092, 64
    %v1095 = vpop.permute.xlu0 %1094
    %v1097 = vmul.f32 %v1079, %v1095
    %1099 = vrot.lane.b32.xlu0 %v1097, 32
    %v1100 = vpop.permute.xlu0 %1099
    %s1102 = scalar_lea.vmem [#allocation3], 56
    %1103 = vst.msk [vmem:[%s1102] sm:$0xff] %vm233, %v1100
    %1104 = vst.msk [vmem:[#allocation4] sm:$0xff] %vm233, %v1100
    %1106 = vrot.lane.b32.xlu0 %v1091, 96
    %v1107 = vpop.permute.xlu0 %1106
    %1109 = vst.msk [vmem:[#allocation5] sm:$0xff] %vm233, %v1107
    %v1110 = vld [vmem:[#allocation3] sm:$0xff]
    %v1111 = vld [vmem:[#allocation3 + $0x8] sm:$0xff]
    %v1112 = vld [vmem:[#allocation3 + $0x10] sm:$0xff]
    %v1113 = vld [vmem:[#allocation3 + $0x18] sm:$0xff]
    %v1114 = vld [vmem:[#allocation3 + $0x20] sm:$0xff]
    %v1115 = vld [vmem:[#allocation3 + $0x28] sm:$0xff]
    %v1116 = vld [vmem:[#allocation3 + $0x30] sm:$0xff]
    %v1117 = vld [vmem:[#allocation3 + $0x38] sm:$0xff]
    %v1118 = vld [vmem:[%s4] sm:$0xff]
    %v1119 = vld [vmem:[%s4 + $0x8] sm:$0xff]
    %v1120 = vld [vmem:[%s4 + $0x10] sm:$0xff]
    %v1121 = vld [vmem:[%s4 + $0x18] sm:$0xff]
    %v1122 = vld [vmem:[%s6] sm:$0x1]
    %v1124 = vlaneseq
    %v1125 = vshrl.u32 %v1124, 7
    %v1126 = vsub.s32 0, %v1125
    %v1127 = vrot.slane %v1122, %v1126
    %v1130 = vsel %vm233, %v1110, 0
    %v1133 = vsel %vm233, %v1111, 0
    %v1136 = vsel %vm233, %v1112, 0
    %v1139 = vsel %vm233, %v1113, 0
    %v1142 = vsel %vm233, %v1114, 0
    %v1145 = vsel %vm233, %v1115, 0
    %v1148 = vsel %vm233, %v1116, 0
    %v1151 = vsel %vm233, %v1117, 0
    %1153 = vmatprep.subr.mxu0 0.0
    %1154 = vmatpush1.msra.mxu0 %v1118
    %1155 = vmatprep.subr.mxu0 0.0
    %1156 = vmatpush1.msra.mxu0 %v1119
    %1157 = vmatprep.subr.mxu0 0.0
    %1158 = vmatpush1.msra.mxu0 %v1120
    %1159 = vmatprep.subr.mxu0 0.0
    %1160 = vmatpush1.msra.mxu0 %v1121
    %1161 = vmatprep.subr.mxu0 0.0
    %1162 = vmatpush1.msra.mxu0 0.0
    %1163 = vmatprep.subr.mxu0 0.0
    %1164 = vmatpush1.msra.mxu0 0.0
    %1165 = vmatprep.subr.mxu0 0.0
    %1166 = vmatpush1.msra.mxu0 0.0
    %1167 = vmatprep.subr.mxu0 0.0
    %1168 = vmatpush1.msra.mxu0 0.0
    %1169 = vmatprep.subr.mxu0 0.0
    %1170 = vmatpush1.msra.mxu0 0.0
    %1171 = vmatprep.subr.mxu0 0.0
    %1172 = vmatpush1.msra.mxu0 0.0
    %1173 = vmatprep.subr.mxu0 0.0
    %1174 = vmatpush1.msra.mxu0 0.0
    %1175 = vmatprep.subr.mxu0 0.0
    %1176 = vmatpush1.msra.mxu0 0.0
    %1177 = vmatprep.subr.mxu0 0.0
    %1178 = vmatpush1.msra.mxu0 0.0
    %1179 = vmatprep.subr.mxu0 0.0
    %1180 = vmatpush1.msra.mxu0 0.0
    %1181 = vmatprep.subr.mxu0 0.0
    %1182 = vmatpush1.msra.mxu0 0.0
    %1183 = vmatprep.subr.mxu0 0.0
    %1184 = vmatpush1.msra.mxu0 0.0
    %1185 = vmatprep.subr.mxu0 0.0
    %1186 = vmatpush1.msra.mxu0 0.0
    %1187 = vmatprep.subr.mxu0 0.0
    %1188 = vmatpush1.msra.mxu0 0.0
    %1189 = vmatprep.subr.mxu0 0.0
    %1190 = vmatpush1.msra.mxu0 0.0
    %1191 = vmatprep.subr.mxu0 0.0
    %1192 = vmatpush1.msra.mxu0 0.0
    %1193 = vmatprep.subr.mxu0 0.0
    %1194 = vmatpush1.msra.mxu0 0.0
    %1195 = vmatprep.subr.mxu0 0.0
    %1196 = vmatpush1.msra.mxu0 0.0
    %1197 = vmatprep.subr.mxu0 0.0
    %1198 = vmatpush1.msra.mxu0 0.0
    %1199 = vmatprep.subr.mxu0 0.0
    %1200 = vmatpush1.msra.mxu0 0.0
    %1201 = vmatprep.subr.mxu0 0.0
    %1202 = vmatpush1.msra.mxu0 0.0
    %1203 = vmatprep.subr.mxu0 0.0
    %1204 = vmatpush1.msra.mxu0 0.0
    %1205 = vmatprep.subr.mxu0 0.0
    %1206 = vmatpush1.msra.mxu0 0.0
    %1207 = vmatprep.subr.mxu0 0.0
    %1208 = vmatpush1.msra.mxu0 0.0
    %1209 = vmatprep.subr.mxu0 0.0
    %1210 = vmatpush1.msra.mxu0 0.0
    %1211 = vmatprep.subr.mxu0 0.0
    %1212 = vmatpush1.msra.mxu0 0.0
    %1213 = vmatprep.subr.mxu0 0.0
    %1214 = vmatpush1.msra.mxu0 0.0
    %1215 = vmatprep.subr.mxu0 0.0
    %1216 = vmatpush1.msra.mxu0 0.0
    %1217 = vmatprep.mubr.f32.mxu0 0.0
    %1218 = vmatmul.mubr.f32.gmra.mrb[0].mxu0 %v1130
    %v1219 = vpop.f32.mrb[0].mxu0
    %v1220 = vadd.f32 %v1127, %v1219
    %v1221 = vpop.f32.mrb[0].mxu0
    %1222 = vmatprep.mubr.f32.mxu0 0.0
    %1223 = vmatmul.mubr.f32.gmra.mrb[0].mxu0 %v1133
    %v1224 = vpop.f32.mrb[0].mxu0
    %v1225 = vadd.f32 %v1127, %v1224
    %v1226 = vpop.f32.mrb[0].mxu0
    %1227 = vmatprep.mubr.f32.mxu0 0.0
    %1228 = vmatmul.mubr.f32.gmra.mrb[0].mxu0 %v1136
    %v1229 = vpop.f32.mrb[0].mxu0
    %v1230 = vadd.f32 %v1127, %v1229
    %v1231 = vpop.f32.mrb[0].mxu0
    %1232 = vmatprep.mubr.f32.mxu0 0.0
    %1233 = vmatmul.mubr.f32.gmra.mrb[0].mxu0 %v1139
    %v1234 = vpop.f32.mrb[0].mxu0
    %v1235 = vadd.f32 %v1127, %v1234
    %v1236 = vpop.f32.mrb[0].mxu0
    %1237 = vmatprep.mubr.f32.mxu0 0.0
    %1238 = vmatmul.mubr.f32.gmra.mrb[0].mxu0 %v1142
    %v1239 = vpop.f32.mrb[0].mxu0
    %v1240 = vadd.f32 %v1127, %v1239
    %v1241 = vpop.f32.mrb[0].mxu0
    %1242 = vmatprep.mubr.f32.mxu0 0.0
    %1243 = vmatmul.mubr.f32.gmra.mrb[0].mxu0 %v1145
    %v1244 = vpop.f32.mrb[0].mxu0
    %v1245 = vadd.f32 %v1127, %v1244
    %v1246 = vpop.f32.mrb[0].mxu0
    %1247 = vmatprep.mubr.f32.mxu0 0.0
    %1248 = vmatmul.mubr.f32.gmra.mrb[0].mxu0 %v1148
    %v1249 = vpop.f32.mrb[0].mxu0
    %v1250 = vadd.f32 %v1127, %v1249
    %v1251 = vpop.f32.mrb[0].mxu0
    %1252 = vmatprep.mubr.f32.mxu0 0.0
    %1253 = vmatmul.mubr.f32.gmra.mrb[0].mxu0 %v1151
    %v1254 = vpop.f32.mrb[0].mxu0
    %v1255 = vadd.f32 %v1127, %v1254
    %v1256 = vpop.f32.mrb[0].mxu0
    %1257 = vdwg.mxu0
    %1258 = vst [vmem:[#allocation2] sm:$0xff] %v1220
    %1259 = vst [vmem:[#allocation2 + $0x8] sm:$0xff] %v1225
    %1260 = vst [vmem:[#allocation2 + $0x10] sm:$0xff] %v1230
    %1261 = vst [vmem:[#allocation2 + $0x18] sm:$0xff] %v1235
    %1262 = vst [vmem:[#allocation2 + $0x20] sm:$0xff] %v1240
    %1263 = vst [vmem:[#allocation2 + $0x28] sm:$0xff] %v1245
    %1264 = vst [vmem:[#allocation2 + $0x30] sm:$0xff] %v1250
    %1265 = vst [vmem:[#allocation2 + $0x38] sm:$0xff] %v1255
    %s1266 = scalar_lea.vmem [#allocation4], 8
    %v1267 = vld [vmem:[%s1266] sm:$0xff]
    %s1268 = scalar_lea.vmem [#allocation5], 8
    %v1269 = vld [vmem:[%s1268] sm:$0xff]
    %v1270 = vld [vmem:[#allocation2] sm:$0xff]
    %v1271 = vld [vmem:[%s5] sm:$0xff]
    %v1272 = vld [vmem:[%s5 + $0x8] sm:$0xff]
    %v1273 = vld [vmem:[%s5 + $0x10] sm:$0xff]
    %v1274 = vld [vmem:[%s5 + $0x18] sm:$0xff]
    %v1276 = vsel %vm233, %v1267, 0
    %1278 = vmatprep.subr.mxu0 0.0
    %1279 = vmatpush1.msra.mxu0 %v1271
    %1280 = vmatprep.subr.mxu0 0.0
    %1281 = vmatpush1.msra.mxu0 %v1272
    %1282 = vmatprep.subr.mxu0 0.0
    %1283 = vmatpush1.msra.mxu0 %v1273
    %1284 = vmatprep.subr.mxu0 0.0
    %1285 = vmatpush1.msra.mxu0 %v1274
    %1286 = vmatprep.subr.mxu0 0.0
    %1287 = vmatpush1.msra.mxu0 0.0
    %1288 = vmatprep.subr.mxu0 0.0
    %1289 = vmatpush1.msra.mxu0 0.0
    %1290 = vmatprep.subr.mxu0 0.0
    %1291 = vmatpush1.msra.mxu0 0.0
    %1292 = vmatprep.subr.mxu0 0.0
    %1293 = vmatpush1.msra.mxu0 0.0
    %1294 = vmatprep.subr.mxu0 0.0
    %1295 = vmatpush1.msra.mxu0 0.0
    %1296 = vmatprep.subr.mxu0 0.0
    %1297 = vmatpush1.msra.mxu0 0.0
    %1298 = vmatprep.subr.mxu0 0.0
    %1299 = vmatpush1.msra.mxu0 0.0
    %1300 = vmatprep.subr.mxu0 0.0
    %1301 = vmatpush1.msra.mxu0 0.0
    %1302 = vmatprep.subr.mxu0 0.0
    %1303 = vmatpush1.msra.mxu0 0.0
    %1304 = vmatprep.subr.mxu0 0.0
    %1305 = vmatpush1.msra.mxu0 0.0
    %1306 = vmatprep.subr.mxu0 0.0
    %1307 = vmatpush1.msra.mxu0 0.0
    %1308 = vmatprep.subr.mxu0 0.0
    %1309 = vmatpush1.msra.mxu0 0.0
    %1310 = vmatprep.subr.mxu0 0.0
    %1311 = vmatpush1.msra.mxu0 0.0
    %1312 = vmatprep.subr.mxu0 0.0
    %1313 = vmatpush1.msra.mxu0 0.0
    %1314 = vmatprep.subr.mxu0 0.0
    %1315 = vmatpush1.msra.mxu0 0.0
    %1316 = vmatprep.subr.mxu0 0.0
    %1317 = vmatpush1.msra.mxu0 0.0
    %1318 = vmatprep.subr.mxu0 0.0
    %1319 = vmatpush1.msra.mxu0 0.0
    %1320 = vmatprep.subr.mxu0 0.0
    %1321 = vmatpush1.msra.mxu0 0.0
    %1322 = vmatprep.subr.mxu0 0.0
    %1323 = vmatpush1.msra.mxu0 0.0
    %1324 = vmatprep.subr.mxu0 0.0
    %1325 = vmatpush1.msra.mxu0 0.0
    %1326 = vmatprep.subr.mxu0 0.0
    %1327 = vmatpush1.msra.mxu0 0.0
    %1328 = vmatprep.subr.mxu0 0.0
    %1329 = vmatpush1.msra.mxu0 0.0
    %1330 = vmatprep.subr.mxu0 0.0
    %1331 = vmatpush1.msra.mxu0 0.0
    %1332 = vmatprep.subr.mxu0 0.0
    %1333 = vmatpush1.msra.mxu0 0.0
    %1334 = vmatprep.subr.mxu0 0.0
    %1335 = vmatpush1.msra.mxu0 0.0
    %1336 = vmatprep.subr.mxu0 0.0
    %1337 = vmatpush1.msra.mxu0 0.0
    %1338 = vmatprep.subr.mxu0 0.0
    %1339 = vmatpush1.msra.mxu0 0.0
    %1340 = vmatprep.subr.mxu0 0.0
    %1341 = vmatpush1.msra.mxu0 0.0
    %1342 = vmatprep.mubr.f32.mxu0 0.0
    %1343 = vmatmul.mubr.f32.gmra.mrb[0].mxu0 %v1276
    %v1344 = vpop.f32.mrb[0].mxu0
    %v1345 = vadd.f32 0.0, %v1344
    %v1346 = vpop.f32.mrb[0].mxu0
    %1347 = vdwg.mxu0
    %v1348 = vadd.f32 %v1270, %v1345
    %v1349 = vxor.u32 %v1348, 2147483648
    %v1350 = vmul.f32 %v1349, 1.442695
    %v1351 = vpow.pop %v1350
    %v1352 = vadd.f32 %v1351, 1.0
    %v1353 = vrcp.pop %v1352
    %v1354 = vmul.f32 1.0, %v1353
    %v1355 = vtanh.pop %v1348
    %1357 = vrot.lane.b32.xlu0 %v1269, 32
    %v1358 = vpop.permute.xlu0 %1357
    %v1360 = vmul.f32 %v1354, %v1358
    %1362 = vrot.lane.b32.xlu0 %v1355, 64
    %v1363 = vpop.permute.xlu0 %1362
    %v1365 = vmul.f32 %v1354, %v1363
    %1367 = vrot.lane.b32.xlu0 %v1365, 32
    %v1368 = vpop.permute.xlu0 %1367
    %v1370 = vadd.f32 %v1360, %v1368
    %v1371 = vtanh.pop %v1370
    %1373 = vrot.lane.b32.xlu0 %v1371, 64
    %v1374 = vpop.permute.xlu0 %1373
    %v1376 = vmul.f32 %v1354, %v1374
    %v1377 = vld [vmem:[%s341] sm:$0xff]
    %1379 = vrot.lane.b32.xlu0 %v1376, 32
    %v1380 = vpop.permute.xlu0 %1379
    %v1381 = vsel %vm233, %v1380, 0
    %1383 = vmatprep.subr.mxu0 0.0
    %1384 = vmatpush1.msra.mxu0 %v1271
    %1385 = vmatprep.subr.mxu0 0.0
    %1386 = vmatpush1.msra.mxu0 %v1272
    %1387 = vmatprep.subr.mxu0 0.0
    %1388 = vmatpush1.msra.mxu0 %v1273
    %1389 = vmatprep.subr.mxu0 0.0
    %1390 = vmatpush1.msra.mxu0 %v1274
    %1391 = vmatprep.subr.mxu0 0.0
    %1392 = vmatpush1.msra.mxu0 0.0
    %1393 = vmatprep.subr.mxu0 0.0
    %1394 = vmatpush1.msra.mxu0 0.0
    %1395 = vmatprep.subr.mxu0 0.0
    %1396 = vmatpush1.msra.mxu0 0.0
    %1397 = vmatprep.subr.mxu0 0.0
    %1398 = vmatpush1.msra.mxu0 0.0
    %1399 = vmatprep.subr.mxu0 0.0
    %1400 = vmatpush1.msra.mxu0 0.0
    %1401 = vmatprep.subr.mxu0 0.0
    %1402 = vmatpush1.msra.mxu0 0.0
    %1403 = vmatprep.subr.mxu0 0.0
    %1404 = vmatpush1.msra.mxu0 0.0
    %1405 = vmatprep.subr.mxu0 0.0
    %1406 = vmatpush1.msra.mxu0 0.0
    %1407 = vmatprep.subr.mxu0 0.0
    %1408 = vmatpush1.msra.mxu0 0.0
    %1409 = vmatprep.subr.mxu0 0.0
    %1410 = vmatpush1.msra.mxu0 0.0
    %1411 = vmatprep.subr.mxu0 0.0
    %1412 = vmatpush1.msra.mxu0 0.0
    %1413 = vmatprep.subr.mxu0 0.0
    %1414 = vmatpush1.msra.mxu0 0.0
    %1415 = vmatprep.subr.mxu0 0.0
    %1416 = vmatpush1.msra.mxu0 0.0
    %1417 = vmatprep.subr.mxu0 0.0
    %1418 = vmatpush1.msra.mxu0 0.0
    %1419 = vmatprep.subr.mxu0 0.0
    %1420 = vmatpush1.msra.mxu0 0.0
    %1421 = vmatprep.subr.mxu0 0.0
    %1422 = vmatpush1.msra.mxu0 0.0
    %1423 = vmatprep.subr.mxu0 0.0
    %1424 = vmatpush1.msra.mxu0 0.0
    %1425 = vmatprep.subr.mxu0 0.0
    %1426 = vmatpush1.msra.mxu0 0.0
    %1427 = vmatprep.subr.mxu0 0.0
    %1428 = vmatpush1.msra.mxu0 0.0
    %1429 = vmatprep.subr.mxu0 0.0
    %1430 = vmatpush1.msra.mxu0 0.0
    %1431 = vmatprep.subr.mxu0 0.0
    %1432 = vmatpush1.msra.mxu0 0.0
    %1433 = vmatprep.subr.mxu0 0.0
    %1434 = vmatpush1.msra.mxu0 0.0
    %1435 = vmatprep.subr.mxu0 0.0
    %1436 = vmatpush1.msra.mxu0 0.0
    %1437 = vmatprep.subr.mxu0 0.0
    %1438 = vmatpush1.msra.mxu0 0.0
    %1439 = vmatprep.subr.mxu0 0.0
    %1440 = vmatpush1.msra.mxu0 0.0
    %1441 = vmatprep.subr.mxu0 0.0
    %1442 = vmatpush1.msra.mxu0 0.0
    %1443 = vmatprep.subr.mxu0 0.0
    %1444 = vmatpush1.msra.mxu0 0.0
    %1445 = vmatprep.subr.mxu0 0.0
    %1446 = vmatpush1.msra.mxu0 0.0
    %1447 = vmatprep.mubr.f32.mxu0 0.0
    %1448 = vmatmul.mubr.f32.gmra.mrb[0].mxu0 %v1381
    %v1449 = vpop.f32.mrb[0].mxu0
    %v1450 = vadd.f32 0.0, %v1449
    %v1451 = vpop.f32.mrb[0].mxu0
    %1452 = vdwg.mxu0
    %v1453 = vadd.f32 %v1377, %v1450
    %v1454 = vxor.u32 %v1453, 2147483648
    %v1455 = vmul.f32 %v1454, 1.442695
    %v1456 = vpow.pop %v1455
    %v1457 = vadd.f32 %v1456, 1.0
    %v1458 = vrcp.pop %v1457
    %v1459 = vmul.f32 1.0, %v1458
    %v1460 = vtanh.pop %v1453
    %v1461 = vmul.f32 %v1459, %v1370
    %1463 = vrot.lane.b32.xlu0 %v1460, 64
    %v1464 = vpop.permute.xlu0 %1463
    %v1466 = vmul.f32 %v1459, %v1464
    %1468 = vrot.lane.b32.xlu0 %v1466, 32
    %v1469 = vpop.permute.xlu0 %1468
    %v1471 = vadd.f32 %v1461, %v1469
    %v1472 = vtanh.pop %v1471
    %1474 = vrot.lane.b32.xlu0 %v1472, 64
    %v1475 = vpop.permute.xlu0 %1474
    %v1477 = vmul.f32 %v1459, %v1475
    %v1478 = vld [vmem:[%s450] sm:$0xff]
    %1480 = vrot.lane.b32.xlu0 %v1477, 32
    %v1481 = vpop.permute.xlu0 %1480
    %v1482 = vsel %vm233, %v1481, 0
    %1484 = vmatprep.subr.mxu0 0.0
    %1485 = vmatpush1.msra.mxu0 %v1271
    %1486 = vmatprep.subr.mxu0 0.0
    %1487 = vmatpush1.msra.mxu0 %v1272
    %1488 = vmatprep.subr.mxu0 0.0
    %1489 = vmatpush1.msra.mxu0 %v1273
    %1490 = vmatprep.subr.mxu0 0.0
    %1491 = vmatpush1.msra.mxu0 %v1274
    %1492 = vmatprep.subr.mxu0 0.0
    %1493 = vmatpush1.msra.mxu0 0.0
    %1494 = vmatprep.subr.mxu0 0.0
    %1495 = vmatpush1.msra.mxu0 0.0
    %1496 = vmatprep.subr.mxu0 0.0
    %1497 = vmatpush1.msra.mxu0 0.0
    %1498 = vmatprep.subr.mxu0 0.0
    %1499 = vmatpush1.msra.mxu0 0.0
    %1500 = vmatprep.subr.mxu0 0.0
    %1501 = vmatpush1.msra.mxu0 0.0
    %1502 = vmatprep.subr.mxu0 0.0
    %1503 = vmatpush1.msra.mxu0 0.0
    %1504 = vmatprep.subr.mxu0 0.0
    %1505 = vmatpush1.msra.mxu0 0.0
    %1506 = vmatprep.subr.mxu0 0.0
    %1507 = vmatpush1.msra.mxu0 0.0
    %1508 = vmatprep.subr.mxu0 0.0
    %1509 = vmatpush1.msra.mxu0 0.0
    %1510 = vmatprep.subr.mxu0 0.0
    %1511 = vmatpush1.msra.mxu0 0.0
    %1512 = vmatprep.subr.mxu0 0.0
    %1513 = vmatpush1.msra.mxu0 0.0
    %1514 = vmatprep.subr.mxu0 0.0
    %1515 = vmatpush1.msra.mxu0 0.0
    %1516 = vmatprep.subr.mxu0 0.0
    %1517 = vmatpush1.msra.mxu0 0.0
    %1518 = vmatprep.subr.mxu0 0.0
    %1519 = vmatpush1.msra.mxu0 0.0
    %1520 = vmatprep.subr.mxu0 0.0
    %1521 = vmatpush1.msra.mxu0 0.0
    %1522 = vmatprep.subr.mxu0 0.0
    %1523 = vmatpush1.msra.mxu0 0.0
    %1524 = vmatprep.subr.mxu0 0.0
    %1525 = vmatpush1.msra.mxu0 0.0
    %1526 = vmatprep.subr.mxu0 0.0
    %1527 = vmatpush1.msra.mxu0 0.0
    %1528 = vmatprep.subr.mxu0 0.0
    %1529 = vmatpush1.msra.mxu0 0.0
    %1530 = vmatprep.subr.mxu0 0.0
    %1531 = vmatpush1.msra.mxu0 0.0
    %1532 = vmatprep.subr.mxu0 0.0
    %1533 = vmatpush1.msra.mxu0 0.0
    %1534 = vmatprep.subr.mxu0 0.0
    %1535 = vmatpush1.msra.mxu0 0.0
    %1536 = vmatprep.subr.mxu0 0.0
    %1537 = vmatpush1.msra.mxu0 0.0
    %1538 = vmatprep.subr.mxu0 0.0
    %1539 = vmatpush1.msra.mxu0 0.0
    %1540 = vmatprep.subr.mxu0 0.0
    %1541 = vmatpush1.msra.mxu0 0.0
    %1542 = vmatprep.subr.mxu0 0.0
    %1543 = vmatpush1.msra.mxu0 0.0
    %1544 = vmatprep.subr.mxu0 0.0
    %1545 = vmatpush1.msra.mxu0 0.0
    %1546 = vmatprep.subr.mxu0 0.0
    %1547 = vmatpush1.msra.mxu0 0.0
    %1548 = vmatprep.mubr.f32.mxu0 0.0
    %1549 = vmatmul.mubr.f32.gmra.mrb[0].mxu0 %v1482
    %v1550 = vpop.f32.mrb[0].mxu0
    %v1551 = vadd.f32 0.0, %v1550
    %v1552 = vpop.f32.mrb[0].mxu0
    %1553 = vdwg.mxu0
    %v1554 = vadd.f32 %v1478, %v1551
    %v1555 = vxor.u32 %v1554, 2147483648
    %v1556 = vmul.f32 %v1555, 1.442695
    %v1557 = vpow.pop %v1556
    %v1558 = vadd.f32 %v1557, 1.0
    %v1559 = vrcp.pop %v1558
    %v1560 = vmul.f32 1.0, %v1559
    %v1561 = vtanh.pop %v1554
    %v1562 = vmul.f32 %v1560, %v1471
    %1564 = vrot.lane.b32.xlu0 %v1561, 64
    %v1565 = vpop.permute.xlu0 %1564
    %v1567 = vmul.f32 %v1560, %v1565
    %1569 = vrot.lane.b32.xlu0 %v1567, 32
    %v1570 = vpop.permute.xlu0 %1569
    %v1572 = vadd.f32 %v1562, %v1570
    %v1573 = vtanh.pop %v1572
    %1575 = vrot.lane.b32.xlu0 %v1573, 64
    %v1576 = vpop.permute.xlu0 %1575
    %v1578 = vmul.f32 %v1560, %v1576
    %v1579 = vld [vmem:[%s559] sm:$0xff]
    %1581 = vrot.lane.b32.xlu0 %v1578, 32
    %v1582 = vpop.permute.xlu0 %1581
    %v1583 = vsel %vm233, %v1582, 0
    %1585 = vmatprep.subr.mxu0 0.0
    %1586 = vmatpush1.msra.mxu0 %v1271
    %1587 = vmatprep.subr.mxu0 0.0
    %1588 = vmatpush1.msra.mxu0 %v1272
    %1589 = vmatprep.subr.mxu0 0.0
    %1590 = vmatpush1.msra.mxu0 %v1273
    %1591 = vmatprep.subr.mxu0 0.0
    %1592 = vmatpush1.msra.mxu0 %v1274
    %1593 = vmatprep.subr.mxu0 0.0
    %1594 = vmatpush1.msra.mxu0 0.0
    %1595 = vmatprep.subr.mxu0 0.0
    %1596 = vmatpush1.msra.mxu0 0.0
    %1597 = vmatprep.subr.mxu0 0.0
    %1598 = vmatpush1.msra.mxu0 0.0
    %1599 = vmatprep.subr.mxu0 0.0
    %1600 = vmatpush1.msra.mxu0 0.0
    %1601 = vmatprep.subr.mxu0 0.0
    %1602 = vmatpush1.msra.mxu0 0.0
    %1603 = vmatprep.subr.mxu0 0.0
    %1604 = vmatpush1.msra.mxu0 0.0
    %1605 = vmatprep.subr.mxu0 0.0
    %1606 = vmatpush1.msra.mxu0 0.0
    %1607 = vmatprep.subr.mxu0 0.0
    %1608 = vmatpush1.msra.mxu0 0.0
    %1609 = vmatprep.subr.mxu0 0.0
    %1610 = vmatpush1.msra.mxu0 0.0
    %1611 = vmatprep.subr.mxu0 0.0
    %1612 = vmatpush1.msra.mxu0 0.0
    %1613 = vmatprep.subr.mxu0 0.0
    %1614 = vmatpush1.msra.mxu0 0.0
    %1615 = vmatprep.subr.mxu0 0.0
    %1616 = vmatpush1.msra.mxu0 0.0
    %1617 = vmatprep.subr.mxu0 0.0
    %1618 = vmatpush1.msra.mxu0 0.0
    %1619 = vmatprep.subr.mxu0 0.0
    %1620 = vmatpush1.msra.mxu0 0.0
    %1621 = vmatprep.subr.mxu0 0.0
    %1622 = vmatpush1.msra.mxu0 0.0
    %1623 = vmatprep.subr.mxu0 0.0
    %1624 = vmatpush1.msra.mxu0 0.0
    %1625 = vmatprep.subr.mxu0 0.0
    %1626 = vmatpush1.msra.mxu0 0.0
    %1627 = vmatprep.subr.mxu0 0.0
    %1628 = vmatpush1.msra.mxu0 0.0
    %1629 = vmatprep.subr.mxu0 0.0
    %1630 = vmatpush1.msra.mxu0 0.0
    %1631 = vmatprep.subr.mxu0 0.0
    %1632 = vmatpush1.msra.mxu0 0.0
    %1633 = vmatprep.subr.mxu0 0.0
    %1634 = vmatpush1.msra.mxu0 0.0
    %1635 = vmatprep.subr.mxu0 0.0
    %1636 = vmatpush1.msra.mxu0 0.0
    %1637 = vmatprep.subr.mxu0 0.0
    %1638 = vmatpush1.msra.mxu0 0.0
    %1639 = vmatprep.subr.mxu0 0.0
    %1640 = vmatpush1.msra.mxu0 0.0
    %1641 = vmatprep.subr.mxu0 0.0
    %1642 = vmatpush1.msra.mxu0 0.0
    %1643 = vmatprep.subr.mxu0 0.0
    %1644 = vmatpush1.msra.mxu0 0.0
    %1645 = vmatprep.subr.mxu0 0.0
    %1646 = vmatpush1.msra.mxu0 0.0
    %1647 = vmatprep.subr.mxu0 0.0
    %1648 = vmatpush1.msra.mxu0 0.0
    %1649 = vmatprep.mubr.f32.mxu0 0.0
    %1650 = vmatmul.mubr.f32.gmra.mrb[0].mxu0 %v1583
    %v1651 = vpop.f32.mrb[0].mxu0
    %v1652 = vadd.f32 0.0, %v1651
    %v1653 = vpop.f32.mrb[0].mxu0
    %1654 = vdwg.mxu0
    %v1655 = vadd.f32 %v1579, %v1652
    %v1656 = vxor.u32 %v1655, 2147483648
    %v1657 = vmul.f32 %v1656, 1.442695
    %v1658 = vpow.pop %v1657
    %v1659 = vadd.f32 %v1658, 1.0
    %v1660 = vrcp.pop %v1659
    %v1661 = vmul.f32 1.0, %v1660
    %v1662 = vtanh.pop %v1655
    %v1663 = vmul.f32 %v1661, %v1572
    %1665 = vrot.lane.b32.xlu0 %v1662, 64
    %v1666 = vpop.permute.xlu0 %1665
    %v1668 = vmul.f32 %v1661, %v1666
    %1670 = vrot.lane.b32.xlu0 %v1668, 32
    %v1671 = vpop.permute.xlu0 %1670
    %v1673 = vadd.f32 %v1663, %v1671
    %v1674 = vtanh.pop %v1673
    %1676 = vrot.lane.b32.xlu0 %v1674, 64
    %v1677 = vpop.permute.xlu0 %1676
    %v1679 = vmul.f32 %v1661, %v1677
    %v1680 = vld [vmem:[%s668] sm:$0xff]
    %1682 = vrot.lane.b32.xlu0 %v1679, 32
    %v1683 = vpop.permute.xlu0 %1682
    %v1684 = vsel %vm233, %v1683, 0
    %1686 = vmatprep.subr.mxu0 0.0
    %1687 = vmatpush1.msra.mxu0 %v1271
    %1688 = vmatprep.subr.mxu0 0.0
    %1689 = vmatpush1.msra.mxu0 %v1272
    %1690 = vmatprep.subr.mxu0 0.0
    %1691 = vmatpush1.msra.mxu0 %v1273
    %1692 = vmatprep.subr.mxu0 0.0
    %1693 = vmatpush1.msra.mxu0 %v1274
    %1694 = vmatprep.subr.mxu0 0.0
    %1695 = vmatpush1.msra.mxu0 0.0
    %1696 = vmatprep.subr.mxu0 0.0
    %1697 = vmatpush1.msra.mxu0 0.0
    %1698 = vmatprep.subr.mxu0 0.0
    %1699 = vmatpush1.msra.mxu0 0.0
    %1700 = vmatprep.subr.mxu0 0.0
    %1701 = vmatpush1.msra.mxu0 0.0
    %1702 = vmatprep.subr.mxu0 0.0
    %1703 = vmatpush1.msra.mxu0 0.0
    %1704 = vmatprep.subr.mxu0 0.0
    %1705 = vmatpush1.msra.mxu0 0.0
    %1706 = vmatprep.subr.mxu0 0.0
    %1707 = vmatpush1.msra.mxu0 0.0
    %1708 = vmatprep.subr.mxu0 0.0
    %1709 = vmatpush1.msra.mxu0 0.0
    %1710 = vmatprep.subr.mxu0 0.0
    %1711 = vmatpush1.msra.mxu0 0.0
    %1712 = vmatprep.subr.mxu0 0.0
    %1713 = vmatpush1.msra.mxu0 0.0
    %1714 = vmatprep.subr.mxu0 0.0
    %1715 = vmatpush1.msra.mxu0 0.0
    %1716 = vmatprep.subr.mxu0 0.0
    %1717 = vmatpush1.msra.mxu0 0.0
    %1718 = vmatprep.subr.mxu0 0.0
    %1719 = vmatpush1.msra.mxu0 0.0
    %1720 = vmatprep.subr.mxu0 0.0
    %1721 = vmatpush1.msra.mxu0 0.0
    %1722 = vmatprep.subr.mxu0 0.0
    %1723 = vmatpush1.msra.mxu0 0.0
    %1724 = vmatprep.subr.mxu0 0.0
    %1725 = vmatpush1.msra.mxu0 0.0
    %1726 = vmatprep.subr.mxu0 0.0
    %1727 = vmatpush1.msra.mxu0 0.0
    %1728 = vmatprep.subr.mxu0 0.0
    %1729 = vmatpush1.msra.mxu0 0.0
    %1730 = vmatprep.subr.mxu0 0.0
    %1731 = vmatpush1.msra.mxu0 0.0
    %1732 = vmatprep.subr.mxu0 0.0
    %1733 = vmatpush1.msra.mxu0 0.0
    %1734 = vmatprep.subr.mxu0 0.0
    %1735 = vmatpush1.msra.mxu0 0.0
    %1736 = vmatprep.subr.mxu0 0.0
    %1737 = vmatpush1.msra.mxu0 0.0
    %1738 = vmatprep.subr.mxu0 0.0
    %1739 = vmatpush1.msra.mxu0 0.0
    %1740 = vmatprep.subr.mxu0 0.0
    %1741 = vmatpush1.msra.mxu0 0.0
    %1742 = vmatprep.subr.mxu0 0.0
    %1743 = vmatpush1.msra.mxu0 0.0
    %1744 = vmatprep.subr.mxu0 0.0
    %1745 = vmatpush1.msra.mxu0 0.0
    %1746 = vmatprep.subr.mxu0 0.0
    %1747 = vmatpush1.msra.mxu0 0.0
    %1748 = vmatprep.subr.mxu0 0.0
    %1749 = vmatpush1.msra.mxu0 0.0
    %1750 = vmatprep.mubr.f32.mxu0 0.0
    %1751 = vmatmul.mubr.f32.gmra.mrb[0].mxu0 %v1684
    %v1752 = vpop.f32.mrb[0].mxu0
    %v1753 = vadd.f32 0.0, %v1752
    %v1754 = vpop.f32.mrb[0].mxu0
    %1755 = vdwg.mxu0
    %v1756 = vadd.f32 %v1680, %v1753
    %v1757 = vxor.u32 %v1756, 2147483648
    %v1758 = vmul.f32 %v1757, 1.442695
    %v1759 = vpow.pop %v1758
    %v1760 = vadd.f32 %v1759, 1.0
    %v1761 = vrcp.pop %v1760
    %v1762 = vmul.f32 1.0, %v1761
    %v1763 = vtanh.pop %v1756
    %v1764 = vmul.f32 %v1762, %v1673
    %1766 = vrot.lane.b32.xlu0 %v1763, 64
    %v1767 = vpop.permute.xlu0 %1766
    %v1769 = vmul.f32 %v1762, %v1767
    %1771 = vrot.lane.b32.xlu0 %v1769, 32
    %v1772 = vpop.permute.xlu0 %1771
    %v1774 = vadd.f32 %v1764, %v1772
    %v1775 = vtanh.pop %v1774
    %1777 = vrot.lane.b32.xlu0 %v1775, 64
    %v1778 = vpop.permute.xlu0 %1777
    %v1780 = vmul.f32 %v1762, %v1778
    %v1781 = vld [vmem:[%s777] sm:$0xff]
    %1783 = vrot.lane.b32.xlu0 %v1780, 32
    %v1784 = vpop.permute.xlu0 %1783
    %v1785 = vsel %vm233, %v1784, 0
    %1787 = vmatprep.subr.mxu0 0.0
    %1788 = vmatpush1.msra.mxu0 %v1271
    %1789 = vmatprep.subr.mxu0 0.0
    %1790 = vmatpush1.msra.mxu0 %v1272
    %1791 = vmatprep.subr.mxu0 0.0
    %1792 = vmatpush1.msra.mxu0 %v1273
    %1793 = vmatprep.subr.mxu0 0.0
    %1794 = vmatpush1.msra.mxu0 %v1274
    %1795 = vmatprep.subr.mxu0 0.0
    %1796 = vmatpush1.msra.mxu0 0.0
    %1797 = vmatprep.subr.mxu0 0.0
    %1798 = vmatpush1.msra.mxu0 0.0
    %1799 = vmatprep.subr.mxu0 0.0
    %1800 = vmatpush1.msra.mxu0 0.0
    %1801 = vmatprep.subr.mxu0 0.0
    %1802 = vmatpush1.msra.mxu0 0.0
    %1803 = vmatprep.subr.mxu0 0.0
    %1804 = vmatpush1.msra.mxu0 0.0
    %1805 = vmatprep.subr.mxu0 0.0
    %1806 = vmatpush1.msra.mxu0 0.0
    %1807 = vmatprep.subr.mxu0 0.0
    %1808 = vmatpush1.msra.mxu0 0.0
    %1809 = vmatprep.subr.mxu0 0.0
    %1810 = vmatpush1.msra.mxu0 0.0
    %1811 = vmatprep.subr.mxu0 0.0
    %1812 = vmatpush1.msra.mxu0 0.0
    %1813 = vmatprep.subr.mxu0 0.0
    %1814 = vmatpush1.msra.mxu0 0.0
    %1815 = vmatprep.subr.mxu0 0.0
    %1816 = vmatpush1.msra.mxu0 0.0
    %1817 = vmatprep.subr.mxu0 0.0
    %1818 = vmatpush1.msra.mxu0 0.0
    %1819 = vmatprep.subr.mxu0 0.0
    %1820 = vmatpush1.msra.mxu0 0.0
    %1821 = vmatprep.subr.mxu0 0.0
    %1822 = vmatpush1.msra.mxu0 0.0
    %1823 = vmatprep.subr.mxu0 0.0
    %1824 = vmatpush1.msra.mxu0 0.0
    %1825 = vmatprep.subr.mxu0 0.0
    %1826 = vmatpush1.msra.mxu0 0.0
    %1827 = vmatprep.subr.mxu0 0.0
    %1828 = vmatpush1.msra.mxu0 0.0
    %1829 = vmatprep.subr.mxu0 0.0
    %1830 = vmatpush1.msra.mxu0 0.0
    %1831 = vmatprep.subr.mxu0 0.0
    %1832 = vmatpush1.msra.mxu0 0.0
    %1833 = vmatprep.subr.mxu0 0.0
    %1834 = vmatpush1.msra.mxu0 0.0
    %1835 = vmatprep.subr.mxu0 0.0
    %1836 = vmatpush1.msra.mxu0 0.0
    %1837 = vmatprep.subr.mxu0 0.0
    %1838 = vmatpush1.msra.mxu0 0.0
    %1839 = vmatprep.subr.mxu0 0.0
    %1840 = vmatpush1.msra.mxu0 0.0
    %1841 = vmatprep.subr.mxu0 0.0
    %1842 = vmatpush1.msra.mxu0 0.0
    %1843 = vmatprep.subr.mxu0 0.0
    %1844 = vmatpush1.msra.mxu0 0.0
    %1845 = vmatprep.subr.mxu0 0.0
    %1846 = vmatpush1.msra.mxu0 0.0
    %1847 = vmatprep.subr.mxu0 0.0
    %1848 = vmatpush1.msra.mxu0 0.0
    %1849 = vmatprep.subr.mxu0 0.0
    %1850 = vmatpush1.msra.mxu0 0.0
    %1851 = vmatprep.mubr.f32.mxu0 0.0
    %1852 = vmatmul.mubr.f32.gmra.mrb[0].mxu0 %v1785
    %v1853 = vpop.f32.mrb[0].mxu0
    %v1854 = vadd.f32 0.0, %v1853
    %v1855 = vpop.f32.mrb[0].mxu0
    %1856 = vdwg.mxu0
    %v1857 = vadd.f32 %v1781, %v1854
    %v1858 = vxor.u32 %v1857, 2147483648
    %v1859 = vmul.f32 %v1858, 1.442695
    %v1860 = vpow.pop %v1859
    %v1861 = vadd.f32 %v1860, 1.0
    %v1862 = vrcp.pop %v1861
    %v1863 = vmul.f32 1.0, %v1862
    %v1864 = vtanh.pop %v1857
    %v1865 = vmul.f32 %v1863, %v1774
    %1867 = vrot.lane.b32.xlu0 %v1864, 64
    %v1868 = vpop.permute.xlu0 %1867
    %v1870 = vmul.f32 %v1863, %v1868
    %1872 = vrot.lane.b32.xlu0 %v1870, 32
    %v1873 = vpop.permute.xlu0 %1872
    %v1875 = vadd.f32 %v1865, %v1873
    %v1876 = vtanh.pop %v1875
    %1878 = vrot.lane.b32.xlu0 %v1876, 64
    %v1879 = vpop.permute.xlu0 %1878
    %v1881 = vmul.f32 %v1863, %v1879
    %v1882 = vld [vmem:[%s886] sm:$0xff]
    %1884 = vrot.lane.b32.xlu0 %v1881, 32
    %v1885 = vpop.permute.xlu0 %1884
    %v1886 = vsel %vm233, %v1885, 0
    %1888 = vmatprep.subr.mxu0 0.0
    %1889 = vmatpush1.msra.mxu0 %v1271
    %1890 = vmatprep.subr.mxu0 0.0
    %1891 = vmatpush1.msra.mxu0 %v1272
    %1892 = vmatprep.subr.mxu0 0.0
    %1893 = vmatpush1.msra.mxu0 %v1273
    %1894 = vmatprep.subr.mxu0 0.0
    %1895 = vmatpush1.msra.mxu0 %v1274
    %1896 = vmatprep.subr.mxu0 0.0
    %1897 = vmatpush1.msra.mxu0 0.0
    %1898 = vmatprep.subr.mxu0 0.0
    %1899 = vmatpush1.msra.mxu0 0.0
    %1900 = vmatprep.subr.mxu0 0.0
    %1901 = vmatpush1.msra.mxu0 0.0
    %1902 = vmatprep.subr.mxu0 0.0
    %1903 = vmatpush1.msra.mxu0 0.0
    %1904 = vmatprep.subr.mxu0 0.0
    %1905 = vmatpush1.msra.mxu0 0.0
    %1906 = vmatprep.subr.mxu0 0.0
    %1907 = vmatpush1.msra.mxu0 0.0
    %1908 = vmatprep.subr.mxu0 0.0
    %1909 = vmatpush1.msra.mxu0 0.0
    %1910 = vmatprep.subr.mxu0 0.0
    %1911 = vmatpush1.msra.mxu0 0.0
    %1912 = vmatprep.subr.mxu0 0.0
    %1913 = vmatpush1.msra.mxu0 0.0
    %1914 = vmatprep.subr.mxu0 0.0
    %1915 = vmatpush1.msra.mxu0 0.0
    %1916 = vmatprep.subr.mxu0 0.0
    %1917 = vmatpush1.msra.mxu0 0.0
    %1918 = vmatprep.subr.mxu0 0.0
    %1919 = vmatpush1.msra.mxu0 0.0
    %1920 = vmatprep.subr.mxu0 0.0
    %1921 = vmatpush1.msra.mxu0 0.0
    %1922 = vmatprep.subr.mxu0 0.0
    %1923 = vmatpush1.msra.mxu0 0.0
    %1924 = vmatprep.subr.mxu0 0.0
    %1925 = vmatpush1.msra.mxu0 0.0
    %1926 = vmatprep.subr.mxu0 0.0
    %1927 = vmatpush1.msra.mxu0 0.0
    %1928 = vmatprep.subr.mxu0 0.0
    %1929 = vmatpush1.msra.mxu0 0.0
    %1930 = vmatprep.subr.mxu0 0.0
    %1931 = vmatpush1.msra.mxu0 0.0
    %1932 = vmatprep.subr.mxu0 0.0
    %1933 = vmatpush1.msra.mxu0 0.0
    %1934 = vmatprep.subr.mxu0 0.0
    %1935 = vmatpush1.msra.mxu0 0.0
    %1936 = vmatprep.subr.mxu0 0.0
    %1937 = vmatpush1.msra.mxu0 0.0
    %1938 = vmatprep.subr.mxu0 0.0
    %1939 = vmatpush1.msra.mxu0 0.0
    %1940 = vmatprep.subr.mxu0 0.0
    %1941 = vmatpush1.msra.mxu0 0.0
    %1942 = vmatprep.subr.mxu0 0.0
    %1943 = vmatpush1.msra.mxu0 0.0
    %1944 = vmatprep.subr.mxu0 0.0
    %1945 = vmatpush1.msra.mxu0 0.0
    %1946 = vmatprep.subr.mxu0 0.0
    %1947 = vmatpush1.msra.mxu0 0.0
    %1948 = vmatprep.subr.mxu0 0.0
    %1949 = vmatpush1.msra.mxu0 0.0
    %1950 = vmatprep.subr.mxu0 0.0
    %1951 = vmatpush1.msra.mxu0 0.0
    %1952 = vmatprep.mubr.f32.mxu0 0.0
    %1953 = vmatmul.mubr.f32.gmra.mrb[0].mxu0 %v1886
    %v1954 = vpop.f32.mrb[0].mxu0
    %v1955 = vadd.f32 0.0, %v1954
    %v1956 = vpop.f32.mrb[0].mxu0
    %1957 = vdwg.mxu0
    %v1958 = vadd.f32 %v1882, %v1955
    %v1959 = vxor.u32 %v1958, 2147483648
    %v1960 = vmul.f32 %v1959, 1.442695
    %v1961 = vpow.pop %v1960
    %v1962 = vadd.f32 %v1961, 1.0
    %v1963 = vrcp.pop %v1962
    %v1964 = vmul.f32 1.0, %v1963
    %v1965 = vtanh.pop %v1958
    %v1966 = vmul.f32 %v1964, %v1875
    %1968 = vrot.lane.b32.xlu0 %v1965, 64
    %v1969 = vpop.permute.xlu0 %1968
    %v1971 = vmul.f32 %v1964, %v1969
    %1973 = vrot.lane.b32.xlu0 %v1971, 32
    %v1974 = vpop.permute.xlu0 %1973
    %v1976 = vadd.f32 %v1966, %v1974
    %v1977 = vtanh.pop %v1976
    %1979 = vrot.lane.b32.xlu0 %v1977, 64
    %v1980 = vpop.permute.xlu0 %1979
    %v1982 = vmul.f32 %v1964, %v1980
    %v1983 = vld [vmem:[%s995] sm:$0xff]
    %1985 = vrot.lane.b32.xlu0 %v1982, 32
    %v1986 = vpop.permute.xlu0 %1985
    %v1987 = vsel %vm233, %v1986, 0
    %1989 = vmatprep.subr.mxu0 0.0
    %1990 = vmatpush1.msra.mxu0 %v1271
    %1991 = vmatprep.subr.mxu0 0.0
    %1992 = vmatpush1.msra.mxu0 %v1272
    %1993 = vmatprep.subr.mxu0 0.0
    %1994 = vmatpush1.msra.mxu0 %v1273
    %1995 = vmatprep.subr.mxu0 0.0
    %1996 = vmatpush1.msra.mxu0 %v1274
    %1997 = vmatprep.subr.mxu0 0.0
    %1998 = vmatpush1.msra.mxu0 0.0
    %1999 = vmatprep.subr.mxu0 0.0
    %2000 = vmatpush1.msra.mxu0 0.0
    %2001 = vmatprep.subr.mxu0 0.0
    %2002 = vmatpush1.msra.mxu0 0.0
    %2003 = vmatprep.subr.mxu0 0.0
    %2004 = vmatpush1.msra.mxu0 0.0
    %2005 = vmatprep.subr.mxu0 0.0
    %2006 = vmatpush1.msra.mxu0 0.0
    %2007 = vmatprep.subr.mxu0 0.0
    %2008 = vmatpush1.msra.mxu0 0.0
    %2009 = vmatprep.subr.mxu0 0.0
    %2010 = vmatpush1.msra.mxu0 0.0
    %2011 = vmatprep.subr.mxu0 0.0
    %2012 = vmatpush1.msra.mxu0 0.0
    %2013 = vmatprep.subr.mxu0 0.0
    %2014 = vmatpush1.msra.mxu0 0.0
    %2015 = vmatprep.subr.mxu0 0.0
    %2016 = vmatpush1.msra.mxu0 0.0
    %2017 = vmatprep.subr.mxu0 0.0
    %2018 = vmatpush1.msra.mxu0 0.0
    %2019 = vmatprep.subr.mxu0 0.0
    %2020 = vmatpush1.msra.mxu0 0.0
    %2021 = vmatprep.subr.mxu0 0.0
    %2022 = vmatpush1.msra.mxu0 0.0
    %2023 = vmatprep.subr.mxu0 0.0
    %2024 = vmatpush1.msra.mxu0 0.0
    %2025 = vmatprep.subr.mxu0 0.0
    %2026 = vmatpush1.msra.mxu0 0.0
    %2027 = vmatprep.subr.mxu0 0.0
    %2028 = vmatpush1.msra.mxu0 0.0
    %2029 = vmatprep.subr.mxu0 0.0
    %2030 = vmatpush1.msra.mxu0 0.0
    %2031 = vmatprep.subr.mxu0 0.0
    %2032 = vmatpush1.msra.mxu0 0.0
    %2033 = vmatprep.subr.mxu0 0.0
    %2034 = vmatpush1.msra.mxu0 0.0
    %2035 = vmatprep.subr.mxu0 0.0
    %2036 = vmatpush1.msra.mxu0 0.0
    %2037 = vmatprep.subr.mxu0 0.0
    %2038 = vmatpush1.msra.mxu0 0.0
    %2039 = vmatprep.subr.mxu0 0.0
    %2040 = vmatpush1.msra.mxu0 0.0
    %2041 = vmatprep.subr.mxu0 0.0
    %2042 = vmatpush1.msra.mxu0 0.0
    %2043 = vmatprep.subr.mxu0 0.0
    %2044 = vmatpush1.msra.mxu0 0.0
    %2045 = vmatprep.subr.mxu0 0.0
    %2046 = vmatpush1.msra.mxu0 0.0
    %2047 = vmatprep.subr.mxu0 0.0
    %2048 = vmatpush1.msra.mxu0 0.0
    %2049 = vmatprep.subr.mxu0 0.0
    %2050 = vmatpush1.msra.mxu0 0.0
    %2051 = vmatprep.subr.mxu0 0.0
    %2052 = vmatpush1.msra.mxu0 0.0
    %2053 = vmatprep.mubr.f32.mxu0 0.0
    %2054 = vmatmul.mubr.f32.gmra.mrb[0].mxu0 %v1987
    %v2055 = vpop.f32.mrb[0].mxu0
    %v2056 = vadd.f32 0.0, %v2055
    %v2057 = vpop.f32.mrb[0].mxu0
    %2058 = vdwg.mxu0
    %v2059 = vadd.f32 %v1983, %v2056
    %v2060 = vxor.u32 %v2059, 2147483648
    %v2061 = vmul.f32 %v2060, 1.442695
    %v2062 = vpow.pop %v2061
    %v2063 = vadd.f32 %v2062, 1.0
    %v2064 = vrcp.pop %v2063
    %v2065 = vmul.f32 1.0, %v2064
    %v2066 = vtanh.pop %v2059
    %v2067 = vmul.f32 %v2065, %v1976
    %2069 = vrot.lane.b32.xlu0 %v2066, 64
    %v2070 = vpop.permute.xlu0 %2069
    %v2072 = vmul.f32 %v2065, %v2070
    %2074 = vrot.lane.b32.xlu0 %v2072, 32
    %v2075 = vpop.permute.xlu0 %2074
    %v2077 = vadd.f32 %v2067, %v2075
    %v2078 = vtanh.pop %v2077
    %2080 = vrot.lane.b32.xlu0 %v2078, 64
    %v2081 = vpop.permute.xlu0 %2080
    %v2083 = vmul.f32 %v2065, %v2081
    %2085 = vrot.lane.b32.xlu0 %v2083, 32
    %v2086 = vpop.permute.xlu0 %2085
    %2088 = vst.msk [vmem:[%s1266] sm:$0xff] %vm233, %v2086
    %2090 = vrot.lane.b32.xlu0 %v2077, 96
    %v2091 = vpop.permute.xlu0 %2090
    %2093 = vst.msk [vmem:[%s1268] sm:$0xff] %vm233, %v2091
    // Predicated region
    $region50: #{_forward_impl.1} parent=1 // pred_check
      %p2094 = pneg %p58
    $region51: #{_forward_impl.1} parent=1 // pred_check_branch
      %2096 = sbr.rel (%p2094) target = $region53
    $region52: #{_forward_impl.1} parent=1 // pred_region
      %v2097 = vld [vmem:[%s7] sm:$0xff]
      %v2098 = vld [vmem:[%s7 + $0x8] sm:$0xff]
      %v2099 = vld [vmem:[%s7 + $0x10] sm:$0xff]
      %v2100 = vld [vmem:[%s7 + $0x18] sm:$0xff]
      %v2101 = vld [vmem:[%s8] sm:$0x1]
      %v2103 = vlaneseq
      %v2104 = vshrl.u32 %v2103, 7
      %v2105 = vsub.s32 0, %v2104
      %v2106 = vrot.slane %v2101, %v2105
      %v2108 = vsel %vm233, %v2086, 0
      %2110 = vmatprep.subr.mxu0 0.0
      %2111 = vmatpush1.msra.mxu0 %v2097
      %2112 = vmatprep.subr.mxu0 0.0
      %2113 = vmatpush1.msra.mxu0 %v2098
      %2114 = vmatprep.subr.mxu0 0.0
      %2115 = vmatpush1.msra.mxu0 %v2099
      %2116 = vmatprep.subr.mxu0 0.0
      %2117 = vmatpush1.msra.mxu0 %v2100
      %2118 = vmatprep.subr.mxu0 0.0
      %2119 = vmatpush1.msra.mxu0 0.0
      %2120 = vmatprep.subr.mxu0 0.0
      %2121 = vmatpush1.msra.mxu0 0.0
      %2122 = vmatprep.subr.mxu0 0.0
      %2123 = vmatpush1.msra.mxu0 0.0
      %2124 = vmatprep.subr.mxu0 0.0
      %2125 = vmatpush1.msra.mxu0 0.0
      %2126 = vmatprep.subr.mxu0 0.0
      %2127 = vmatpush1.msra.mxu0 0.0
      %2128 = vmatprep.subr.mxu0 0.0
      %2129 = vmatpush1.msra.mxu0 0.0
      %2130 = vmatprep.subr.mxu0 0.0
      %2131 = vmatpush1.msra.mxu0 0.0
      %2132 = vmatprep.subr.mxu0 0.0
      %2133 = vmatpush1.msra.mxu0 0.0
      %2134 = vmatprep.subr.mxu0 0.0
      %2135 = vmatpush1.msra.mxu0 0.0
      %2136 = vmatprep.subr.mxu0 0.0
      %2137 = vmatpush1.msra.mxu0 0.0
      %2138 = vmatprep.subr.mxu0 0.0
      %2139 = vmatpush1.msra.mxu0 0.0
      %2140 = vmatprep.subr.mxu0 0.0
      %2141 = vmatpush1.msra.mxu0 0.0
      %2142 = vmatprep.subr.mxu0 0.0
      %2143 = vmatpush1.msra.mxu0 0.0
      %2144 = vmatprep.subr.mxu0 0.0
      %2145 = vmatpush1.msra.mxu0 0.0
      %2146 = vmatprep.subr.mxu0 0.0
      %2147 = vmatpush1.msra.mxu0 0.0
      %2148 = vmatprep.subr.mxu0 0.0
      %2149 = vmatpush1.msra.mxu0 0.0
      %2150 = vmatprep.subr.mxu0 0.0
      %2151 = vmatpush1.msra.mxu0 0.0
      %2152 = vmatprep.subr.mxu0 0.0
      %2153 = vmatpush1.msra.mxu0 0.0
      %2154 = vmatprep.subr.mxu0 0.0
      %2155 = vmatpush1.msra.mxu0 0.0
      %2156 = vmatprep.subr.mxu0 0.0
      %2157 = vmatpush1.msra.mxu0 0.0
      %2158 = vmatprep.subr.mxu0 0.0
      %2159 = vmatpush1.msra.mxu0 0.0
      %2160 = vmatprep.subr.mxu0 0.0
      %2161 = vmatpush1.msra.mxu0 0.0
      %2162 = vmatprep.subr.mxu0 0.0
      %2163 = vmatpush1.msra.mxu0 0.0
      %2164 = vmatprep.subr.mxu0 0.0
      %2165 = vmatpush1.msra.mxu0 0.0
      %2166 = vmatprep.subr.mxu0 0.0
      %2167 = vmatpush1.msra.mxu0 0.0
      %2168 = vmatprep.subr.mxu0 0.0
      %2169 = vmatpush1.msra.mxu0 0.0
      %2170 = vmatprep.subr.mxu0 0.0
      %2171 = vmatpush1.msra.mxu0 0.0
      %2172 = vmatprep.subr.mxu0 0.0
      %2173 = vmatpush1.msra.mxu0 0.0
      %2174 = vmatprep.mubr.f32.mxu0 0.0
      %2175 = vmatmul.mubr.f32.gmra.mrb[0].mxu0 %v2108
      %v2176 = vpop.f32.mrb[0].mxu0
      %v2177 = vadd.f32 %v2106, %v2176
      %v2178 = vpop.f32.mrb[0].mxu0
      %2179 = vdwg.mxu0
      %2180 = vst [vmem:[%s9] sm:$0xff] %v2177
    $region53: #{_forward_impl.1} parent=1 // pred_fallthru
      _
    // Predicated region
    $region54: #{_forward_impl.1} parent=1 // pred_check
      _
    $region55: #{_forward_impl.1} parent=1 // pred_check_branch
      %2182 = sbr.rel (0) target = $region57
    $region56: #{_forward_impl.1} parent=1 // pred_region
      _
    $region57: #{_forward_impl.1} parent=1 // pred_fallthru
      _
    // Predicated region
    $region58: #{_forward_impl.1} parent=1 // pred_check
      _
    $region59: #{_forward_impl.1} parent=1 // pred_check_branch
      %2184 = sbr.rel (0) target = $region61
    $region60: #{_forward_impl.1} parent=1 // pred_region
      _
    $region61: #{_forward_impl.1} parent=1 // pred_fallthru
      _
    %2185 = vsyncpa [#allocation7], 1
    %2186 = vsyncpa [#allocation9], 1

</llo_original>
